<compile_context>
chip_gen: v7x
topology: tpu7x:2x2x1
jax: 0.10.0
libtpu: 0.0.40
codegen_flags: <defaults>
</compile_context>

<pallas_src>
import functools

import jax
import jax.numpy as jnp
import numpy as np
from jax.experimental import pallas as pl
from jax.experimental.pallas import tpu as pltpu

EPS = 1e-5  # nn.BatchNorm3d default eps


def bottleneck_kernel(x_ref, w1_ref, w2_ref, w3_ref, sprev_ref, snext_ref,
                      dnm_ref, upm_ref, dne_ref, upe_ref,
                      g1_ref, b1_ref, g2_ref, b2_ref, g3_ref, b3_ref,
                      o_ref, *, inv_count):
    """Fused bottleneck block in the lane-packed (N*D, H*W*C) layout.

    x_ref       : (R, HW*Cin) f32/bf16, R = N*D, lane = (h*W + w)*Cin + c (also residual)
    w1_ref      : (HW*Cin,  HW*Cmid)   block-diagonal 1x1x1 conv weight (matmul dtype)
    w2_ref      : (3*HW*Cmid, HW*Cmid) banded 3x3x3 conv weight, kd blocks stacked on K
    w3_ref      : (HW*Cmid, HW*Cexp)   block-diagonal 1x1x1 conv weight
    sprev/snext : (R, R) 0/1 shift matrices -> d-1 / d+1 rows (zero at the D edges)
    dn*/up*     : (HW*C, C) / (C, HW*C) 0/1 f32 fold matrices (group-sum / broadcast)
    g*/b*       : (1, C) f32 BN affine parameters
    o_ref       : (R, HW*Cexp) f32
    """
    mm = w1_ref.dtype

    def batchnorm(y, dn_ref, up_ref, g_ref, b_ref):
        # Training-mode BN (biased batch stats), single pass. Reduce over rows first,
        # then fold the HW lane groups of the two 1-row stats with tiny 0/1 matmuls
        # (no full-size (R, L) x (L, L) fold matmuls).
        s1 = jnp.sum(y, axis=0, keepdims=True)                                 # (1, L)
        s2 = jnp.sum(y * y, axis=0, keepdims=True)                             # (1, L)
        sum_c = jnp.dot(s1, dn_ref[...], preferred_element_type=jnp.float32)   # (1, C)
        sq_c = jnp.dot(s2, dn_ref[...], preferred_element_type=jnp.float32)    # (1, C)
        mu = sum_c * inv_count
        var = sq_c * inv_count - mu * mu
        scale_c = g_ref[...] * jax.lax.rsqrt(var + EPS)                        # (1, C)
        shift_c = b_ref[...] - mu * scale_c                                    # (1, C)
        scale = jnp.dot(scale_c, up_ref[...], preferred_element_type=jnp.float32)  # (1,L)
        shift = jnp.dot(shift_c, up_ref[...], preferred_element_type=jnp.float32)  # (1,L)
        return y * scale + shift

    # ---- conv1 (1x1x1) + BN1 + ReLU : one lane-dense matmul, K = HW*Cin --------------
    y1 = jnp.dot(x_ref[...].astype(mm), w1_ref[...],
                 preferred_element_type=jnp.float32)                           # (R, HW*Cmid)
    y1 = jnp.maximum(batchnorm(y1, dnm_ref, upm_ref, g1_ref, b1_ref), 0.0)

    # ---- conv2 (3x3x3, pad=1, stride=1) -----------------------------------------------
    # kh/kw taps + channels are folded into banded per-kd weights; the D-halo neighbour
    # slabs come from two tiny 0/1 shift matmuls (MXU data movement, no halo scratch),
    # and all three kd taps are fused into a single K = 3*HW*Cmid contraction.
    y1m = y1.astype(mm)
    prev = jnp.dot(sprev_ref[...], y1m, preferred_element_type=jnp.float32).astype(mm)
    nxt = jnp.dot(snext_ref[...], y1m, preferred_element_type=jnp.float32).astype(mm)
    xcat = jnp.concatenate([prev, y1m, nxt], axis=-1)                          # (R, 3*HW*Cmid)
    y2 = jnp.dot(xcat, w2_ref[...], preferred_element_type=jnp.float32)        # (R, HW*Cmid)
    y2 = jnp.maximum(batchnorm(y2, dnm_ref, upm_ref, g2_ref, b2_ref), 0.0)

    # ---- conv3 (1x1x1) + BN3 + residual + ReLU : lane-dense output store --------------
    y3 = jnp.dot(y2.astype(mm), w3_ref[...],
                 preferred_element_type=jnp.float32)                           # (R, HW*Cexp)
    y3 = batchnorm(y3, dne_ref, upe_ref, g3_ref, b3_ref)
    # residual re-read lazily from VMEM instead of keeping an f32 copy live all kernel
    o_ref[...] = jnp.maximum(y3 + x_ref[...].astype(jnp.float32), 0.0)


# --------------------------------------------------------------------------------------
# Host-side parameter repacking into the lane-packed layout (done once).
# --------------------------------------------------------------------------------------
def _block_diag(w, reps):
    """(Cin, Cout) -> (reps*Cin, reps*Cout) block-diagonal matrix."""
    cin, cout = w.shape
    out = np.zeros((reps * cin, reps * cout), np.float32)
    for r in range(reps):
        out[r * cin:(r + 1) * cin, r * cout:(r + 1) * cout] = w
    return out


def _conv2_banded(w2, h_dim, w_dim):
    """(3,3,3,Cin,Cout) -> (3*H*W*Cin, H*W*Cout).

    For each kd, a banded (HW*Cin, HW*Cout) matrix folds the kh/kw taps (zero-padded in
    H and W) and the input channels into one contraction dim; the three kd blocks are
    stacked along K in the order [d-1, d, d+1] to match the kernel's concatenation.
    """
    _, _, _, cin, cout = w2.shape
    hw = h_dim * w_dim
    mats = np.zeros((3, hw * cin, hw * cout), np.float32)
    for kd in range(3):
        for ho in range(h_dim):
            for wo in range(w_dim):
                po = ho * w_dim + wo
                for kh in range(3):
                    hi = ho + kh - 1
                    if not 0 <= hi < h_dim:
                        continue
                    for kw in range(3):
                        wi = wo + kw - 1
                        if not 0 <= wi < w_dim:
                            continue
                        pi = hi * w_dim + wi
                        mats[kd, pi * cin:(pi + 1) * cin,
                             po * cout:(po + 1) * cout] = w2[kd, kh, kw]
    return mats.reshape(3 * hw * cin, hw * cout)


def _fold_matrices(c, groups):
    """0/1 fold matrices: dn (groups*c, c) sums the lane groups per channel,
    up (c, groups*c) broadcasts a per-channel row back to every lane group."""
    idx = np.arange(groups * c)
    dn = (idx[:, None] % c == np.arange(c)[None, :]).astype(np.float32)
    return dn, np.ascontiguousarray(dn.T)


def _shift_matrices(n, d):
    """0/1 (N*D, N*D) matrices: sprev @ y gives the d-1 row (zero at d==0), snext @ y
    the d+1 row (zero at d==D-1); never crosses batch boundaries."""
    r_tot = n * d
    sp = np.zeros((r_tot, r_tot), np.float32)
    sn = np.zeros((r_tot, r_tot), np.float32)
    for r in range(r_tot):
        if r % d != 0:
            sp[r, r - 1] = 1.0
        if r % d != d - 1:
            sn[r, r + 1] = 1.0
    return sp, sn


def prepare_params(params, h_dim, w_dim, matmul_dtype=jnp.bfloat16):
    """One-time repack of the module parameters for the lane-packed kernel."""
    w1, g1, b1, w2, g2, b2, w3, g3, b3 = (np.asarray(p, np.float32) for p in params)
    hw = h_dim * w_dim
    cmid = w1.shape[1]
    cexp = w3.shape[1]
    dnm, upm = _fold_matrices(cmid, hw)
    dne, upe = _fold_matrices(cexp, hw)
    as_row = lambda v: jnp.asarray(v.reshape(1, -1), jnp.float32)
    return dict(
        w1=jnp.asarray(_block_diag(w1, hw), matmul_dtype),
        w2=jnp.asarray(_conv2_banded(w2, h_dim, w_dim), matmul_dtype),
        w3=jnp.asarray(_block_diag(w3, hw), matmul_dtype),
        dn_mid=jnp.asarray(dnm, jnp.float32), up_mid=jnp.asarray(upm, jnp.float32),
        dn_exp=jnp.asarray(dne, jnp.float32), up_exp=jnp.asarray(upe, jnp.float32),
        g1=as_row(g1), b1=as_row(b1), g2=as_row(g2), b2=as_row(b2),
        g3=as_row(g3), b3=as_row(b3),
    )


def bottleneck_forward(x, packed):
    """x: (N, D, H, W, Cin) f32 or bf16 (channels-last). Returns (N, D, H, W, Cexp) f32."""
    N, D, H, W, Cin = x.shape
    HW = H * W
    L_in = HW * Cin
    L_mid = packed["w1"].shape[1]
    L_exp = packed["w3"].shape[1]
    R = N * D
    mm_dtype = packed["w1"].dtype

    # Identity residual requires Cin == Cexp (module defaults: downsample=None, stride=1).
    assert L_exp == L_in, "identity residual needs in_channels == 4 * out_channels"
    # TODO(synk): for production widths (H*W*Cmid >~ 512) fall back to a channels-on-lanes
    # layout with plain Cmid-deep contractions; the banded packed weights would otherwise
    # blow up VMEM and waste MXU FLOPs on the zero band.
    assert L_mid <= 512, "lane-packed conv2 weights only built for small H*W*Cmid"

    x2d = x.reshape(R, L_in)                       # lane-dense input / residual slab
    sp, sn = _shift_matrices(N, D)
    sp = jnp.asarray(sp, mm_dtype)
    sn = jnp.asarray(sn, mm_dtype)

    args = (x2d, packed["w1"], packed["w2"], packed["w3"], sp, sn,
            packed["dn_mid"], packed["up_mid"], packed["dn_exp"], packed["up_exp"],
            packed["g1"], packed["b1"], packed["g2"], packed["b2"],
            packed["g3"], packed["b3"])

    def full_spec(a):
        nd = a.ndim
        return pl.BlockSpec(a.shape, lambda i, _nd=nd: (0,) * _nd)

    # TODO(synk): tile R = N*D over a leading 'parallel' grid axis with two-pass BN
    # partial sums for real shapes (uses both v7x TensorCores, fits its 64 MiB VMEM);
    # the demo problem (<2 MiB of operands) is a single resident block.
    out2d = pl.pallas_call(
        functools.partial(bottleneck_kernel, inv_count=1.0 / float(N * D * H * W)),
        out_shape=jax.ShapeDtypeStruct((R, L_exp), jnp.float32),
        grid=(1,),
        in_specs=[full_spec(a) for a in args],
        out_specs=pl.BlockSpec((R, L_exp), lambda i: (0, 0)),   # lane-dense output store
        compiler_params=pltpu.CompilerParams(
            dimension_semantics=("arbitrary",),
            vmem_limit_bytes=32 * 1024 * 1024),
    )(*args)
    return out2d.reshape(N, D, H, W, L_exp // HW)


# --------------------------------------------------------------------------------------
# Pure-JAX reference (module semantics: training-mode BN with biased batch stats).
# --------------------------------------------------------------------------------------
def reference_forward(x, params):
    w1, g1, b1, w2, g2, b2, w3, g3, b3 = params
    hp = jax.lax.Precision.HIGHEST

    def bn(y, g, b):
        mu = jnp.mean(y, axis=(0, 1, 2, 3), keepdims=True)
        var = jnp.mean((y - mu) ** 2, axis=(0, 1, 2, 3), keepdims=True)
        return ((y - mu) * jax.lax.rsqrt(var + EPS) * g.reshape(1, 1, 1, 1, -1)
                + b.reshape(1, 1, 1, 1, -1))

    y = jnp.einsum('ndhwc,ck->ndhwk', x, w1, precision=hp)
    y = jax.nn.relu(bn(y, g1, b1))
    y = jax.lax.conv_general_dilated(
        y, w2, window_strides=(1, 1, 1), padding=[(1, 1), (1, 1), (1, 1)],
        dimension_numbers=('NDHWC', 'DHWIO', 'NDHWC'), precision=hp)
    y = jax.nn.relu(bn(y, g2, b2))
    y = jnp.einsum('ndhwc,ck->ndhwk', y, w3, precision=hp)
    y = bn(y, g3, b3) + x
    return jax.nn.relu(y)


def make_params(key, in_channels, out_channels, expansion=4):
    cmid = out_channels                 # width = out_channels * (64/64) * 1
    cexp = out_channels * expansion
    ks = jax.random.split(key, 9)
    # Kaiming-style scales (~ PyTorch Conv3d default magnitude) keep BN well conditioned.
    s1 = (2.0 / in_channels) ** 0.5
    s2 = (2.0 / (27 * cmid)) ** 0.5
    s3 = (2.0 / cmid) ** 0.5
    w1 = s1 * jax.random.normal(ks[0], (in_channels, cmid), jnp.float32)
    w2 = s2 * jax.random.normal(ks[1], (3, 3, 3, cmid, cmid), jnp.float32)
    w3 = s3 * jax.random.normal(ks[2], (cmid, cexp), jnp.float32)
    g1 = 1.0 + 0.1 * jax.random.normal(ks[3], (1, cmid), jnp.float32)
    b1 = 0.1 * jax.random.normal(ks[4], (1, cmid), jnp.float32)
    g2 = 1.0 + 0.1 * jax.random.normal(ks[5], (1, cmid), jnp.float32)
    b2 = 0.1 * jax.random.normal(ks[6], (1, cmid), jnp.float32)
    g3 = 1.0 + 0.1 * jax.random.normal(ks[7], (1, cexp), jnp.float32)
    b3 = 0.1 * jax.random.normal(ks[8], (1, cexp), jnp.float32)
    return (w1, g1, b1, w2, g2, b2, w3, g3, b3)


if __name__ == "__main__":
    # Module defaults: stride=1, downsample=None. in_channels == 4*out_channels so the
    # identity add is valid; shapes chosen so every kernel slab is >= 256 lanes wide.
    N, D, H, W = 2, 8, 8, 8
    out_channels = 4
    in_channels = out_channels * 4

    key = jax.random.PRNGKey(0)
    kx, kp = jax.random.split(key)
    x = jax.random.normal(kx, (N, D, H, W, in_channels), jnp.float32)
    params = make_params(kp, in_channels, out_channels)
    ref = jax.block_until_ready(reference_forward(x, params))

    # 1) Structural validation: f32 matmul operands everywhere, tight tolerance.
    packed_f32 = prepare_params(params, H, W, matmul_dtype=jnp.float32)
    out_f32 = jax.block_until_ready(bottleneck_forward(x, packed_f32))
    assert out_f32.shape == (N, D, H, W, out_channels * 4)
    err_f32 = float(jnp.max(jnp.abs(out_f32 - ref)))
    assert jnp.allclose(out_f32, ref, atol=1e-2, rtol=1e-2), err_f32

    # 2) Production mode: bf16 MXU operands + bf16 input/residual slab
    #    (f32 accumulation, f32 BN statistics), loose tolerance.
    packed_bf16 = prepare_params(params, H, W, matmul_dtype=jnp.bfloat16)
    out_bf16 = jax.block_until_ready(
        bottleneck_forward(x.astype(jnp.bfloat16), packed_bf16))
    assert out_bf16.shape == (N, D, H, W, out_channels * 4)
    err_bf16 = float(jnp.max(jnp.abs(out_bf16 - ref)))
    assert jnp.allclose(out_bf16, ref, atol=1.5e-1, rtol=1.5e-1), err_bf16

    print("KERNEL_OK")
</pallas_src>

<mosaic_0001>
module attributes {stable_mosaic.version = 11 : i64} {
  func.func @bottleneck_kernel(%arg0: i32, %arg1: memref<16x1024xf32, #tpu.memory_space<vmem>>, %arg2: memref<1024x256xf32, #tpu.memory_space<vmem>>, %arg3: memref<768x256xf32, #tpu.memory_space<vmem>>, %arg4: memref<256x1024xf32, #tpu.memory_space<vmem>>, %arg5: memref<16x16xf32, #tpu.memory_space<vmem>>, %arg6: memref<16x16xf32, #tpu.memory_space<vmem>>, %arg7: memref<256x4xf32, #tpu.memory_space<vmem>>, %arg8: memref<4x256xf32, #tpu.memory_space<vmem>>, %arg9: memref<1024x16xf32, #tpu.memory_space<vmem>>, %arg10: memref<16x1024xf32, #tpu.memory_space<vmem>>, %arg11: memref<1x4xf32, #tpu.memory_space<vmem>>, %arg12: memref<1x4xf32, #tpu.memory_space<vmem>>, %arg13: memref<1x4xf32, #tpu.memory_space<vmem>>, %arg14: memref<1x4xf32, #tpu.memory_space<vmem>>, %arg15: memref<1x16xf32, #tpu.memory_space<vmem>>, %arg16: memref<1x16xf32, #tpu.memory_space<vmem>>, %arg17: memref<16x1024xf32, #tpu.memory_space<vmem>>) attributes {dimension_semantics = [#tpu.dimension_semantics<arbitrary>], iteration_bounds = array<i64: 1>, scalar_prefetch = 0 : i64, scratch_operands = 0 : i64, tpu.core_type = #tpu.core_type<tc>, window_params = [{pipeline_mode = #tpu.pipeline_mode<synchronous>, transform_indices = @transform_0, window_bounds = array<i64: 16, 1024>}, {pipeline_mode = #tpu.pipeline_mode<synchronous>, transform_indices = @transform_1, window_bounds = array<i64: 1024, 256>}, {pipeline_mode = #tpu.pipeline_mode<synchronous>, transform_indices = @transform_2, window_bounds = array<i64: 768, 256>}, {pipeline_mode = #tpu.pipeline_mode<synchronous>, transform_indices = @transform_3, window_bounds = array<i64: 256, 1024>}, {pipeline_mode = #tpu.pipeline_mode<synchronous>, transform_indices = @transform_4, window_bounds = array<i64: 16, 16>}, {pipeline_mode = #tpu.pipeline_mode<synchronous>, transform_indices = @transform_5, window_bounds = array<i64: 16, 16>}, {pipeline_mode = #tpu.pipeline_mode<synchronous>, transform_indices = @transform_6, window_bounds = array<i64: 256, 4>}, {pipeline_mode = #tpu.pipeline_mode<synchronous>, transform_indices = @transform_7, window_bounds = array<i64: 4, 256>}, {pipeline_mode = #tpu.pipeline_mode<synchronous>, transform_indices = @transform_8, window_bounds = array<i64: 1024, 16>}, {pipeline_mode = #tpu.pipeline_mode<synchronous>, transform_indices = @transform_9, window_bounds = array<i64: 16, 1024>}, {pipeline_mode = #tpu.pipeline_mode<synchronous>, transform_indices = @transform_10, window_bounds = array<i64: 1, 4>}, {pipeline_mode = #tpu.pipeline_mode<synchronous>, transform_indices = @transform_11, window_bounds = array<i64: 1, 4>}, {pipeline_mode = #tpu.pipeline_mode<synchronous>, transform_indices = @transform_12, window_bounds = array<i64: 1, 4>}, {pipeline_mode = #tpu.pipeline_mode<synchronous>, transform_indices = @transform_13, window_bounds = array<i64: 1, 4>}, {pipeline_mode = #tpu.pipeline_mode<synchronous>, transform_indices = @transform_14, window_bounds = array<i64: 1, 16>}, {pipeline_mode = #tpu.pipeline_mode<synchronous>, transform_indices = @transform_15, window_bounds = array<i64: 1, 16>}, {pipeline_mode = #tpu.pipeline_mode<synchronous>, transform_indices = @transform_16, window_bounds = array<i64: 16, 1024>}]} {
    %c0 = arith.constant 0 : index
    %c0_0 = arith.constant 0 : index
    %0 = vector.load %arg1[%c0, %c0_0] : memref<16x1024xf32, #tpu.memory_space<vmem>>, vector<16x1024xf32>
    %c0_1 = arith.constant 0 : index
    %c0_2 = arith.constant 0 : index
    %1 = vector.load %arg2[%c0_1, %c0_2] : memref<1024x256xf32, #tpu.memory_space<vmem>>, vector<1024x256xf32>
    %cst = arith.constant dense<0.000000e+00> : vector<16x256xf32>
    %2 = tpu.matmul %0, %1, %cst {dimension_numbers = #tpu.dot_dimension_numbers<[1], [0], [0], [1], [0, 0, 1, 1], [], []>} : vector<16x1024xf32>, vector<1024x256xf32>, vector<16x256xf32> -> vector<16x256xf32>
    %cst_3 = arith.constant dense<0.000000e+00> : vector<256xf32>
    %3 = vector.multi_reduction <add>, %2, %cst_3 [0] : vector<16x256xf32> to vector<256xf32>
    %4 = vector.shape_cast %3 : vector<256xf32> to vector<1x256xf32>
    %5 = arith.mulf %2, %2 : vector<16x256xf32>
    %cst_4 = arith.constant dense<0.000000e+00> : vector<256xf32>
    %6 = vector.multi_reduction <add>, %5, %cst_4 [0] : vector<16x256xf32> to vector<256xf32>
    %7 = vector.shape_cast %6 : vector<256xf32> to vector<1x256xf32>
    %c0_5 = arith.constant 0 : index
    %c0_6 = arith.constant 0 : index
    %8 = vector.load %arg7[%c0_5, %c0_6] : memref<256x4xf32, #tpu.memory_space<vmem>>, vector<256x4xf32>
    %cst_7 = arith.constant dense<0.000000e+00> : vector<1x4xf32>
    %9 = tpu.matmul %4, %8, %cst_7 {dimension_numbers = #tpu.dot_dimension_numbers<[1], [0], [0], [1], [0, 0, 1, 1], [], []>} : vector<1x256xf32>, vector<256x4xf32>, vector<1x4xf32> -> vector<1x4xf32>
    %c0_8 = arith.constant 0 : index
    %c0_9 = arith.constant 0 : index
    %10 = vector.load %arg7[%c0_8, %c0_9] : memref<256x4xf32, #tpu.memory_space<vmem>>, vector<256x4xf32>
    %cst_10 = arith.constant dense<0.000000e+00> : vector<1x4xf32>
    %11 = tpu.matmul %7, %10, %cst_10 {dimension_numbers = #tpu.dot_dimension_numbers<[1], [0], [0], [1], [0, 0, 1, 1], [], []>} : vector<1x256xf32>, vector<256x4xf32>, vector<1x4xf32> -> vector<1x4xf32>
    %cst_11 = arith.constant 9.765625E-4 : f32
    %12 = vector.broadcast %cst_11 : f32 to vector<1x4xf32>
    %13 = arith.mulf %9, %12 : vector<1x4xf32>
    %cst_12 = arith.constant 9.765625E-4 : f32
    %14 = vector.broadcast %cst_12 : f32 to vector<1x4xf32>
    %15 = arith.mulf %11, %14 : vector<1x4xf32>
    %16 = arith.mulf %13, %13 : vector<1x4xf32>
    %17 = arith.subf %15, %16 : vector<1x4xf32>
    %c0_13 = arith.constant 0 : index
    %c0_14 = arith.constant 0 : index
    %18 = vector.load %arg11[%c0_13, %c0_14] : memref<1x4xf32, #tpu.memory_space<vmem>>, vector<1x4xf32>
    %cst_15 = arith.constant 9.99999974E-6 : f32
    %19 = vector.broadcast %cst_15 : f32 to vector<1x4xf32>
    %20 = arith.addf %17, %19 : vector<1x4xf32>
    %21 = math.rsqrt %20 : vector<1x4xf32>
    %22 = arith.mulf %18, %21 : vector<1x4xf32>
    %c0_16 = arith.constant 0 : index
    %c0_17 = arith.constant 0 : index
    %23 = vector.load %arg12[%c0_16, %c0_17] : memref<1x4xf32, #tpu.memory_space<vmem>>, vector<1x4xf32>
    %24 = arith.mulf %13, %22 : vector<1x4xf32>
    %25 = arith.subf %23, %24 : vector<1x4xf32>
    %c0_18 = arith.constant 0 : index
    %c0_19 = arith.constant 0 : index
    %26 = vector.load %arg8[%c0_18, %c0_19] : memref<4x256xf32, #tpu.memory_space<vmem>>, vector<4x256xf32>
    %cst_20 = arith.constant dense<0.000000e+00> : vector<1x256xf32>
    %27 = tpu.matmul %22, %26, %cst_20 {dimension_numbers = #tpu.dot_dimension_numbers<[1], [0], [0], [1], [0, 0, 1, 1], [], []>} : vector<1x4xf32>, vector<4x256xf32>, vector<1x256xf32> -> vector<1x256xf32>
    %c0_21 = arith.constant 0 : index
    %c0_22 = arith.constant 0 : index
    %28 = vector.load %arg8[%c0_21, %c0_22] : memref<4x256xf32, #tpu.memory_space<vmem>>, vector<4x256xf32>
    %cst_23 = arith.constant dense<0.000000e+00> : vector<1x256xf32>
    %29 = tpu.matmul %25, %28, %cst_23 {dimension_numbers = #tpu.dot_dimension_numbers<[1], [0], [0], [1], [0, 0, 1, 1], [], []>} : vector<1x4xf32>, vector<4x256xf32>, vector<1x256xf32> -> vector<1x256xf32>
    %30 = vector.broadcast %27 : vector<1x256xf32> to vector<16x256xf32>
    %31 = arith.mulf %2, %30 : vector<16x256xf32>
    %32 = vector.broadcast %29 : vector<1x256xf32> to vector<16x256xf32>
    %33 = arith.addf %31, %32 : vector<16x256xf32>
    %cst_24 = arith.constant 0.000000e+00 : f32
    %34 = vector.broadcast %cst_24 : f32 to vector<16x256xf32>
    %35 = arith.maximumf %33, %34 : vector<16x256xf32>
    %c0_25 = arith.constant 0 : index
    %c0_26 = arith.constant 0 : index
    %36 = vector.load %arg5[%c0_25, %c0_26] : memref<16x16xf32, #tpu.memory_space<vmem>>, vector<16x16xf32>
    %cst_27 = arith.constant dense<0.000000e+00> : vector<16x256xf32>
    %37 = tpu.matmul %36, %35, %cst_27 {dimension_numbers = #tpu.dot_dimension_numbers<[1], [0], [0], [1], [0, 0, 1, 1], [], []>} : vector<16x16xf32>, vector<16x256xf32>, vector<16x256xf32> -> vector<16x256xf32>
    %c0_28 = arith.constant 0 : index
    %c0_29 = arith.constant 0 : index
    %38 = vector.load %arg6[%c0_28, %c0_29] : memref<16x16xf32, #tpu.memory_space<vmem>>, vector<16x16xf32>
    %cst_30 = arith.constant dense<0.000000e+00> : vector<16x256xf32>
    %39 = tpu.matmul %38, %35, %cst_30 {dimension_numbers = #tpu.dot_dimension_numbers<[1], [0], [0], [1], [0, 0, 1, 1], [], []>} : vector<16x16xf32>, vector<16x256xf32>, vector<16x256xf32> -> vector<16x256xf32>
    %40 = tpu.concatenate %37, %35, %39 in 1 : vector<16x256xf32>, vector<16x256xf32>, vector<16x256xf32> -> vector<16x768xf32>
    %c0_31 = arith.constant 0 : index
    %c0_32 = arith.constant 0 : index
    %41 = vector.load %arg3[%c0_31, %c0_32] : memref<768x256xf32, #tpu.memory_space<vmem>>, vector<768x256xf32>
    %cst_33 = arith.constant dense<0.000000e+00> : vector<16x256xf32>
    %42 = tpu.matmul %40, %41, %cst_33 {dimension_numbers = #tpu.dot_dimension_numbers<[1], [0], [0], [1], [0, 0, 1, 1], [], []>} : vector<16x768xf32>, vector<768x256xf32>, vector<16x256xf32> -> vector<16x256xf32>
    %cst_34 = arith.constant dense<0.000000e+00> : vector<256xf32>
    %43 = vector.multi_reduction <add>, %42, %cst_34 [0] : vector<16x256xf32> to vector<256xf32>
    %44 = vector.shape_cast %43 : vector<256xf32> to vector<1x256xf32>
    %45 = arith.mulf %42, %42 : vector<16x256xf32>
    %cst_35 = arith.constant dense<0.000000e+00> : vector<256xf32>
    %46 = vector.multi_reduction <add>, %45, %cst_35 [0] : vector<16x256xf32> to vector<256xf32>
    %47 = vector.shape_cast %46 : vector<256xf32> to vector<1x256xf32>
    %c0_36 = arith.constant 0 : index
    %c0_37 = arith.constant 0 : index
    %48 = vector.load %arg7[%c0_36, %c0_37] : memref<256x4xf32, #tpu.memory_space<vmem>>, vector<256x4xf32>
    %cst_38 = arith.constant dense<0.000000e+00> : vector<1x4xf32>
    %49 = tpu.matmul %44, %48, %cst_38 {dimension_numbers = #tpu.dot_dimension_numbers<[1], [0], [0], [1], [0, 0, 1, 1], [], []>} : vector<1x256xf32>, vector<256x4xf32>, vector<1x4xf32> -> vector<1x4xf32>
    %c0_39 = arith.constant 0 : index
    %c0_40 = arith.constant 0 : index
    %50 = vector.load %arg7[%c0_39, %c0_40] : memref<256x4xf32, #tpu.memory_space<vmem>>, vector<256x4xf32>
    %cst_41 = arith.constant dense<0.000000e+00> : vector<1x4xf32>
    %51 = tpu.matmul %47, %50, %cst_41 {dimension_numbers = #tpu.dot_dimension_numbers<[1], [0], [0], [1], [0, 0, 1, 1], [], []>} : vector<1x256xf32>, vector<256x4xf32>, vector<1x4xf32> -> vector<1x4xf32>
    %cst_42 = arith.constant 9.765625E-4 : f32
    %52 = vector.broadcast %cst_42 : f32 to vector<1x4xf32>
    %53 = arith.mulf %49, %52 : vector<1x4xf32>
    %cst_43 = arith.constant 9.765625E-4 : f32
    %54 = vector.broadcast %cst_43 : f32 to vector<1x4xf32>
    %55 = arith.mulf %51, %54 : vector<1x4xf32>
    %56 = arith.mulf %53, %53 : vector<1x4xf32>
    %57 = arith.subf %55, %56 : vector<1x4xf32>
    %c0_44 = arith.constant 0 : index
    %c0_45 = arith.constant 0 : index
    %58 = vector.load %arg13[%c0_44, %c0_45] : memref<1x4xf32, #tpu.memory_space<vmem>>, vector<1x4xf32>
    %cst_46 = arith.constant 9.99999974E-6 : f32
    %59 = vector.broadcast %cst_46 : f32 to vector<1x4xf32>
    %60 = arith.addf %57, %59 : vector<1x4xf32>
    %61 = math.rsqrt %60 : vector<1x4xf32>
    %62 = arith.mulf %58, %61 : vector<1x4xf32>
    %c0_47 = arith.constant 0 : index
    %c0_48 = arith.constant 0 : index
    %63 = vector.load %arg14[%c0_47, %c0_48] : memref<1x4xf32, #tpu.memory_space<vmem>>, vector<1x4xf32>
    %64 = arith.mulf %53, %62 : vector<1x4xf32>
    %65 = arith.subf %63, %64 : vector<1x4xf32>
    %c0_49 = arith.constant 0 : index
    %c0_50 = arith.constant 0 : index
    %66 = vector.load %arg8[%c0_49, %c0_50] : memref<4x256xf32, #tpu.memory_space<vmem>>, vector<4x256xf32>
    %cst_51 = arith.constant dense<0.000000e+00> : vector<1x256xf32>
    %67 = tpu.matmul %62, %66, %cst_51 {dimension_numbers = #tpu.dot_dimension_numbers<[1], [0], [0], [1], [0, 0, 1, 1], [], []>} : vector<1x4xf32>, vector<4x256xf32>, vector<1x256xf32> -> vector<1x256xf32>
    %c0_52 = arith.constant 0 : index
    %c0_53 = arith.constant 0 : index
    %68 = vector.load %arg8[%c0_52, %c0_53] : memref<4x256xf32, #tpu.memory_space<vmem>>, vector<4x256xf32>
    %cst_54 = arith.constant dense<0.000000e+00> : vector<1x256xf32>
    %69 = tpu.matmul %65, %68, %cst_54 {dimension_numbers = #tpu.dot_dimension_numbers<[1], [0], [0], [1], [0, 0, 1, 1], [], []>} : vector<1x4xf32>, vector<4x256xf32>, vector<1x256xf32> -> vector<1x256xf32>
    %70 = vector.broadcast %67 : vector<1x256xf32> to vector<16x256xf32>
    %71 = arith.mulf %42, %70 : vector<16x256xf32>
    %72 = vector.broadcast %69 : vector<1x256xf32> to vector<16x256xf32>
    %73 = arith.addf %71, %72 : vector<16x256xf32>
    %cst_55 = arith.constant 0.000000e+00 : f32
    %74 = vector.broadcast %cst_55 : f32 to vector<16x256xf32>
    %75 = arith.maximumf %73, %74 : vector<16x256xf32>
    %c0_56 = arith.constant 0 : index
    %c0_57 = arith.constant 0 : index
    %76 = vector.load %arg4[%c0_56, %c0_57] : memref<256x1024xf32, #tpu.memory_space<vmem>>, vector<256x1024xf32>
    %cst_58 = arith.constant dense<0.000000e+00> : vector<16x1024xf32>
    %77 = tpu.matmul %75, %76, %cst_58 {dimension_numbers = #tpu.dot_dimension_numbers<[1], [0], [0], [1], [0, 0, 1, 1], [], []>} : vector<16x256xf32>, vector<256x1024xf32>, vector<16x1024xf32> -> vector<16x1024xf32>
    %cst_59 = arith.constant dense<0.000000e+00> : vector<1024xf32>
    %78 = vector.multi_reduction <add>, %77, %cst_59 [0] : vector<16x1024xf32> to vector<1024xf32>
    %79 = vector.shape_cast %78 : vector<1024xf32> to vector<1x1024xf32>
    %80 = arith.mulf %77, %77 : vector<16x1024xf32>
    %cst_60 = arith.constant dense<0.000000e+00> : vector<1024xf32>
    %81 = vector.multi_reduction <add>, %80, %cst_60 [0] : vector<16x1024xf32> to vector<1024xf32>
    %82 = vector.shape_cast %81 : vector<1024xf32> to vector<1x1024xf32>
    %c0_61 = arith.constant 0 : index
    %c0_62 = arith.constant 0 : index
    %83 = vector.load %arg9[%c0_61, %c0_62] : memref<1024x16xf32, #tpu.memory_space<vmem>>, vector<1024x16xf32>
    %cst_63 = arith.constant dense<0.000000e+00> : vector<1x16xf32>
    %84 = tpu.matmul %79, %83, %cst_63 {dimension_numbers = #tpu.dot_dimension_numbers<[1], [0], [0], [1], [0, 0, 1, 1], [], []>} : vector<1x1024xf32>, vector<1024x16xf32>, vector<1x16xf32> -> vector<1x16xf32>
    %c0_64 = arith.constant 0 : index
    %c0_65 = arith.constant 0 : index
    %85 = vector.load %arg9[%c0_64, %c0_65] : memref<1024x16xf32, #tpu.memory_space<vmem>>, vector<1024x16xf32>
    %cst_66 = arith.constant dense<0.000000e+00> : vector<1x16xf32>
    %86 = tpu.matmul %82, %85, %cst_66 {dimension_numbers = #tpu.dot_dimension_numbers<[1], [0], [0], [1], [0, 0, 1, 1], [], []>} : vector<1x1024xf32>, vector<1024x16xf32>, vector<1x16xf32> -> vector<1x16xf32>
    %cst_67 = arith.constant 9.765625E-4 : f32
    %87 = vector.broadcast %cst_67 : f32 to vector<1x16xf32>
    %88 = arith.mulf %84, %87 : vector<1x16xf32>
    %cst_68 = arith.constant 9.765625E-4 : f32
    %89 = vector.broadcast %cst_68 : f32 to vector<1x16xf32>
    %90 = arith.mulf %86, %89 : vector<1x16xf32>
    %91 = arith.mulf %88, %88 : vector<1x16xf32>
    %92 = arith.subf %90, %91 : vector<1x16xf32>
    %c0_69 = arith.constant 0 : index
    %c0_70 = arith.constant 0 : index
    %93 = vector.load %arg15[%c0_69, %c0_70] : memref<1x16xf32, #tpu.memory_space<vmem>>, vector<1x16xf32>
    %cst_71 = arith.constant 9.99999974E-6 : f32
    %94 = vector.broadcast %cst_71 : f32 to vector<1x16xf32>
    %95 = arith.addf %92, %94 : vector<1x16xf32>
    %96 = math.rsqrt %95 : vector<1x16xf32>
    %97 = arith.mulf %93, %96 : vector<1x16xf32>
    %c0_72 = arith.constant 0 : index
    %c0_73 = arith.constant 0 : index
    %98 = vector.load %arg16[%c0_72, %c0_73] : memref<1x16xf32, #tpu.memory_space<vmem>>, vector<1x16xf32>
    %99 = arith.mulf %88, %97 : vector<1x16xf32>
    %100 = arith.subf %98, %99 : vector<1x16xf32>
    %c0_74 = arith.constant 0 : index
    %c0_75 = arith.constant 0 : index
    %101 = vector.load %arg10[%c0_74, %c0_75] : memref<16x1024xf32, #tpu.memory_space<vmem>>, vector<16x1024xf32>
    %cst_76 = arith.constant dense<0.000000e+00> : vector<1x1024xf32>
    %102 = tpu.matmul %97, %101, %cst_76 {dimension_numbers = #tpu.dot_dimension_numbers<[1], [0], [0], [1], [0, 0, 1, 1], [], []>} : vector<1x16xf32>, vector<16x1024xf32>, vector<1x1024xf32> -> vector<1x1024xf32>
    %c0_77 = arith.constant 0 : index
    %c0_78 = arith.constant 0 : index
    %103 = vector.load %arg10[%c0_77, %c0_78] : memref<16x1024xf32, #tpu.memory_space<vmem>>, vector<16x1024xf32>
    %cst_79 = arith.constant dense<0.000000e+00> : vector<1x1024xf32>
    %104 = tpu.matmul %100, %103, %cst_79 {dimension_numbers = #tpu.dot_dimension_numbers<[1], [0], [0], [1], [0, 0, 1, 1], [], []>} : vector<1x16xf32>, vector<16x1024xf32>, vector<1x1024xf32> -> vector<1x1024xf32>
    %105 = vector.broadcast %102 : vector<1x1024xf32> to vector<16x1024xf32>
    %106 = arith.mulf %77, %105 : vector<16x1024xf32>
    %107 = vector.broadcast %104 : vector<1x1024xf32> to vector<16x1024xf32>
    %108 = arith.addf %106, %107 : vector<16x1024xf32>
    %c0_80 = arith.constant 0 : index
    %c0_81 = arith.constant 0 : index
    %109 = vector.load %arg1[%c0_80, %c0_81] : memref<16x1024xf32, #tpu.memory_space<vmem>>, vector<16x1024xf32>
    %110 = arith.addf %108, %109 : vector<16x1024xf32>
    %cst_82 = arith.constant 0.000000e+00 : f32
    %111 = vector.broadcast %cst_82 : f32 to vector<16x1024xf32>
    %112 = arith.maximumf %110, %111 : vector<16x1024xf32>
    %c0_83 = arith.constant 0 : index
    %c0_84 = arith.constant 0 : index
    %113 = vector.load %arg17[%c0_83, %c0_84] : memref<16x1024xf32, #tpu.memory_space<vmem>>, vector<16x1024xf32>
    tpu.vector_store %arg17[%c0_83, %c0_84], %112 {strides = array<i32>} : memref<16x1024xf32, #tpu.memory_space<vmem>>, vector<16x1024xf32>,
    return
  }
  func.func @transform_0(%arg0: i32) -> (i32, i32) {
    %c0_i32 = arith.constant 0 : i32
    %c0_i32_0 = arith.constant 0 : i32
    %c0_i32_1 = arith.constant 0 : i32
    return %c0_i32, %c0_i32_0 : i32, i32
  }
  func.func @transform_1(%arg0: i32) -> (i32, i32) {
    %c0_i32 = arith.constant 0 : i32
    %c0_i32_0 = arith.constant 0 : i32
    %c0_i32_1 = arith.constant 0 : i32
    return %c0_i32, %c0_i32_0 : i32, i32
  }
  func.func @transform_2(%arg0: i32) -> (i32, i32) {
    %c0_i32 = arith.constant 0 : i32
    %c0_i32_0 = arith.constant 0 : i32
    %c0_i32_1 = arith.constant 0 : i32
    return %c0_i32, %c0_i32_0 : i32, i32
  }
  func.func @transform_3(%arg0: i32) -> (i32, i32) {
    %c0_i32 = arith.constant 0 : i32
    %c0_i32_0 = arith.constant 0 : i32
    %c0_i32_1 = arith.constant 0 : i32
    return %c0_i32, %c0_i32_0 : i32, i32
  }
  func.func @transform_4(%arg0: i32) -> (i32, i32) {
    %c0_i32 = arith.constant 0 : i32
    %c0_i32_0 = arith.constant 0 : i32
    %c0_i32_1 = arith.constant 0 : i32
    return %c0_i32, %c0_i32_0 : i32, i32
  }
  func.func @transform_5(%arg0: i32) -> (i32, i32) {
    %c0_i32 = arith.constant 0 : i32
    %c0_i32_0 = arith.constant 0 : i32
    %c0_i32_1 = arith.constant 0 : i32
    return %c0_i32, %c0_i32_0 : i32, i32
  }
  func.func @transform_6(%arg0: i32) -> (i32, i32) {
    %c0_i32 = arith.constant 0 : i32
    %c0_i32_0 = arith.constant 0 : i32
    %c0_i32_1 = arith.constant 0 : i32
    return %c0_i32, %c0_i32_0 : i32, i32
  }
  func.func @transform_7(%arg0: i32) -> (i32, i32) {
    %c0_i32 = arith.constant 0 : i32
    %c0_i32_0 = arith.constant 0 : i32
    %c0_i32_1 = arith.constant 0 : i32
    return %c0_i32, %c0_i32_0 : i32, i32
  }
  func.func @transform_8(%arg0: i32) -> (i32, i32) {
    %c0_i32 = arith.constant 0 : i32
    %c0_i32_0 = arith.constant 0 : i32
    %c0_i32_1 = arith.constant 0 : i32
    return %c0_i32, %c0_i32_0 : i32, i32
  }
  func.func @transform_9(%arg0: i32) -> (i32, i32) {
    %c0_i32 = arith.constant 0 : i32
    %c0_i32_0 = arith.constant 0 : i32
    %c0_i32_1 = arith.constant 0 : i32
    return %c0_i32, %c0_i32_0 : i32, i32
  }
  func.func @transform_10(%arg0: i32) -> (i32, i32) {
    %c0_i32 = arith.constant 0 : i32
    %c0_i32_0 = arith.constant 0 : i32
    %c0_i32_1 = arith.constant 0 : i32
    return %c0_i32, %c0_i32_0 : i32, i32
  }
  func.func @transform_11(%arg0: i32) -> (i32, i32) {
    %c0_i32 = arith.constant 0 : i32
    %c0_i32_0 = arith.constant 0 : i32
    %c0_i32_1 = arith.constant 0 : i32
    return %c0_i32, %c0_i32_0 : i32, i32
  }
  func.func @transform_12(%arg0: i32) -> (i32, i32) {
    %c0_i32 = arith.constant 0 : i32
    %c0_i32_0 = arith.constant 0 : i32
    %c0_i32_1 = arith.constant 0 : i32
    return %c0_i32, %c0_i32_0 : i32, i32
  }
  func.func @transform_13(%arg0: i32) -> (i32, i32) {
    %c0_i32 = arith.constant 0 : i32
    %c0_i32_0 = arith.constant 0 : i32
    %c0_i32_1 = arith.constant 0 : i32
    return %c0_i32, %c0_i32_0 : i32, i32
  }
  func.func @transform_14(%arg0: i32) -> (i32, i32) {
    %c0_i32 = arith.constant 0 : i32
    %c0_i32_0 = arith.constant 0 : i32
    %c0_i32_1 = arith.constant 0 : i32
    return %c0_i32, %c0_i32_0 : i32, i32
  }
  func.func @transform_15(%arg0: i32) -> (i32, i32) {
    %c0_i32 = arith.constant 0 : i32
    %c0_i32_0 = arith.constant 0 : i32
    %c0_i32_1 = arith.constant 0 : i32
    return %c0_i32, %c0_i32_0 : i32, i32
  }
  func.func @transform_16(%arg0: i32) -> (i32, i32) {
    %c0_i32 = arith.constant 0 : i32
    %c0_i32_0 = arith.constant 0 : i32
    %c0_i32_1 = arith.constant 0 : i32
    return %c0_i32, %c0_i32_0 : i32, i32
  }
}

</mosaic_0001>

<llo_original>
// kernel: tpu_custom_call.1
$region0: #{tpu_custom_call.1}
  #allocation0 [shape = 'u32[]', space=smem, size = 0x4, offset = 0x4, fixed_abs, tag = 'smem constant byte address 0x4 - core index']
  #allocation1 [shape = 'u32[144,128]{1,0:T(1,128)}', space=vmem, size = 0x12000, scoped, tag = 'internal scratch']
  %s0 = inlined_call_operand.vmem [shape: f32[16,1024], index: 0, kind: input, shape index: {}]
  %s1 = inlined_call_operand.hbm [shape: f32[1024,256], index: 1, kind: input, shape index: {}]
  %s2 = inlined_call_operand.hbm [shape: f32[768,256], index: 2, kind: input, shape index: {}]
  %s3 = inlined_call_operand.hbm [shape: f32[256,1024], index: 3, kind: input, shape index: {}]
  %s4 = inlined_call_operand.vmem [shape: f32[16,16], index: 4, kind: input, shape index: {}]
  %s5 = inlined_call_operand.vmem [shape: f32[16,16], index: 5, kind: input, shape index: {}]
  %s6 = inlined_call_operand.vmem [shape: f32[256,4], index: 6, kind: input, shape index: {}]
  %s7 = inlined_call_operand.vmem [shape: f32[4,256], index: 7, kind: input, shape index: {}]
  %s8 = inlined_call_operand.vmem [shape: f32[1024,16], index: 8, kind: input, shape index: {}]
  %s9 = inlined_call_operand.vmem [shape: f32[16,1024], index: 9, kind: input, shape index: {}]
  %s10 = inlined_call_operand.vmem [shape: f32[1,4], index: 10, kind: input, shape index: {}]
  %s11 = inlined_call_operand.vmem [shape: f32[1,4], index: 11, kind: input, shape index: {}]
  %s12 = inlined_call_operand.vmem [shape: f32[1,4], index: 12, kind: input, shape index: {}]
  %s13 = inlined_call_operand.vmem [shape: f32[1,4], index: 13, kind: input, shape index: {}]
  %s14 = inlined_call_operand.vmem [shape: f32[1,16], index: 14, kind: input, shape index: {}]
  %s15 = inlined_call_operand.vmem [shape: f32[1,16], index: 15, kind: input, shape index: {}]
  %s16 = inlined_call_operand.hbm [shape: f32[16,1024], index: 16, kind: output, shape index: {}]
  %s17 = sld [smem:[#allocation0]]
  $region86: #{tpu_custom_call.1} parent=0
    _
  %s19 = ssub.s32 1, %s17
  %s20 = scalar_select 0, %s19, %s17
  $region1: #{tpu_custom_call.1} parent=0
    #allocation2 [shape = 'u8[1048576]{0}', space=vmem, size = 0x100000, scoped, tag = 'input window, operand 1, single buffered']
    #allocation3 [shape = 's32[1]{0}', space=sflag, size = 0x4, scoped, tag = 'scoped memory for tpu_custom_call.1']
    #allocation4 [shape = 's32[1]{0}', space=sflag, size = 0x4, scoped, tag = 'scoped memory for tpu_custom_call.1']
    #allocation5 [shape = 'u8[786432]{0}', space=vmem, size = 0xc0000, scoped, tag = 'input window, operand 2, single buffered']
    #allocation6 [shape = 's32[1]{0}', space=sflag, size = 0x4, scoped, tag = 'scoped memory for tpu_custom_call.1']
    #allocation7 [shape = 'u8[1048576]{0}', space=vmem, size = 0x100000, scoped, tag = 'input window, operand 3, single buffered']
    #allocation8 [shape = 'u8[65536]{0}', space=vmem, size = 0x10000, scoped, tag = 'output window, operand 0, single buffered']
    %21 = vsyncpa [#allocation3], 0
    %22 = vsyncpa [#allocation6], 0
    %23 = vsyncpa [#allocation4], 0
    // Predicated region
    $region2: #{tpu_custom_call.1} parent=1 // pred_check
      _
    $region3: #{tpu_custom_call.1} parent=1 // pred_check_branch
      %25 = sbr.rel (0) target = $region5
    $region4: #{tpu_custom_call.1} parent=1 // pred_region
      _
    $region5: #{tpu_custom_call.1} parent=1 // pred_fallthru
      _
    // Predicated region
    $region6: #{tpu_custom_call.1} parent=1 // pred_check
      _
    $region7: #{tpu_custom_call.1} parent=1 // pred_check_branch
      %27 = sbr.rel (0) target = $region9
    $region8: #{tpu_custom_call.1} parent=1 // pred_region
      %s29 = ssub.s32 32768, 32768
      %30 = vsyncadd [#allocation3], %s29
      %s31 = sshll.u32 [#allocation2], 4
      %s32 = int_to_ptr.vmem [resolvable:$true] %s31
      %37 = dma.hbm_to_vmem [thread:$0]  %s1, 32768, %s32, [#allocation3], 256, 256, 16
    $region9: #{tpu_custom_call.1} parent=1 // pred_fallthru
      _
    // Predicated region
    $region10: #{tpu_custom_call.1} parent=1 // pred_check
      _
    $region11: #{tpu_custom_call.1} parent=1 // pred_check_branch
      %39 = sbr.rel (0) target = $region13
    $region12: #{tpu_custom_call.1} parent=1 // pred_region
      %s41 = ssub.s32 24576, 24576
      %42 = vsyncadd [#allocation6], %s41
      %s43 = sshll.u32 [#allocation5], 4
      %s44 = int_to_ptr.vmem [resolvable:$true] %s43
      %49 = dma.hbm_to_vmem [thread:$0]  %s2, 24576, %s44, [#allocation6], 256, 256, 16
    $region13: #{tpu_custom_call.1} parent=1 // pred_fallthru
      _
    // Predicated region
    $region14: #{tpu_custom_call.1} parent=1 // pred_check
      _
    $region15: #{tpu_custom_call.1} parent=1 // pred_check_branch
      %51 = sbr.rel (0) target = $region17
    $region16: #{tpu_custom_call.1} parent=1 // pred_region
      %s53 = ssub.s32 32768, 32768
      %54 = vsyncadd [#allocation6], %s53
      %s55 = sshll.u32 [#allocation7], 4
      %s56 = int_to_ptr.vmem [resolvable:$true] %s55
      %61 = dma.hbm_to_vmem [thread:$0]  %s3, 32768, %s56, [#allocation6], 1024, 1024, 64
    $region17: #{tpu_custom_call.1} parent=1 // pred_fallthru
      _
    // Predicated region
    $region18: #{tpu_custom_call.1} parent=1 // pred_check
      _
    $region19: #{tpu_custom_call.1} parent=1 // pred_check_branch
      %63 = sbr.rel (0) target = $region21
    $region20: #{tpu_custom_call.1} parent=1 // pred_region
      _
    $region21: #{tpu_custom_call.1} parent=1 // pred_fallthru
      _
    // Predicated region
    $region22: #{tpu_custom_call.1} parent=1 // pred_check
      _
    $region23: #{tpu_custom_call.1} parent=1 // pred_check_branch
      %65 = sbr.rel (0) target = $region25
    $region24: #{tpu_custom_call.1} parent=1 // pred_region
      _
    $region25: #{tpu_custom_call.1} parent=1 // pred_fallthru
      _
    // Predicated region
    $region26: #{tpu_custom_call.1} parent=1 // pred_check
      _
    $region27: #{tpu_custom_call.1} parent=1 // pred_check_branch
      %67 = sbr.rel (0) target = $region29
    $region28: #{tpu_custom_call.1} parent=1 // pred_region
      _
    $region29: #{tpu_custom_call.1} parent=1 // pred_fallthru
      _
    // Predicated region
    $region30: #{tpu_custom_call.1} parent=1 // pred_check
      _
    $region31: #{tpu_custom_call.1} parent=1 // pred_check_branch
      %69 = sbr.rel (0) target = $region33
    $region32: #{tpu_custom_call.1} parent=1 // pred_region
      _
    $region33: #{tpu_custom_call.1} parent=1 // pred_fallthru
      _
    // Predicated region
    $region34: #{tpu_custom_call.1} parent=1 // pred_check
      _
    $region35: #{tpu_custom_call.1} parent=1 // pred_check_branch
      %71 = sbr.rel (0) target = $region37
    $region36: #{tpu_custom_call.1} parent=1 // pred_region
      _
    $region37: #{tpu_custom_call.1} parent=1 // pred_fallthru
      _
    // Predicated region
    $region38: #{tpu_custom_call.1} parent=1 // pred_check
      _
    $region39: #{tpu_custom_call.1} parent=1 // pred_check_branch
      %73 = sbr.rel (0) target = $region41
    $region40: #{tpu_custom_call.1} parent=1 // pred_region
      _
    $region41: #{tpu_custom_call.1} parent=1 // pred_fallthru
      _
    // Predicated region
    $region42: #{tpu_custom_call.1} parent=1 // pred_check
      _
    $region43: #{tpu_custom_call.1} parent=1 // pred_check_branch
      %75 = sbr.rel (0) target = $region45
    $region44: #{tpu_custom_call.1} parent=1 // pred_region
      _
    $region45: #{tpu_custom_call.1} parent=1 // pred_fallthru
      _
    // Predicated region
    $region46: #{tpu_custom_call.1} parent=1 // pred_check
      _
    $region47: #{tpu_custom_call.1} parent=1 // pred_check_branch
      %77 = sbr.rel (0) target = $region49
    $region48: #{tpu_custom_call.1} parent=1 // pred_region
      _
    $region49: #{tpu_custom_call.1} parent=1 // pred_fallthru
      _
    // Predicated region
    $region50: #{tpu_custom_call.1} parent=1 // pred_check
      _
    $region51: #{tpu_custom_call.1} parent=1 // pred_check_branch
      %79 = sbr.rel (0) target = $region53
    $region52: #{tpu_custom_call.1} parent=1 // pred_region
      _
    $region53: #{tpu_custom_call.1} parent=1 // pred_fallthru
      _
    // Predicated region
    $region54: #{tpu_custom_call.1} parent=1 // pred_check
      _
    $region55: #{tpu_custom_call.1} parent=1 // pred_check_branch
      %81 = sbr.rel (0) target = $region57
    $region56: #{tpu_custom_call.1} parent=1 // pred_region
      _
    $region57: #{tpu_custom_call.1} parent=1 // pred_fallthru
      _
    // Predicated region
    $region58: #{tpu_custom_call.1} parent=1 // pred_check
      _
    $region59: #{tpu_custom_call.1} parent=1 // pred_check_branch
      %83 = sbr.rel (0) target = $region61
    $region60: #{tpu_custom_call.1} parent=1 // pred_region
      _
    $region61: #{tpu_custom_call.1} parent=1 // pred_fallthru
      _
    // Predicated region
    $region62: #{tpu_custom_call.1} parent=1 // pred_check
      _
    $region63: #{tpu_custom_call.1} parent=1 // pred_check_branch
      %85 = sbr.rel (0) target = $region65
    $region64: #{tpu_custom_call.1} parent=1 // pred_region
      _
    $region65: #{tpu_custom_call.1} parent=1 // pred_fallthru
      _
    // Predicated region
    $region66: #{tpu_custom_call.1} parent=1 // pred_check
      _
    $region67: #{tpu_custom_call.1} parent=1 // pred_check_branch
      %87 = sbr.rel (0) target = $region69
    $region68: #{tpu_custom_call.1} parent=1 // pred_region
      %88 = dma.done [#allocation3], 32768
    $region69: #{tpu_custom_call.1} parent=1 // pred_fallthru
      _
    // Predicated region
    $region70: #{tpu_custom_call.1} parent=1 // pred_check
      _
    $region71: #{tpu_custom_call.1} parent=1 // pred_check_branch
      %90 = sbr.rel (0) target = $region73
    $region72: #{tpu_custom_call.1} parent=1 // pred_region
      %91 = dma.done [#allocation6], 24576
    $region73: #{tpu_custom_call.1} parent=1 // pred_fallthru
      _
    // Predicated region
    $region74: #{tpu_custom_call.1} parent=1 // pred_check
      _
    $region75: #{tpu_custom_call.1} parent=1 // pred_check_branch
      %93 = sbr.rel (0) target = $region77
    $region76: #{tpu_custom_call.1} parent=1 // pred_region
      %94 = dma.done [#allocation6], 32768
    $region77: #{tpu_custom_call.1} parent=1 // pred_fallthru
      _
    %v95 = vld [vmem:[%s0] sm:$0xff]
    %v96 = vld [vmem:[%s0 + $0x8] sm:$0xff]
    %v97 = vld [vmem:[%s0 + $0x10] sm:$0xff]
    %v98 = vld [vmem:[%s0 + $0x18] sm:$0xff]
    %v99 = vld [vmem:[%s0 + $0x20] sm:$0xff]
    %v100 = vld [vmem:[%s0 + $0x28] sm:$0xff]
    %v101 = vld [vmem:[%s0 + $0x30] sm:$0xff]
    %v102 = vld [vmem:[%s0 + $0x38] sm:$0xff]
    %v103 = vld [vmem:[%s0 + $0x40] sm:$0xff]
    %v104 = vld [vmem:[%s0 + $0x48] sm:$0xff]
    %v105 = vld [vmem:[%s0 + $0x50] sm:$0xff]
    %v106 = vld [vmem:[%s0 + $0x58] sm:$0xff]
    %v107 = vld [vmem:[%s0 + $0x60] sm:$0xff]
    %v108 = vld [vmem:[%s0 + $0x68] sm:$0xff]
    %v109 = vld [vmem:[%s0 + $0x70] sm:$0xff]
    %v110 = vld [vmem:[%s0 + $0x78] sm:$0xff]
    %v111 = vld [vmem:[#allocation2] sm:$0xff]
    %v112 = vld [vmem:[#allocation2 + $0x8] sm:$0xff]
    %v113 = vld [vmem:[#allocation2 + $0x10] sm:$0xff]
    %v114 = vld [vmem:[#allocation2 + $0x18] sm:$0xff]
    %v115 = vld [vmem:[#allocation2 + $0x20] sm:$0xff]
    %v116 = vld [vmem:[#allocation2 + $0x28] sm:$0xff]
    %v117 = vld [vmem:[#allocation2 + $0x30] sm:$0xff]
    %v118 = vld [vmem:[#allocation2 + $0x38] sm:$0xff]
    %v119 = vld [vmem:[#allocation2 + $0x40] sm:$0xff]
    %v120 = vld [vmem:[#allocation2 + $0x48] sm:$0xff]
    %v121 = vld [vmem:[#allocation2 + $0x50] sm:$0xff]
    %v122 = vld [vmem:[#allocation2 + $0x58] sm:$0xff]
    %v123 = vld [vmem:[#allocation2 + $0x60] sm:$0xff]
    %v124 = vld [vmem:[#allocation2 + $0x68] sm:$0xff]
    %v125 = vld [vmem:[#allocation2 + $0x70] sm:$0xff]
    %v126 = vld [vmem:[#allocation2 + $0x78] sm:$0xff]
    %v127 = vld [vmem:[#allocation2 + $0x80] sm:$0xff]
    %v128 = vld [vmem:[#allocation2 + $0x88] sm:$0xff]
    %v129 = vld [vmem:[#allocation2 + $0x90] sm:$0xff]
    %v130 = vld [vmem:[#allocation2 + $0x98] sm:$0xff]
    %v131 = vld [vmem:[#allocation2 + $0xa0] sm:$0xff]
    %v132 = vld [vmem:[#allocation2 + $0xa8] sm:$0xff]
    %v133 = vld [vmem:[#allocation2 + $0xb0] sm:$0xff]
    %v134 = vld [vmem:[#allocation2 + $0xb8] sm:$0xff]
    %v135 = vld [vmem:[#allocation2 + $0xc0] sm:$0xff]
    %v136 = vld [vmem:[#allocation2 + $0xc8] sm:$0xff]
    %v137 = vld [vmem:[#allocation2 + $0xd0] sm:$0xff]
    %v138 = vld [vmem:[#allocation2 + $0xd8] sm:$0xff]
    %v139 = vld [vmem:[#allocation2 + $0xe0] sm:$0xff]
    %v140 = vld [vmem:[#allocation2 + $0xe8] sm:$0xff]
    %v141 = vld [vmem:[#allocation2 + $0xf0] sm:$0xff]
    %v142 = vld [vmem:[#allocation2 + $0xf8] sm:$0xff]
    %v143 = vld [vmem:[#allocation2 + $0x100] sm:$0xff]
    %v144 = vld [vmem:[#allocation2 + $0x108] sm:$0xff]
    %v145 = vld [vmem:[#allocation2 + $0x110] sm:$0xff]
    %v146 = vld [vmem:[#allocation2 + $0x118] sm:$0xff]
    %v147 = vld [vmem:[#allocation2 + $0x120] sm:$0xff]
    %v148 = vld [vmem:[#allocation2 + $0x128] sm:$0xff]
    %v149 = vld [vmem:[#allocation2 + $0x130] sm:$0xff]
    %v150 = vld [vmem:[#allocation2 + $0x138] sm:$0xff]
    %v151 = vld [vmem:[#allocation2 + $0x140] sm:$0xff]
    %v152 = vld [vmem:[#allocation2 + $0x148] sm:$0xff]
    %v153 = vld [vmem:[#allocation2 + $0x150] sm:$0xff]
    %v154 = vld [vmem:[#allocation2 + $0x158] sm:$0xff]
    %v155 = vld [vmem:[#allocation2 + $0x160] sm:$0xff]
    %v156 = vld [vmem:[#allocation2 + $0x168] sm:$0xff]
    %v157 = vld [vmem:[#allocation2 + $0x170] sm:$0xff]
    %v158 = vld [vmem:[#allocation2 + $0x178] sm:$0xff]
    %v159 = vld [vmem:[#allocation2 + $0x180] sm:$0xff]
    %v160 = vld [vmem:[#allocation2 + $0x188] sm:$0xff]
    %v161 = vld [vmem:[#allocation2 + $0x190] sm:$0xff]
    %v162 = vld [vmem:[#allocation2 + $0x198] sm:$0xff]
    %v163 = vld [vmem:[#allocation2 + $0x1a0] sm:$0xff]
    %v164 = vld [vmem:[#allocation2 + $0x1a8] sm:$0xff]
    %v165 = vld [vmem:[#allocation2 + $0x1b0] sm:$0xff]
    %v166 = vld [vmem:[#allocation2 + $0x1b8] sm:$0xff]
    %v167 = vld [vmem:[#allocation2 + $0x1c0] sm:$0xff]
    %v168 = vld [vmem:[#allocation2 + $0x1c8] sm:$0xff]
    %v169 = vld [vmem:[#allocation2 + $0x1d0] sm:$0xff]
    %v170 = vld [vmem:[#allocation2 + $0x1d8] sm:$0xff]
    %v171 = vld [vmem:[#allocation2 + $0x1e0] sm:$0xff]
    %v172 = vld [vmem:[#allocation2 + $0x1e8] sm:$0xff]
    %v173 = vld [vmem:[#allocation2 + $0x1f0] sm:$0xff]
    %v174 = vld [vmem:[#allocation2 + $0x1f8] sm:$0xff]
    %v175 = vld [vmem:[#allocation2 + $0x200] sm:$0xff]
    %v176 = vld [vmem:[#allocation2 + $0x208] sm:$0xff]
    %v177 = vld [vmem:[#allocation2 + $0x210] sm:$0xff]
    %v178 = vld [vmem:[#allocation2 + $0x218] sm:$0xff]
    %v179 = vld [vmem:[#allocation2 + $0x220] sm:$0xff]
    %v180 = vld [vmem:[#allocation2 + $0x228] sm:$0xff]
    %v181 = vld [vmem:[#allocation2 + $0x230] sm:$0xff]
    %v182 = vld [vmem:[#allocation2 + $0x238] sm:$0xff]
    %v183 = vld [vmem:[#allocation2 + $0x240] sm:$0xff]
    %v184 = vld [vmem:[#allocation2 + $0x248] sm:$0xff]
    %v185 = vld [vmem:[#allocation2 + $0x250] sm:$0xff]
    %v186 = vld [vmem:[#allocation2 + $0x258] sm:$0xff]
    %v187 = vld [vmem:[#allocation2 + $0x260] sm:$0xff]
    %v188 = vld [vmem:[#allocation2 + $0x268] sm:$0xff]
    %v189 = vld [vmem:[#allocation2 + $0x270] sm:$0xff]
    %v190 = vld [vmem:[#allocation2 + $0x278] sm:$0xff]
    %v191 = vld [vmem:[#allocation2 + $0x280] sm:$0xff]
    %v192 = vld [vmem:[#allocation2 + $0x288] sm:$0xff]
    %v193 = vld [vmem:[#allocation2 + $0x290] sm:$0xff]
    %v194 = vld [vmem:[#allocation2 + $0x298] sm:$0xff]
    %v195 = vld [vmem:[#allocation2 + $0x2a0] sm:$0xff]
    %v196 = vld [vmem:[#allocation2 + $0x2a8] sm:$0xff]
    %v197 = vld [vmem:[#allocation2 + $0x2b0] sm:$0xff]
    %v198 = vld [vmem:[#allocation2 + $0x2b8] sm:$0xff]
    %v199 = vld [vmem:[#allocation2 + $0x2c0] sm:$0xff]
    %v200 = vld [vmem:[#allocation2 + $0x2c8] sm:$0xff]
    %v201 = vld [vmem:[#allocation2 + $0x2d0] sm:$0xff]
    %v202 = vld [vmem:[#allocation2 + $0x2d8] sm:$0xff]
    %v203 = vld [vmem:[#allocation2 + $0x2e0] sm:$0xff]
    %v204 = vld [vmem:[#allocation2 + $0x2e8] sm:$0xff]
    %v205 = vld [vmem:[#allocation2 + $0x2f0] sm:$0xff]
    %v206 = vld [vmem:[#allocation2 + $0x2f8] sm:$0xff]
    %v207 = vld [vmem:[#allocation2 + $0x300] sm:$0xff]
    %v208 = vld [vmem:[#allocation2 + $0x308] sm:$0xff]
    %v209 = vld [vmem:[#allocation2 + $0x310] sm:$0xff]
    %v210 = vld [vmem:[#allocation2 + $0x318] sm:$0xff]
    %v211 = vld [vmem:[#allocation2 + $0x320] sm:$0xff]
    %v212 = vld [vmem:[#allocation2 + $0x328] sm:$0xff]
    %v213 = vld [vmem:[#allocation2 + $0x330] sm:$0xff]
    %v214 = vld [vmem:[#allocation2 + $0x338] sm:$0xff]
    %v215 = vld [vmem:[#allocation2 + $0x340] sm:$0xff]
    %v216 = vld [vmem:[#allocation2 + $0x348] sm:$0xff]
    %v217 = vld [vmem:[#allocation2 + $0x350] sm:$0xff]
    %v218 = vld [vmem:[#allocation2 + $0x358] sm:$0xff]
    %v219 = vld [vmem:[#allocation2 + $0x360] sm:$0xff]
    %v220 = vld [vmem:[#allocation2 + $0x368] sm:$0xff]
    %v221 = vld [vmem:[#allocation2 + $0x370] sm:$0xff]
    %v222 = vld [vmem:[#allocation2 + $0x378] sm:$0xff]
    %v223 = vld [vmem:[#allocation2 + $0x380] sm:$0xff]
    %v224 = vld [vmem:[#allocation2 + $0x388] sm:$0xff]
    %v225 = vld [vmem:[#allocation2 + $0x390] sm:$0xff]
    %v226 = vld [vmem:[#allocation2 + $0x398] sm:$0xff]
    %v227 = vld [vmem:[#allocation2 + $0x3a0] sm:$0xff]
    %v228 = vld [vmem:[#allocation2 + $0x3a8] sm:$0xff]
    %v229 = vld [vmem:[#allocation2 + $0x3b0] sm:$0xff]
    %v230 = vld [vmem:[#allocation2 + $0x3b8] sm:$0xff]
    %v231 = vld [vmem:[#allocation2 + $0x3c0] sm:$0xff]
    %v232 = vld [vmem:[#allocation2 + $0x3c8] sm:$0xff]
    %v233 = vld [vmem:[#allocation2 + $0x3d0] sm:$0xff]
    %v234 = vld [vmem:[#allocation2 + $0x3d8] sm:$0xff]
    %v235 = vld [vmem:[#allocation2 + $0x3e0] sm:$0xff]
    %v236 = vld [vmem:[#allocation2 + $0x3e8] sm:$0xff]
    %v237 = vld [vmem:[#allocation2 + $0x3f0] sm:$0xff]
    %v238 = vld [vmem:[#allocation2 + $0x3f8] sm:$0xff]
    %v239 = vld [vmem:[#allocation2 + $0x400] sm:$0xff]
    %v240 = vld [vmem:[#allocation2 + $0x408] sm:$0xff]
    %v241 = vld [vmem:[#allocation2 + $0x410] sm:$0xff]
    %v242 = vld [vmem:[#allocation2 + $0x418] sm:$0xff]
    %v243 = vld [vmem:[#allocation2 + $0x420] sm:$0xff]
    %v244 = vld [vmem:[#allocation2 + $0x428] sm:$0xff]
    %v245 = vld [vmem:[#allocation2 + $0x430] sm:$0xff]
    %v246 = vld [vmem:[#allocation2 + $0x438] sm:$0xff]
    %v247 = vld [vmem:[#allocation2 + $0x440] sm:$0xff]
    %v248 = vld [vmem:[#allocation2 + $0x448] sm:$0xff]
    %v249 = vld [vmem:[#allocation2 + $0x450] sm:$0xff]
    %v250 = vld [vmem:[#allocation2 + $0x458] sm:$0xff]
    %v251 = vld [vmem:[#allocation2 + $0x460] sm:$0xff]
    %v252 = vld [vmem:[#allocation2 + $0x468] sm:$0xff]
    %v253 = vld [vmem:[#allocation2 + $0x470] sm:$0xff]
    %v254 = vld [vmem:[#allocation2 + $0x478] sm:$0xff]
    %v255 = vld [vmem:[#allocation2 + $0x480] sm:$0xff]
    %v256 = vld [vmem:[#allocation2 + $0x488] sm:$0xff]
    %v257 = vld [vmem:[#allocation2 + $0x490] sm:$0xff]
    %v258 = vld [vmem:[#allocation2 + $0x498] sm:$0xff]
    %v259 = vld [vmem:[#allocation2 + $0x4a0] sm:$0xff]
    %v260 = vld [vmem:[#allocation2 + $0x4a8] sm:$0xff]
    %v261 = vld [vmem:[#allocation2 + $0x4b0] sm:$0xff]
    %v262 = vld [vmem:[#allocation2 + $0x4b8] sm:$0xff]
    %v263 = vld [vmem:[#allocation2 + $0x4c0] sm:$0xff]
    %v264 = vld [vmem:[#allocation2 + $0x4c8] sm:$0xff]
    %v265 = vld [vmem:[#allocation2 + $0x4d0] sm:$0xff]
    %v266 = vld [vmem:[#allocation2 + $0x4d8] sm:$0xff]
    %v267 = vld [vmem:[#allocation2 + $0x4e0] sm:$0xff]
    %v268 = vld [vmem:[#allocation2 + $0x4e8] sm:$0xff]
    %v269 = vld [vmem:[#allocation2 + $0x4f0] sm:$0xff]
    %v270 = vld [vmem:[#allocation2 + $0x4f8] sm:$0xff]
    %v271 = vld [vmem:[#allocation2 + $0x500] sm:$0xff]
    %v272 = vld [vmem:[#allocation2 + $0x508] sm:$0xff]
    %v273 = vld [vmem:[#allocation2 + $0x510] sm:$0xff]
    %v274 = vld [vmem:[#allocation2 + $0x518] sm:$0xff]
    %v275 = vld [vmem:[#allocation2 + $0x520] sm:$0xff]
    %v276 = vld [vmem:[#allocation2 + $0x528] sm:$0xff]
    %v277 = vld [vmem:[#allocation2 + $0x530] sm:$0xff]
    %v278 = vld [vmem:[#allocation2 + $0x538] sm:$0xff]
    %v279 = vld [vmem:[#allocation2 + $0x540] sm:$0xff]
    %v280 = vld [vmem:[#allocation2 + $0x548] sm:$0xff]
    %v281 = vld [vmem:[#allocation2 + $0x550] sm:$0xff]
    %v282 = vld [vmem:[#allocation2 + $0x558] sm:$0xff]
    %v283 = vld [vmem:[#allocation2 + $0x560] sm:$0xff]
    %v284 = vld [vmem:[#allocation2 + $0x568] sm:$0xff]
    %v285 = vld [vmem:[#allocation2 + $0x570] sm:$0xff]
    %v286 = vld [vmem:[#allocation2 + $0x578] sm:$0xff]
    %v287 = vld [vmem:[#allocation2 + $0x580] sm:$0xff]
    %v288 = vld [vmem:[#allocation2 + $0x588] sm:$0xff]
    %v289 = vld [vmem:[#allocation2 + $0x590] sm:$0xff]
    %v290 = vld [vmem:[#allocation2 + $0x598] sm:$0xff]
    %v291 = vld [vmem:[#allocation2 + $0x5a0] sm:$0xff]
    %v292 = vld [vmem:[#allocation2 + $0x5a8] sm:$0xff]
    %v293 = vld [vmem:[#allocation2 + $0x5b0] sm:$0xff]
    %v294 = vld [vmem:[#allocation2 + $0x5b8] sm:$0xff]
    %v295 = vld [vmem:[#allocation2 + $0x5c0] sm:$0xff]
    %v296 = vld [vmem:[#allocation2 + $0x5c8] sm:$0xff]
    %v297 = vld [vmem:[#allocation2 + $0x5d0] sm:$0xff]
    %v298 = vld [vmem:[#allocation2 + $0x5d8] sm:$0xff]
    %v299 = vld [vmem:[#allocation2 + $0x5e0] sm:$0xff]
    %v300 = vld [vmem:[#allocation2 + $0x5e8] sm:$0xff]
    %v301 = vld [vmem:[#allocation2 + $0x5f0] sm:$0xff]
    %v302 = vld [vmem:[#allocation2 + $0x5f8] sm:$0xff]
    %v303 = vld [vmem:[#allocation2 + $0x600] sm:$0xff]
    %v304 = vld [vmem:[#allocation2 + $0x608] sm:$0xff]
    %v305 = vld [vmem:[#allocation2 + $0x610] sm:$0xff]
    %v306 = vld [vmem:[#allocation2 + $0x618] sm:$0xff]
    %v307 = vld [vmem:[#allocation2 + $0x620] sm:$0xff]
    %v308 = vld [vmem:[#allocation2 + $0x628] sm:$0xff]
    %v309 = vld [vmem:[#allocation2 + $0x630] sm:$0xff]
    %v310 = vld [vmem:[#allocation2 + $0x638] sm:$0xff]
    %v311 = vld [vmem:[#allocation2 + $0x640] sm:$0xff]
    %v312 = vld [vmem:[#allocation2 + $0x648] sm:$0xff]
    %v313 = vld [vmem:[#allocation2 + $0x650] sm:$0xff]
    %v314 = vld [vmem:[#allocation2 + $0x658] sm:$0xff]
    %v315 = vld [vmem:[#allocation2 + $0x660] sm:$0xff]
    %v316 = vld [vmem:[#allocation2 + $0x668] sm:$0xff]
    %v317 = vld [vmem:[#allocation2 + $0x670] sm:$0xff]
    %v318 = vld [vmem:[#allocation2 + $0x678] sm:$0xff]
    %v319 = vld [vmem:[#allocation2 + $0x680] sm:$0xff]
    %v320 = vld [vmem:[#allocation2 + $0x688] sm:$0xff]
    %v321 = vld [vmem:[#allocation2 + $0x690] sm:$0xff]
    %v322 = vld [vmem:[#allocation2 + $0x698] sm:$0xff]
    %v323 = vld [vmem:[#allocation2 + $0x6a0] sm:$0xff]
    %v324 = vld [vmem:[#allocation2 + $0x6a8] sm:$0xff]
    %v325 = vld [vmem:[#allocation2 + $0x6b0] sm:$0xff]
    %v326 = vld [vmem:[#allocation2 + $0x6b8] sm:$0xff]
    %v327 = vld [vmem:[#allocation2 + $0x6c0] sm:$0xff]
    %v328 = vld [vmem:[#allocation2 + $0x6c8] sm:$0xff]
    %v329 = vld [vmem:[#allocation2 + $0x6d0] sm:$0xff]
    %v330 = vld [vmem:[#allocation2 + $0x6d8] sm:$0xff]
    %v331 = vld [vmem:[#allocation2 + $0x6e0] sm:$0xff]
    %v332 = vld [vmem:[#allocation2 + $0x6e8] sm:$0xff]
    %v333 = vld [vmem:[#allocation2 + $0x6f0] sm:$0xff]
    %v334 = vld [vmem:[#allocation2 + $0x6f8] sm:$0xff]
    %v335 = vld [vmem:[#allocation2 + $0x700] sm:$0xff]
    %v336 = vld [vmem:[#allocation2 + $0x708] sm:$0xff]
    %v337 = vld [vmem:[#allocation2 + $0x710] sm:$0xff]
    %v338 = vld [vmem:[#allocation2 + $0x718] sm:$0xff]
    %v339 = vld [vmem:[#allocation2 + $0x720] sm:$0xff]
    %v340 = vld [vmem:[#allocation2 + $0x728] sm:$0xff]
    %v341 = vld [vmem:[#allocation2 + $0x730] sm:$0xff]
    %v342 = vld [vmem:[#allocation2 + $0x738] sm:$0xff]
    %v343 = vld [vmem:[#allocation2 + $0x740] sm:$0xff]
    %v344 = vld [vmem:[#allocation2 + $0x748] sm:$0xff]
    %v345 = vld [vmem:[#allocation2 + $0x750] sm:$0xff]
    %v346 = vld [vmem:[#allocation2 + $0x758] sm:$0xff]
    %v347 = vld [vmem:[#allocation2 + $0x760] sm:$0xff]
    %v348 = vld [vmem:[#allocation2 + $0x768] sm:$0xff]
    %v349 = vld [vmem:[#allocation2 + $0x770] sm:$0xff]
    %v350 = vld [vmem:[#allocation2 + $0x778] sm:$0xff]
    %v351 = vld [vmem:[#allocation2 + $0x780] sm:$0xff]
    %v352 = vld [vmem:[#allocation2 + $0x788] sm:$0xff]
    %v353 = vld [vmem:[#allocation2 + $0x790] sm:$0xff]
    %v354 = vld [vmem:[#allocation2 + $0x798] sm:$0xff]
    %v355 = vld [vmem:[#allocation2 + $0x7a0] sm:$0xff]
    %v356 = vld [vmem:[#allocation2 + $0x7a8] sm:$0xff]
    %v357 = vld [vmem:[#allocation2 + $0x7b0] sm:$0xff]
    %v358 = vld [vmem:[#allocation2 + $0x7b8] sm:$0xff]
    %v359 = vld [vmem:[#allocation2 + $0x7c0] sm:$0xff]
    %v360 = vld [vmem:[#allocation2 + $0x7c8] sm:$0xff]
    %v361 = vld [vmem:[#allocation2 + $0x7d0] sm:$0xff]
    %v362 = vld [vmem:[#allocation2 + $0x7d8] sm:$0xff]
    %v363 = vld [vmem:[#allocation2 + $0x7e0] sm:$0xff]
    %v364 = vld [vmem:[#allocation2 + $0x7e8] sm:$0xff]
    %v365 = vld [vmem:[#allocation2 + $0x7f0] sm:$0xff]
    %v366 = vld [vmem:[#allocation2 + $0x7f8] sm:$0xff]
    %367 = vmatprep.subr.mxu0 %v112
    %368 = vmatpush1.msra.mxu0 %v111
    %369 = vmatprep.subr.mxu0 %v114
    %370 = vmatpush1.msra.mxu0 %v113
    %371 = vmatprep.subr.mxu0 %v116
    %372 = vmatpush1.msra.mxu0 %v115
    %373 = vmatprep.subr.mxu0 %v118
    %374 = vmatpush1.msra.mxu0 %v117
    %375 = vmatprep.subr.mxu0 %v120
    %376 = vmatpush1.msra.mxu0 %v119
    %377 = vmatprep.subr.mxu0 %v122
    %378 = vmatpush1.msra.mxu0 %v121
    %379 = vmatprep.subr.mxu0 %v124
    %380 = vmatpush1.msra.mxu0 %v123
    %381 = vmatprep.subr.mxu0 %v126
    %382 = vmatpush1.msra.mxu0 %v125
    %383 = vmatprep.subr.mxu0 %v128
    %384 = vmatpush1.msra.mxu0 %v127
    %385 = vmatprep.subr.mxu0 %v130
    %386 = vmatpush1.msra.mxu0 %v129
    %387 = vmatprep.subr.mxu0 %v132
    %388 = vmatpush1.msra.mxu0 %v131
    %389 = vmatprep.subr.mxu0 %v134
    %390 = vmatpush1.msra.mxu0 %v133
    %391 = vmatprep.subr.mxu0 %v136
    %392 = vmatpush1.msra.mxu0 %v135
    %393 = vmatprep.subr.mxu0 %v138
    %394 = vmatpush1.msra.mxu0 %v137
    %395 = vmatprep.subr.mxu0 %v140
    %396 = vmatpush1.msra.mxu0 %v139
    %397 = vmatprep.subr.mxu0 %v142
    %398 = vmatpush1.msra.mxu0 %v141
    %399 = vmatprep.subr.mxu0 %v144
    %400 = vmatpush1.msra.mxu0 %v143
    %401 = vmatprep.subr.mxu0 %v146
    %402 = vmatpush1.msra.mxu0 %v145
    %403 = vmatprep.subr.mxu0 %v148
    %404 = vmatpush1.msra.mxu0 %v147
    %405 = vmatprep.subr.mxu0 %v150
    %406 = vmatpush1.msra.mxu0 %v149
    %407 = vmatprep.subr.mxu0 %v152
    %408 = vmatpush1.msra.mxu0 %v151
    %409 = vmatprep.subr.mxu0 %v154
    %410 = vmatpush1.msra.mxu0 %v153
    %411 = vmatprep.subr.mxu0 %v156
    %412 = vmatpush1.msra.mxu0 %v155
    %413 = vmatprep.subr.mxu0 %v158
    %414 = vmatpush1.msra.mxu0 %v157
    %415 = vmatprep.subr.mxu0 %v160
    %416 = vmatpush1.msra.mxu0 %v159
    %417 = vmatprep.subr.mxu0 %v162
    %418 = vmatpush1.msra.mxu0 %v161
    %419 = vmatprep.subr.mxu0 %v164
    %420 = vmatpush1.msra.mxu0 %v163
    %421 = vmatprep.subr.mxu0 %v166
    %422 = vmatpush1.msra.mxu0 %v165
    %423 = vmatprep.subr.mxu0 %v168
    %424 = vmatpush1.msra.mxu0 %v167
    %425 = vmatprep.subr.mxu0 %v170
    %426 = vmatpush1.msra.mxu0 %v169
    %427 = vmatprep.subr.mxu0 %v172
    %428 = vmatpush1.msra.mxu0 %v171
    %429 = vmatprep.subr.mxu0 %v174
    %430 = vmatpush1.msra.mxu0 %v173
    %431 = vmatprep.mubr.f32.mxu0 %v96
    %432 = vmatmul.mubr.f32.gmra.mrb[0].mxu0 %v95
    %v433 = vpop.f32.mrb[0].mxu0
    %v434 = vadd.f32 0.0, %v433
    %v435 = vpop.f32.mrb[0].mxu0
    %v436 = vadd.f32 0.0, %v435
    %437 = vmatprep.mubr.f32.mxu0 %v104
    %438 = vmatmul.mubr.f32.gmra.mrb[0].mxu0 %v103
    %v439 = vpop.f32.mrb[0].mxu0
    %v440 = vadd.f32 0.0, %v439
    %v441 = vpop.f32.mrb[0].mxu0
    %v442 = vadd.f32 0.0, %v441
    %443 = vdwg.mxu0
    %444 = vmatprep.subr.mxu0 %v176
    %445 = vmatpush1.msra.mxu0 %v175
    %446 = vmatprep.subr.mxu0 %v178
    %447 = vmatpush1.msra.mxu0 %v177
    %448 = vmatprep.subr.mxu0 %v180
    %449 = vmatpush1.msra.mxu0 %v179
    %450 = vmatprep.subr.mxu0 %v182
    %451 = vmatpush1.msra.mxu0 %v181
    %452 = vmatprep.subr.mxu0 %v184
    %453 = vmatpush1.msra.mxu0 %v183
    %454 = vmatprep.subr.mxu0 %v186
    %455 = vmatpush1.msra.mxu0 %v185
    %456 = vmatprep.subr.mxu0 %v188
    %457 = vmatpush1.msra.mxu0 %v187
    %458 = vmatprep.subr.mxu0 %v190
    %459 = vmatpush1.msra.mxu0 %v189
    %460 = vmatprep.subr.mxu0 %v192
    %461 = vmatpush1.msra.mxu0 %v191
    %462 = vmatprep.subr.mxu0 %v194
    %463 = vmatpush1.msra.mxu0 %v193
    %464 = vmatprep.subr.mxu0 %v196
    %465 = vmatpush1.msra.mxu0 %v195
    %466 = vmatprep.subr.mxu0 %v198
    %467 = vmatpush1.msra.mxu0 %v197
    %468 = vmatprep.subr.mxu0 %v200
    %469 = vmatpush1.msra.mxu0 %v199
    %470 = vmatprep.subr.mxu0 %v202
    %471 = vmatpush1.msra.mxu0 %v201
    %472 = vmatprep.subr.mxu0 %v204
    %473 = vmatpush1.msra.mxu0 %v203
    %474 = vmatprep.subr.mxu0 %v206
    %475 = vmatpush1.msra.mxu0 %v205
    %476 = vmatprep.subr.mxu0 %v208
    %477 = vmatpush1.msra.mxu0 %v207
    %478 = vmatprep.subr.mxu0 %v210
    %479 = vmatpush1.msra.mxu0 %v209
    %480 = vmatprep.subr.mxu0 %v212
    %481 = vmatpush1.msra.mxu0 %v211
    %482 = vmatprep.subr.mxu0 %v214
    %483 = vmatpush1.msra.mxu0 %v213
    %484 = vmatprep.subr.mxu0 %v216
    %485 = vmatpush1.msra.mxu0 %v215
    %486 = vmatprep.subr.mxu0 %v218
    %487 = vmatpush1.msra.mxu0 %v217
    %488 = vmatprep.subr.mxu0 %v220
    %489 = vmatpush1.msra.mxu0 %v219
    %490 = vmatprep.subr.mxu0 %v222
    %491 = vmatpush1.msra.mxu0 %v221
    %492 = vmatprep.subr.mxu0 %v224
    %493 = vmatpush1.msra.mxu0 %v223
    %494 = vmatprep.subr.mxu0 %v226
    %495 = vmatpush1.msra.mxu0 %v225
    %496 = vmatprep.subr.mxu0 %v228
    %497 = vmatpush1.msra.mxu0 %v227
    %498 = vmatprep.subr.mxu0 %v230
    %499 = vmatpush1.msra.mxu0 %v229
    %500 = vmatprep.subr.mxu0 %v232
    %501 = vmatpush1.msra.mxu0 %v231
    %502 = vmatprep.subr.mxu0 %v234
    %503 = vmatpush1.msra.mxu0 %v233
    %504 = vmatprep.subr.mxu0 %v236
    %505 = vmatpush1.msra.mxu0 %v235
    %506 = vmatprep.subr.mxu0 %v238
    %507 = vmatpush1.msra.mxu0 %v237
    %508 = vmatprep.mubr.f32.mxu0 %v98
    %509 = vmatmul.mubr.f32.gmra.mrb[0].mxu0 %v97
    %v510 = vpop.f32.mrb[0].mxu0
    %v511 = vadd.f32 %v434, %v510
    %v512 = vpop.f32.mrb[0].mxu0
    %v513 = vadd.f32 %v436, %v512
    %514 = vmatprep.mubr.f32.mxu0 %v106
    %515 = vmatmul.mubr.f32.gmra.mrb[0].mxu0 %v105
    %v516 = vpop.f32.mrb[0].mxu0
    %v517 = vadd.f32 %v440, %v516
    %v518 = vpop.f32.mrb[0].mxu0
    %v519 = vadd.f32 %v442, %v518
    %520 = vdwg.mxu0
    %521 = vmatprep.subr.mxu0 %v240
    %522 = vmatpush1.msra.mxu0 %v239
    %523 = vmatprep.subr.mxu0 %v242
    %524 = vmatpush1.msra.mxu0 %v241
    %525 = vmatprep.subr.mxu0 %v244
    %526 = vmatpush1.msra.mxu0 %v243
    %527 = vmatprep.subr.mxu0 %v246
    %528 = vmatpush1.msra.mxu0 %v245
    %529 = vmatprep.subr.mxu0 %v248
    %530 = vmatpush1.msra.mxu0 %v247
    %531 = vmatprep.subr.mxu0 %v250
    %532 = vmatpush1.msra.mxu0 %v249
    %533 = vmatprep.subr.mxu0 %v252
    %534 = vmatpush1.msra.mxu0 %v251
    %535 = vmatprep.subr.mxu0 %v254
    %536 = vmatpush1.msra.mxu0 %v253
    %537 = vmatprep.subr.mxu0 %v256
    %538 = vmatpush1.msra.mxu0 %v255
    %539 = vmatprep.subr.mxu0 %v258
    %540 = vmatpush1.msra.mxu0 %v257
    %541 = vmatprep.subr.mxu0 %v260
    %542 = vmatpush1.msra.mxu0 %v259
    %543 = vmatprep.subr.mxu0 %v262
    %544 = vmatpush1.msra.mxu0 %v261
    %545 = vmatprep.subr.mxu0 %v264
    %546 = vmatpush1.msra.mxu0 %v263
    %547 = vmatprep.subr.mxu0 %v266
    %548 = vmatpush1.msra.mxu0 %v265
    %549 = vmatprep.subr.mxu0 %v268
    %550 = vmatpush1.msra.mxu0 %v267
    %551 = vmatprep.subr.mxu0 %v270
    %552 = vmatpush1.msra.mxu0 %v269
    %553 = vmatprep.subr.mxu0 %v272
    %554 = vmatpush1.msra.mxu0 %v271
    %555 = vmatprep.subr.mxu0 %v274
    %556 = vmatpush1.msra.mxu0 %v273
    %557 = vmatprep.subr.mxu0 %v276
    %558 = vmatpush1.msra.mxu0 %v275
    %559 = vmatprep.subr.mxu0 %v278
    %560 = vmatpush1.msra.mxu0 %v277
    %561 = vmatprep.subr.mxu0 %v280
    %562 = vmatpush1.msra.mxu0 %v279
    %563 = vmatprep.subr.mxu0 %v282
    %564 = vmatpush1.msra.mxu0 %v281
    %565 = vmatprep.subr.mxu0 %v284
    %566 = vmatpush1.msra.mxu0 %v283
    %567 = vmatprep.subr.mxu0 %v286
    %568 = vmatpush1.msra.mxu0 %v285
    %569 = vmatprep.subr.mxu0 %v288
    %570 = vmatpush1.msra.mxu0 %v287
    %571 = vmatprep.subr.mxu0 %v290
    %572 = vmatpush1.msra.mxu0 %v289
    %573 = vmatprep.subr.mxu0 %v292
    %574 = vmatpush1.msra.mxu0 %v291
    %575 = vmatprep.subr.mxu0 %v294
    %576 = vmatpush1.msra.mxu0 %v293
    %577 = vmatprep.subr.mxu0 %v296
    %578 = vmatpush1.msra.mxu0 %v295
    %579 = vmatprep.subr.mxu0 %v298
    %580 = vmatpush1.msra.mxu0 %v297
    %581 = vmatprep.subr.mxu0 %v300
    %582 = vmatpush1.msra.mxu0 %v299
    %583 = vmatprep.subr.mxu0 %v302
    %584 = vmatpush1.msra.mxu0 %v301
    %585 = vmatprep.mubr.f32.mxu0 %v100
    %586 = vmatmul.mubr.f32.gmra.mrb[0].mxu0 %v99
    %v587 = vpop.f32.mrb[0].mxu0
    %v588 = vadd.f32 %v511, %v587
    %v589 = vpop.f32.mrb[0].mxu0
    %v590 = vadd.f32 %v513, %v589
    %591 = vmatprep.mubr.f32.mxu0 %v108
    %592 = vmatmul.mubr.f32.gmra.mrb[0].mxu0 %v107
    %v593 = vpop.f32.mrb[0].mxu0
    %v594 = vadd.f32 %v517, %v593
    %v595 = vpop.f32.mrb[0].mxu0
    %v596 = vadd.f32 %v519, %v595
    %597 = vdwg.mxu0
    %598 = vmatprep.subr.mxu0 %v304
    %599 = vmatpush1.msra.mxu0 %v303
    %600 = vmatprep.subr.mxu0 %v306
    %601 = vmatpush1.msra.mxu0 %v305
    %602 = vmatprep.subr.mxu0 %v308
    %603 = vmatpush1.msra.mxu0 %v307
    %604 = vmatprep.subr.mxu0 %v310
    %605 = vmatpush1.msra.mxu0 %v309
    %606 = vmatprep.subr.mxu0 %v312
    %607 = vmatpush1.msra.mxu0 %v311
    %608 = vmatprep.subr.mxu0 %v314
    %609 = vmatpush1.msra.mxu0 %v313
    %610 = vmatprep.subr.mxu0 %v316
    %611 = vmatpush1.msra.mxu0 %v315
    %612 = vmatprep.subr.mxu0 %v318
    %613 = vmatpush1.msra.mxu0 %v317
    %614 = vmatprep.subr.mxu0 %v320
    %615 = vmatpush1.msra.mxu0 %v319
    %616 = vmatprep.subr.mxu0 %v322
    %617 = vmatpush1.msra.mxu0 %v321
    %618 = vmatprep.subr.mxu0 %v324
    %619 = vmatpush1.msra.mxu0 %v323
    %620 = vmatprep.subr.mxu0 %v326
    %621 = vmatpush1.msra.mxu0 %v325
    %622 = vmatprep.subr.mxu0 %v328
    %623 = vmatpush1.msra.mxu0 %v327
    %624 = vmatprep.subr.mxu0 %v330
    %625 = vmatpush1.msra.mxu0 %v329
    %626 = vmatprep.subr.mxu0 %v332
    %627 = vmatpush1.msra.mxu0 %v331
    %628 = vmatprep.subr.mxu0 %v334
    %629 = vmatpush1.msra.mxu0 %v333
    %630 = vmatprep.subr.mxu0 %v336
    %631 = vmatpush1.msra.mxu0 %v335
    %632 = vmatprep.subr.mxu0 %v338
    %633 = vmatpush1.msra.mxu0 %v337
    %634 = vmatprep.subr.mxu0 %v340
    %635 = vmatpush1.msra.mxu0 %v339
    %636 = vmatprep.subr.mxu0 %v342
    %637 = vmatpush1.msra.mxu0 %v341
    %638 = vmatprep.subr.mxu0 %v344
    %639 = vmatpush1.msra.mxu0 %v343
    %640 = vmatprep.subr.mxu0 %v346
    %641 = vmatpush1.msra.mxu0 %v345
    %642 = vmatprep.subr.mxu0 %v348
    %643 = vmatpush1.msra.mxu0 %v347
    %644 = vmatprep.subr.mxu0 %v350
    %645 = vmatpush1.msra.mxu0 %v349
    %646 = vmatprep.subr.mxu0 %v352
    %647 = vmatpush1.msra.mxu0 %v351
    %648 = vmatprep.subr.mxu0 %v354
    %649 = vmatpush1.msra.mxu0 %v353
    %650 = vmatprep.subr.mxu0 %v356
    %651 = vmatpush1.msra.mxu0 %v355
    %652 = vmatprep.subr.mxu0 %v358
    %653 = vmatpush1.msra.mxu0 %v357
    %654 = vmatprep.subr.mxu0 %v360
    %655 = vmatpush1.msra.mxu0 %v359
    %656 = vmatprep.subr.mxu0 %v362
    %657 = vmatpush1.msra.mxu0 %v361
    %658 = vmatprep.subr.mxu0 %v364
    %659 = vmatpush1.msra.mxu0 %v363
    %660 = vmatprep.subr.mxu0 %v366
    %661 = vmatpush1.msra.mxu0 %v365
    %662 = vmatprep.mubr.f32.mxu0 %v102
    %663 = vmatmul.mubr.f32.gmra.mrb[0].mxu0 %v101
    %v664 = vpop.f32.mrb[0].mxu0
    %v665 = vadd.f32 %v588, %v664
    %v666 = vpop.f32.mrb[0].mxu0
    %v667 = vadd.f32 %v590, %v666
    %668 = vmatprep.mubr.f32.mxu0 %v110
    %669 = vmatmul.mubr.f32.gmra.mrb[0].mxu0 %v109
    %v670 = vpop.f32.mrb[0].mxu0
    %v671 = vadd.f32 %v594, %v670
    %v672 = vpop.f32.mrb[0].mxu0
    %v673 = vadd.f32 %v596, %v672
    %674 = vdwg.mxu0
    %v675 = vadd.f32 %v665, %v671
    %v676 = vrot.slane %v675, 4
    %v677 = vadd.f32 %v675, %v676
    %v678 = vrot.slane %v677, 2
    %v679 = vadd.f32 %v677, %v678
    %v680 = vrot.slane %v679, 1
    %v681 = vadd.f32 %v679, %v680
    %v682 = vadd.f32 %v667, %v673
    %v683 = vrot.slane %v682, 4
    %v684 = vadd.f32 %v682, %v683
    %v685 = vrot.slane %v684, 2
    %v686 = vadd.f32 %v684, %v685
    %v687 = vrot.slane %v686, 1
    %v688 = vadd.f32 %v686, %v687
    %v689 = vmul.f32 %v665, %v665
    %v690 = vmul.f32 %v667, %v667
    %v691 = vmul.f32 %v671, %v671
    %v692 = vmul.f32 %v673, %v673
    %v693 = vadd.f32 %v689, %v691
    %v694 = vrot.slane %v693, 4
    %v695 = vadd.f32 %v693, %v694
    %v696 = vrot.slane %v695, 2
    %v697 = vadd.f32 %v695, %v696
    %v698 = vrot.slane %v697, 1
    %v699 = vadd.f32 %v697, %v698
    %v700 = vadd.f32 %v690, %v692
    %v701 = vrot.slane %v700, 4
    %v702 = vadd.f32 %v700, %v701
    %v703 = vrot.slane %v702, 2
    %v704 = vadd.f32 %v702, %v703
    %v705 = vrot.slane %v704, 1
    %v706 = vadd.f32 %v704, %v705
    %v707 = vld [vmem:[%s6] sm:$0xff]
    %v708 = vld [vmem:[%s6 + $0x8] sm:$0xff]
    %v709 = vld [vmem:[%s6 + $0x10] sm:$0xff]
    %v710 = vld [vmem:[%s6 + $0x18] sm:$0xff]
    %v711 = vld [vmem:[%s6 + $0x20] sm:$0xff]
    %v712 = vld [vmem:[%s6 + $0x28] sm:$0xff]
    %v713 = vld [vmem:[%s6 + $0x30] sm:$0xff]
    %v714 = vld [vmem:[%s6 + $0x38] sm:$0xff]
    %v715 = vld [vmem:[%s6 + $0x40] sm:$0xff]
    %v716 = vld [vmem:[%s6 + $0x48] sm:$0xff]
    %v717 = vld [vmem:[%s6 + $0x50] sm:$0xff]
    %v718 = vld [vmem:[%s6 + $0x58] sm:$0xff]
    %v719 = vld [vmem:[%s6 + $0x60] sm:$0xff]
    %v720 = vld [vmem:[%s6 + $0x68] sm:$0xff]
    %v721 = vld [vmem:[%s6 + $0x70] sm:$0xff]
    %v722 = vld [vmem:[%s6 + $0x78] sm:$0xff]
    %v723 = vld [vmem:[%s6 + $0x80] sm:$0xff]
    %v724 = vld [vmem:[%s6 + $0x88] sm:$0xff]
    %v725 = vld [vmem:[%s6 + $0x90] sm:$0xff]
    %v726 = vld [vmem:[%s6 + $0x98] sm:$0xff]
    %v727 = vld [vmem:[%s6 + $0xa0] sm:$0xff]
    %v728 = vld [vmem:[%s6 + $0xa8] sm:$0xff]
    %v729 = vld [vmem:[%s6 + $0xb0] sm:$0xff]
    %v730 = vld [vmem:[%s6 + $0xb8] sm:$0xff]
    %v731 = vld [vmem:[%s6 + $0xc0] sm:$0xff]
    %v732 = vld [vmem:[%s6 + $0xc8] sm:$0xff]
    %v733 = vld [vmem:[%s6 + $0xd0] sm:$0xff]
    %v734 = vld [vmem:[%s6 + $0xd8] sm:$0xff]
    %v735 = vld [vmem:[%s6 + $0xe0] sm:$0xff]
    %v736 = vld [vmem:[%s6 + $0xe8] sm:$0xff]
    %v737 = vld [vmem:[%s6 + $0xf0] sm:$0xff]
    %v738 = vld [vmem:[%s6 + $0xf8] sm:$0xff]
    %739 = vmatprep.subr.mxu0 0.0
    %740 = vmatpush1.msra.mxu0 %v707
    %741 = vmatprep.subr.mxu0 0.0
    %742 = vmatpush1.msra.mxu0 %v708
    %743 = vmatprep.subr.mxu0 0.0
    %744 = vmatpush1.msra.mxu0 %v709
    %745 = vmatprep.subr.mxu0 0.0
    %746 = vmatpush1.msra.mxu0 %v710
    %747 = vmatprep.subr.mxu0 0.0
    %748 = vmatpush1.msra.mxu0 %v711
    %749 = vmatprep.subr.mxu0 0.0
    %750 = vmatpush1.msra.mxu0 %v712
    %751 = vmatprep.subr.mxu0 0.0
    %752 = vmatpush1.msra.mxu0 %v713
    %753 = vmatprep.subr.mxu0 0.0
    %754 = vmatpush1.msra.mxu0 %v714
    %755 = vmatprep.subr.mxu0 0.0
    %756 = vmatpush1.msra.mxu0 %v715
    %757 = vmatprep.subr.mxu0 0.0
    %758 = vmatpush1.msra.mxu0 %v716
    %759 = vmatprep.subr.mxu0 0.0
    %760 = vmatpush1.msra.mxu0 %v717
    %761 = vmatprep.subr.mxu0 0.0
    %762 = vmatpush1.msra.mxu0 %v718
    %763 = vmatprep.subr.mxu0 0.0
    %764 = vmatpush1.msra.mxu0 %v719
    %765 = vmatprep.subr.mxu0 0.0
    %766 = vmatpush1.msra.mxu0 %v720
    %767 = vmatprep.subr.mxu0 0.0
    %768 = vmatpush1.msra.mxu0 %v721
    %769 = vmatprep.subr.mxu0 0.0
    %770 = vmatpush1.msra.mxu0 %v722
    %771 = vmatprep.subr.mxu0 0.0
    %772 = vmatpush1.msra.mxu0 %v723
    %773 = vmatprep.subr.mxu0 0.0
    %774 = vmatpush1.msra.mxu0 %v724
    %775 = vmatprep.subr.mxu0 0.0
    %776 = vmatpush1.msra.mxu0 %v725
    %777 = vmatprep.subr.mxu0 0.0
    %778 = vmatpush1.msra.mxu0 %v726
    %779 = vmatprep.subr.mxu0 0.0
    %780 = vmatpush1.msra.mxu0 %v727
    %781 = vmatprep.subr.mxu0 0.0
    %782 = vmatpush1.msra.mxu0 %v728
    %783 = vmatprep.subr.mxu0 0.0
    %784 = vmatpush1.msra.mxu0 %v729
    %785 = vmatprep.subr.mxu0 0.0
    %786 = vmatpush1.msra.mxu0 %v730
    %787 = vmatprep.subr.mxu0 0.0
    %788 = vmatpush1.msra.mxu0 %v731
    %789 = vmatprep.subr.mxu0 0.0
    %790 = vmatpush1.msra.mxu0 %v732
    %791 = vmatprep.subr.mxu0 0.0
    %792 = vmatpush1.msra.mxu0 %v733
    %793 = vmatprep.subr.mxu0 0.0
    %794 = vmatpush1.msra.mxu0 %v734
    %795 = vmatprep.subr.mxu0 0.0
    %796 = vmatpush1.msra.mxu0 %v735
    %797 = vmatprep.subr.mxu0 0.0
    %798 = vmatpush1.msra.mxu0 %v736
    %799 = vmatprep.subr.mxu0 0.0
    %800 = vmatpush1.msra.mxu0 %v737
    %801 = vmatprep.subr.mxu0 0.0
    %802 = vmatpush1.msra.mxu0 %v738
    %803 = vmatprep.mubr.f32.mxu0 %v688
    %804 = vmatmul.mubr.f32.gmra.mrb[0].mxu0 %v681
    %v805 = vpop.f32.mrb[0].mxu0
    %v806 = vadd.f32 0.0, %v805
    %v807 = vpop.f32.mrb[0].mxu0
    %808 = vdwg.mxu0
    %809 = vmatprep.subr.mxu0 0.0
    %810 = vmatpush1.msra.mxu0 %v707
    %811 = vmatprep.subr.mxu0 0.0
    %812 = vmatpush1.msra.mxu0 %v708
    %813 = vmatprep.subr.mxu0 0.0
    %814 = vmatpush1.msra.mxu0 %v709
    %815 = vmatprep.subr.mxu0 0.0
    %816 = vmatpush1.msra.mxu0 %v710
    %817 = vmatprep.subr.mxu0 0.0
    %818 = vmatpush1.msra.mxu0 %v711
    %819 = vmatprep.subr.mxu0 0.0
    %820 = vmatpush1.msra.mxu0 %v712
    %821 = vmatprep.subr.mxu0 0.0
    %822 = vmatpush1.msra.mxu0 %v713
    %823 = vmatprep.subr.mxu0 0.0
    %824 = vmatpush1.msra.mxu0 %v714
    %825 = vmatprep.subr.mxu0 0.0
    %826 = vmatpush1.msra.mxu0 %v715
    %827 = vmatprep.subr.mxu0 0.0
    %828 = vmatpush1.msra.mxu0 %v716
    %829 = vmatprep.subr.mxu0 0.0
    %830 = vmatpush1.msra.mxu0 %v717
    %831 = vmatprep.subr.mxu0 0.0
    %832 = vmatpush1.msra.mxu0 %v718
    %833 = vmatprep.subr.mxu0 0.0
    %834 = vmatpush1.msra.mxu0 %v719
    %835 = vmatprep.subr.mxu0 0.0
    %836 = vmatpush1.msra.mxu0 %v720
    %837 = vmatprep.subr.mxu0 0.0
    %838 = vmatpush1.msra.mxu0 %v721
    %839 = vmatprep.subr.mxu0 0.0
    %840 = vmatpush1.msra.mxu0 %v722
    %841 = vmatprep.subr.mxu0 0.0
    %842 = vmatpush1.msra.mxu0 %v723
    %843 = vmatprep.subr.mxu0 0.0
    %844 = vmatpush1.msra.mxu0 %v724
    %845 = vmatprep.subr.mxu0 0.0
    %846 = vmatpush1.msra.mxu0 %v725
    %847 = vmatprep.subr.mxu0 0.0
    %848 = vmatpush1.msra.mxu0 %v726
    %849 = vmatprep.subr.mxu0 0.0
    %850 = vmatpush1.msra.mxu0 %v727
    %851 = vmatprep.subr.mxu0 0.0
    %852 = vmatpush1.msra.mxu0 %v728
    %853 = vmatprep.subr.mxu0 0.0
    %854 = vmatpush1.msra.mxu0 %v729
    %855 = vmatprep.subr.mxu0 0.0
    %856 = vmatpush1.msra.mxu0 %v730
    %857 = vmatprep.subr.mxu0 0.0
    %858 = vmatpush1.msra.mxu0 %v731
    %859 = vmatprep.subr.mxu0 0.0
    %860 = vmatpush1.msra.mxu0 %v732
    %861 = vmatprep.subr.mxu0 0.0
    %862 = vmatpush1.msra.mxu0 %v733
    %863 = vmatprep.subr.mxu0 0.0
    %864 = vmatpush1.msra.mxu0 %v734
    %865 = vmatprep.subr.mxu0 0.0
    %866 = vmatpush1.msra.mxu0 %v735
    %867 = vmatprep.subr.mxu0 0.0
    %868 = vmatpush1.msra.mxu0 %v736
    %869 = vmatprep.subr.mxu0 0.0
    %870 = vmatpush1.msra.mxu0 %v737
    %871 = vmatprep.subr.mxu0 0.0
    %872 = vmatpush1.msra.mxu0 %v738
    %873 = vmatprep.mubr.f32.mxu0 %v706
    %874 = vmatmul.mubr.f32.gmra.mrb[0].mxu0 %v699
    %v875 = vpop.f32.mrb[0].mxu0
    %v876 = vadd.f32 0.0, %v875
    %v877 = vpop.f32.mrb[0].mxu0
    %878 = vdwg.mxu0
    %v879 = vmul.f32 %v806, 0.0009765625
    %v880 = vmul.f32 %v876, 0.0009765625
    %v881 = vmul.f32 %v879, %v879
    %v882 = vsub.f32 %v880, %v881
    %v883 = vld [vmem:[%s10] sm:$0x1]
    %v884 = vadd.f32 %v882, 1e-05
    %v885 = vrsqrt.pop %v884
    %v886 = vmul.f32 %v883, %v885
    %v887 = vld [vmem:[%s11] sm:$0x1]
    %v888 = vmul.f32 %v879, %v886
    %v889 = vsub.f32 %v887, %v888
    %v890 = vld [vmem:[%s7] sm:$0xff]
    %v892 = vcombine.high %v890, %v890
    %vm893 = vcmask 31744
    %v895 = vsel %vm893, %v886, 0
    %vm897 = vcmask 1043456
    %v898 = vsel %vm897, %v890, 0
    %v900 = vsel %vm897, %v892, 0
    %902 = vmatprep.subr.mxu0 %v900
    %903 = vmatpush1.msra.mxu0 %v898
    %904 = vmatprep.subr.mxu0 0.0
    %905 = vmatpush1.msra.mxu0 0.0
    %906 = vmatprep.subr.mxu0 0.0
    %907 = vmatpush1.msra.mxu0 0.0
    %908 = vmatprep.subr.mxu0 0.0
    %909 = vmatpush1.msra.mxu0 0.0
    %910 = vmatprep.subr.mxu0 0.0
    %911 = vmatpush1.msra.mxu0 0.0
    %912 = vmatprep.subr.mxu0 0.0
    %913 = vmatpush1.msra.mxu0 0.0
    %914 = vmatprep.subr.mxu0 0.0
    %915 = vmatpush1.msra.mxu0 0.0
    %916 = vmatprep.subr.mxu0 0.0
    %917 = vmatpush1.msra.mxu0 0.0
    %918 = vmatprep.subr.mxu0 0.0
    %919 = vmatpush1.msra.mxu0 0.0
    %920 = vmatprep.subr.mxu0 0.0
    %921 = vmatpush1.msra.mxu0 0.0
    %922 = vmatprep.subr.mxu0 0.0
    %923 = vmatpush1.msra.mxu0 0.0
    %924 = vmatprep.subr.mxu0 0.0
    %925 = vmatpush1.msra.mxu0 0.0
    %926 = vmatprep.subr.mxu0 0.0
    %927 = vmatpush1.msra.mxu0 0.0
    %928 = vmatprep.subr.mxu0 0.0
    %929 = vmatpush1.msra.mxu0 0.0
    %930 = vmatprep.subr.mxu0 0.0
    %931 = vmatpush1.msra.mxu0 0.0
    %932 = vmatprep.subr.mxu0 0.0
    %933 = vmatpush1.msra.mxu0 0.0
    %934 = vmatprep.subr.mxu0 0.0
    %935 = vmatpush1.msra.mxu0 0.0
    %936 = vmatprep.subr.mxu0 0.0
    %937 = vmatpush1.msra.mxu0 0.0
    %938 = vmatprep.subr.mxu0 0.0
    %939 = vmatpush1.msra.mxu0 0.0
    %940 = vmatprep.subr.mxu0 0.0
    %941 = vmatpush1.msra.mxu0 0.0
    %942 = vmatprep.subr.mxu0 0.0
    %943 = vmatpush1.msra.mxu0 0.0
    %944 = vmatprep.subr.mxu0 0.0
    %945 = vmatpush1.msra.mxu0 0.0
    %946 = vmatprep.subr.mxu0 0.0
    %947 = vmatpush1.msra.mxu0 0.0
    %948 = vmatprep.subr.mxu0 0.0
    %949 = vmatpush1.msra.mxu0 0.0
    %950 = vmatprep.subr.mxu0 0.0
    %951 = vmatpush1.msra.mxu0 0.0
    %952 = vmatprep.subr.mxu0 0.0
    %953 = vmatpush1.msra.mxu0 0.0
    %954 = vmatprep.subr.mxu0 0.0
    %955 = vmatpush1.msra.mxu0 0.0
    %956 = vmatprep.subr.mxu0 0.0
    %957 = vmatpush1.msra.mxu0 0.0
    %958 = vmatprep.subr.mxu0 0.0
    %959 = vmatpush1.msra.mxu0 0.0
    %960 = vmatprep.subr.mxu0 0.0
    %961 = vmatpush1.msra.mxu0 0.0
    %962 = vmatprep.subr.mxu0 0.0
    %963 = vmatpush1.msra.mxu0 0.0
    %964 = vmatprep.subr.mxu0 0.0
    %965 = vmatpush1.msra.mxu0 0.0
    %966 = vmatprep.mubr.f32.mxu0 0.0
    %967 = vmatmul.mubr.f32.gmra.mrb[0].mxu0 %v895
    %v968 = vpop.f32.mrb[0].mxu0
    %v969 = vadd.f32 0.0, %v968
    %v970 = vpop.f32.mrb[0].mxu0
    %v971 = vadd.f32 0.0, %v970
    %972 = vdwg.mxu0
    %v974 = vsel %vm893, %v889, 0
    %976 = vmatprep.subr.mxu0 %v900
    %977 = vmatpush1.msra.mxu0 %v898
    %978 = vmatprep.subr.mxu0 0.0
    %979 = vmatpush1.msra.mxu0 0.0
    %980 = vmatprep.subr.mxu0 0.0
    %981 = vmatpush1.msra.mxu0 0.0
    %982 = vmatprep.subr.mxu0 0.0
    %983 = vmatpush1.msra.mxu0 0.0
    %984 = vmatprep.subr.mxu0 0.0
    %985 = vmatpush1.msra.mxu0 0.0
    %986 = vmatprep.subr.mxu0 0.0
    %987 = vmatpush1.msra.mxu0 0.0
    %988 = vmatprep.subr.mxu0 0.0
    %989 = vmatpush1.msra.mxu0 0.0
    %990 = vmatprep.subr.mxu0 0.0
    %991 = vmatpush1.msra.mxu0 0.0
    %992 = vmatprep.subr.mxu0 0.0
    %993 = vmatpush1.msra.mxu0 0.0
    %994 = vmatprep.subr.mxu0 0.0
    %995 = vmatpush1.msra.mxu0 0.0
    %996 = vmatprep.subr.mxu0 0.0
    %997 = vmatpush1.msra.mxu0 0.0
    %998 = vmatprep.subr.mxu0 0.0
    %999 = vmatpush1.msra.mxu0 0.0
    %1000 = vmatprep.subr.mxu0 0.0
    %1001 = vmatpush1.msra.mxu0 0.0
    %1002 = vmatprep.subr.mxu0 0.0
    %1003 = vmatpush1.msra.mxu0 0.0
    %1004 = vmatprep.subr.mxu0 0.0
    %1005 = vmatpush1.msra.mxu0 0.0
    %1006 = vmatprep.subr.mxu0 0.0
    %1007 = vmatpush1.msra.mxu0 0.0
    %1008 = vmatprep.subr.mxu0 0.0
    %1009 = vmatpush1.msra.mxu0 0.0
    %1010 = vmatprep.subr.mxu0 0.0
    %1011 = vmatpush1.msra.mxu0 0.0
    %1012 = vmatprep.subr.mxu0 0.0
    %1013 = vmatpush1.msra.mxu0 0.0
    %1014 = vmatprep.subr.mxu0 0.0
    %1015 = vmatpush1.msra.mxu0 0.0
    %1016 = vmatprep.subr.mxu0 0.0
    %1017 = vmatpush1.msra.mxu0 0.0
    %1018 = vmatprep.subr.mxu0 0.0
    %1019 = vmatpush1.msra.mxu0 0.0
    %1020 = vmatprep.subr.mxu0 0.0
    %1021 = vmatpush1.msra.mxu0 0.0
    %1022 = vmatprep.subr.mxu0 0.0
    %1023 = vmatpush1.msra.mxu0 0.0
    %1024 = vmatprep.subr.mxu0 0.0
    %1025 = vmatpush1.msra.mxu0 0.0
    %1026 = vmatprep.subr.mxu0 0.0
    %1027 = vmatpush1.msra.mxu0 0.0
    %1028 = vmatprep.subr.mxu0 0.0
    %1029 = vmatpush1.msra.mxu0 0.0
    %1030 = vmatprep.subr.mxu0 0.0
    %1031 = vmatpush1.msra.mxu0 0.0
    %1032 = vmatprep.subr.mxu0 0.0
    %1033 = vmatpush1.msra.mxu0 0.0
    %1034 = vmatprep.subr.mxu0 0.0
    %1035 = vmatpush1.msra.mxu0 0.0
    %1036 = vmatprep.subr.mxu0 0.0
    %1037 = vmatpush1.msra.mxu0 0.0
    %1038 = vmatprep.subr.mxu0 0.0
    %1039 = vmatpush1.msra.mxu0 0.0
    %1040 = vmatprep.mubr.f32.mxu0 0.0
    %1041 = vmatmul.mubr.f32.gmra.mrb[0].mxu0 %v974
    %v1042 = vpop.f32.mrb[0].mxu0
    %v1043 = vadd.f32 0.0, %v1042
    %v1044 = vpop.f32.mrb[0].mxu0
    %v1045 = vadd.f32 0.0, %v1044
    %1046 = vdwg.mxu0
    %v1047 = vlaneseq
    %v1048 = vshrl.u32 %v1047, 7
    %v1049 = vsub.s32 0, %v1048
    %v1050 = vrot.slane %v969, %v1049
    %v1051 = vlaneseq
    %v1052 = vshrl.u32 %v1051, 7
    %v1053 = vsub.s32 0, %v1052
    %v1054 = vrot.slane %v971, %v1053
    %v1055 = vmul.f32 %v665, %v1050
    %v1056 = vmul.f32 %v667, %v1054
    %v1057 = vmul.f32 %v671, %v1050
    %v1058 = vmul.f32 %v673, %v1054
    %v1059 = vlaneseq
    %v1060 = vshrl.u32 %v1059, 7
    %v1061 = vsub.s32 0, %v1060
    %v1062 = vrot.slane %v1043, %v1061
    %v1063 = vlaneseq
    %v1064 = vshrl.u32 %v1063, 7
    %v1065 = vsub.s32 0, %v1064
    %v1066 = vrot.slane %v1045, %v1065
    %v1067 = vadd.f32 %v1055, %v1062
    %v1068 = vadd.f32 %v1056, %v1066
    %v1069 = vadd.f32 %v1057, %v1062
    %v1070 = vadd.f32 %v1058, %v1066
    %v1071 = vmax.f32 %v1067, 0.0
    %v1072 = vmax.f32 %v1068, 0.0
    %v1073 = vmax.f32 %v1069, 0.0
    %v1074 = vmax.f32 %v1070, 0.0
    %v1075 = vld [vmem:[%s4] sm:$0xff]
    %v1076 = vld [vmem:[%s4 + $0x8] sm:$0xff]
    %vm1077 = vcmask 130048
    %v1079 = vsel %vm1077, %v1075, 0
    %v1082 = vsel %vm1077, %v1076, 0
    %1084 = vmatprep.subr.mxu0 %v1072
    %1085 = vmatpush1.msra.mxu0 %v1071
    %1086 = vmatprep.subr.mxu0 %v1074
    %1087 = vmatpush1.msra.mxu0 %v1073
    %1088 = vmatprep.subr.mxu0 0.0
    %1089 = vmatpush1.msra.mxu0 0.0
    %1090 = vmatprep.subr.mxu0 0.0
    %1091 = vmatpush1.msra.mxu0 0.0
    %1092 = vmatprep.subr.mxu0 0.0
    %1093 = vmatpush1.msra.mxu0 0.0
    %1094 = vmatprep.subr.mxu0 0.0
    %1095 = vmatpush1.msra.mxu0 0.0
    %1096 = vmatprep.subr.mxu0 0.0
    %1097 = vmatpush1.msra.mxu0 0.0
    %1098 = vmatprep.subr.mxu0 0.0
    %1099 = vmatpush1.msra.mxu0 0.0
    %1100 = vmatprep.subr.mxu0 0.0
    %1101 = vmatpush1.msra.mxu0 0.0
    %1102 = vmatprep.subr.mxu0 0.0
    %1103 = vmatpush1.msra.mxu0 0.0
    %1104 = vmatprep.subr.mxu0 0.0
    %1105 = vmatpush1.msra.mxu0 0.0
    %1106 = vmatprep.subr.mxu0 0.0
    %1107 = vmatpush1.msra.mxu0 0.0
    %1108 = vmatprep.subr.mxu0 0.0
    %1109 = vmatpush1.msra.mxu0 0.0
    %1110 = vmatprep.subr.mxu0 0.0
    %1111 = vmatpush1.msra.mxu0 0.0
    %1112 = vmatprep.subr.mxu0 0.0
    %1113 = vmatpush1.msra.mxu0 0.0
    %1114 = vmatprep.subr.mxu0 0.0
    %1115 = vmatpush1.msra.mxu0 0.0
    %1116 = vmatprep.subr.mxu0 0.0
    %1117 = vmatpush1.msra.mxu0 0.0
    %1118 = vmatprep.subr.mxu0 0.0
    %1119 = vmatpush1.msra.mxu0 0.0
    %1120 = vmatprep.subr.mxu0 0.0
    %1121 = vmatpush1.msra.mxu0 0.0
    %1122 = vmatprep.subr.mxu0 0.0
    %1123 = vmatpush1.msra.mxu0 0.0
    %1124 = vmatprep.subr.mxu0 0.0
    %1125 = vmatpush1.msra.mxu0 0.0
    %1126 = vmatprep.subr.mxu0 0.0
    %1127 = vmatpush1.msra.mxu0 0.0
    %1128 = vmatprep.subr.mxu0 0.0
    %1129 = vmatpush1.msra.mxu0 0.0
    %1130 = vmatprep.subr.mxu0 0.0
    %1131 = vmatpush1.msra.mxu0 0.0
    %1132 = vmatprep.subr.mxu0 0.0
    %1133 = vmatpush1.msra.mxu0 0.0
    %1134 = vmatprep.subr.mxu0 0.0
    %1135 = vmatpush1.msra.mxu0 0.0
    %1136 = vmatprep.subr.mxu0 0.0
    %1137 = vmatpush1.msra.mxu0 0.0
    %1138 = vmatprep.subr.mxu0 0.0
    %1139 = vmatpush1.msra.mxu0 0.0
    %1140 = vmatprep.subr.mxu0 0.0
    %1141 = vmatpush1.msra.mxu0 0.0
    %1142 = vmatprep.subr.mxu0 0.0
    %1143 = vmatpush1.msra.mxu0 0.0
    %1144 = vmatprep.subr.mxu0 0.0
    %1145 = vmatpush1.msra.mxu0 0.0
    %1146 = vmatprep.subr.mxu0 0.0
    %1147 = vmatpush1.msra.mxu0 0.0
    %1148 = vmatprep.mubr.f32.mxu0 0.0
    %1149 = vmatmul.mubr.f32.gmra.mrb[0].mxu0 %v1079
    %v1150 = vpop.f32.mrb[0].mxu0
    %v1151 = vadd.f32 0.0, %v1150
    %v1152 = vpop.f32.mrb[0].mxu0
    %v1153 = vadd.f32 0.0, %v1152
    %1154 = vmatprep.mubr.f32.mxu0 0.0
    %1155 = vmatmul.mubr.f32.gmra.mrb[0].mxu0 %v1082
    %v1156 = vpop.f32.mrb[0].mxu0
    %v1157 = vadd.f32 0.0, %v1156
    %v1158 = vpop.f32.mrb[0].mxu0
    %v1159 = vadd.f32 0.0, %v1158
    %1160 = vdwg.mxu0
    %v1161 = vld [vmem:[%s5] sm:$0xff]
    %v1162 = vld [vmem:[%s5 + $0x8] sm:$0xff]
    %v1164 = vsel %vm1077, %v1161, 0
    %v1167 = vsel %vm1077, %v1162, 0
    %1169 = vmatprep.subr.mxu0 %v1072
    %1170 = vmatpush1.msra.mxu0 %v1071
    %1171 = vmatprep.subr.mxu0 %v1074
    %1172 = vmatpush1.msra.mxu0 %v1073
    %1173 = vmatprep.subr.mxu0 0.0
    %1174 = vmatpush1.msra.mxu0 0.0
    %1175 = vmatprep.subr.mxu0 0.0
    %1176 = vmatpush1.msra.mxu0 0.0
    %1177 = vmatprep.subr.mxu0 0.0
    %1178 = vmatpush1.msra.mxu0 0.0
    %1179 = vmatprep.subr.mxu0 0.0
    %1180 = vmatpush1.msra.mxu0 0.0
    %1181 = vmatprep.subr.mxu0 0.0
    %1182 = vmatpush1.msra.mxu0 0.0
    %1183 = vmatprep.subr.mxu0 0.0
    %1184 = vmatpush1.msra.mxu0 0.0
    %1185 = vmatprep.subr.mxu0 0.0
    %1186 = vmatpush1.msra.mxu0 0.0
    %1187 = vmatprep.subr.mxu0 0.0
    %1188 = vmatpush1.msra.mxu0 0.0
    %1189 = vmatprep.subr.mxu0 0.0
    %1190 = vmatpush1.msra.mxu0 0.0
    %1191 = vmatprep.subr.mxu0 0.0
    %1192 = vmatpush1.msra.mxu0 0.0
    %1193 = vmatprep.subr.mxu0 0.0
    %1194 = vmatpush1.msra.mxu0 0.0
    %1195 = vmatprep.subr.mxu0 0.0
    %1196 = vmatpush1.msra.mxu0 0.0
    %1197 = vmatprep.subr.mxu0 0.0
    %1198 = vmatpush1.msra.mxu0 0.0
    %1199 = vmatprep.subr.mxu0 0.0
    %1200 = vmatpush1.msra.mxu0 0.0
    %1201 = vmatprep.subr.mxu0 0.0
    %1202 = vmatpush1.msra.mxu0 0.0
    %1203 = vmatprep.subr.mxu0 0.0
    %1204 = vmatpush1.msra.mxu0 0.0
    %1205 = vmatprep.subr.mxu0 0.0
    %1206 = vmatpush1.msra.mxu0 0.0
    %1207 = vmatprep.subr.mxu0 0.0
    %1208 = vmatpush1.msra.mxu0 0.0
    %1209 = vmatprep.subr.mxu0 0.0
    %1210 = vmatpush1.msra.mxu0 0.0
    %1211 = vmatprep.subr.mxu0 0.0
    %1212 = vmatpush1.msra.mxu0 0.0
    %1213 = vmatprep.subr.mxu0 0.0
    %1214 = vmatpush1.msra.mxu0 0.0
    %1215 = vmatprep.subr.mxu0 0.0
    %1216 = vmatpush1.msra.mxu0 0.0
    %1217 = vmatprep.subr.mxu0 0.0
    %1218 = vmatpush1.msra.mxu0 0.0
    %1219 = vmatprep.subr.mxu0 0.0
    %1220 = vmatpush1.msra.mxu0 0.0
    %1221 = vmatprep.subr.mxu0 0.0
    %1222 = vmatpush1.msra.mxu0 0.0
    %1223 = vmatprep.subr.mxu0 0.0
    %1224 = vmatpush1.msra.mxu0 0.0
    %1225 = vmatprep.subr.mxu0 0.0
    %1226 = vmatpush1.msra.mxu0 0.0
    %1227 = vmatprep.subr.mxu0 0.0
    %1228 = vmatpush1.msra.mxu0 0.0
    %1229 = vmatprep.subr.mxu0 0.0
    %1230 = vmatpush1.msra.mxu0 0.0
    %1231 = vmatprep.subr.mxu0 0.0
    %1232 = vmatpush1.msra.mxu0 0.0
    %1233 = vmatprep.mubr.f32.mxu0 0.0
    %1234 = vmatmul.mubr.f32.gmra.mrb[0].mxu0 %v1164
    %v1235 = vpop.f32.mrb[0].mxu0
    %v1236 = vadd.f32 0.0, %v1235
    %v1237 = vpop.f32.mrb[0].mxu0
    %v1238 = vadd.f32 0.0, %v1237
    %1239 = vmatprep.mubr.f32.mxu0 0.0
    %1240 = vmatmul.mubr.f32.gmra.mrb[0].mxu0 %v1167
    %v1241 = vpop.f32.mrb[0].mxu0
    %v1242 = vadd.f32 0.0, %v1241
    %v1243 = vpop.f32.mrb[0].mxu0
    %v1244 = vadd.f32 0.0, %v1243
    %1245 = vdwg.mxu0
    %v1246 = vld [vmem:[#allocation5] sm:$0xff]
    %v1247 = vld [vmem:[#allocation5 + $0x8] sm:$0xff]
    %v1248 = vld [vmem:[#allocation5 + $0x10] sm:$0xff]
    %v1249 = vld [vmem:[#allocation5 + $0x18] sm:$0xff]
    %v1250 = vld [vmem:[#allocation5 + $0x20] sm:$0xff]
    %v1251 = vld [vmem:[#allocation5 + $0x28] sm:$0xff]
    %v1252 = vld [vmem:[#allocation5 + $0x30] sm:$0xff]
    %v1253 = vld [vmem:[#allocation5 + $0x38] sm:$0xff]
    %v1254 = vld [vmem:[#allocation5 + $0x40] sm:$0xff]
    %v1255 = vld [vmem:[#allocation5 + $0x48] sm:$0xff]
    %v1256 = vld [vmem:[#allocation5 + $0x50] sm:$0xff]
    %v1257 = vld [vmem:[#allocation5 + $0x58] sm:$0xff]
    %v1258 = vld [vmem:[#allocation5 + $0x60] sm:$0xff]
    %v1259 = vld [vmem:[#allocation5 + $0x68] sm:$0xff]
    %v1260 = vld [vmem:[#allocation5 + $0x70] sm:$0xff]
    %v1261 = vld [vmem:[#allocation5 + $0x78] sm:$0xff]
    %v1262 = vld [vmem:[#allocation5 + $0x80] sm:$0xff]
    %v1263 = vld [vmem:[#allocation5 + $0x88] sm:$0xff]
    %v1264 = vld [vmem:[#allocation5 + $0x90] sm:$0xff]
    %v1265 = vld [vmem:[#allocation5 + $0x98] sm:$0xff]
    %v1266 = vld [vmem:[#allocation5 + $0xa0] sm:$0xff]
    %v1267 = vld [vmem:[#allocation5 + $0xa8] sm:$0xff]
    %v1268 = vld [vmem:[#allocation5 + $0xb0] sm:$0xff]
    %v1269 = vld [vmem:[#allocation5 + $0xb8] sm:$0xff]
    %v1270 = vld [vmem:[#allocation5 + $0xc0] sm:$0xff]
    %v1271 = vld [vmem:[#allocation5 + $0xc8] sm:$0xff]
    %v1272 = vld [vmem:[#allocation5 + $0xd0] sm:$0xff]
    %v1273 = vld [vmem:[#allocation5 + $0xd8] sm:$0xff]
    %v1274 = vld [vmem:[#allocation5 + $0xe0] sm:$0xff]
    %v1275 = vld [vmem:[#allocation5 + $0xe8] sm:$0xff]
    %v1276 = vld [vmem:[#allocation5 + $0xf0] sm:$0xff]
    %v1277 = vld [vmem:[#allocation5 + $0xf8] sm:$0xff]
    %v1278 = vld [vmem:[#allocation5 + $0x100] sm:$0xff]
    %v1279 = vld [vmem:[#allocation5 + $0x108] sm:$0xff]
    %v1280 = vld [vmem:[#allocation5 + $0x110] sm:$0xff]
    %v1281 = vld [vmem:[#allocation5 + $0x118] sm:$0xff]
    %v1282 = vld [vmem:[#allocation5 + $0x120] sm:$0xff]
    %v1283 = vld [vmem:[#allocation5 + $0x128] sm:$0xff]
    %v1284 = vld [vmem:[#allocation5 + $0x130] sm:$0xff]
    %v1285 = vld [vmem:[#allocation5 + $0x138] sm:$0xff]
    %v1286 = vld [vmem:[#allocation5 + $0x140] sm:$0xff]
    %v1287 = vld [vmem:[#allocation5 + $0x148] sm:$0xff]
    %v1288 = vld [vmem:[#allocation5 + $0x150] sm:$0xff]
    %v1289 = vld [vmem:[#allocation5 + $0x158] sm:$0xff]
    %v1290 = vld [vmem:[#allocation5 + $0x160] sm:$0xff]
    %v1291 = vld [vmem:[#allocation5 + $0x168] sm:$0xff]
    %v1292 = vld [vmem:[#allocation5 + $0x170] sm:$0xff]
    %v1293 = vld [vmem:[#allocation5 + $0x178] sm:$0xff]
    %v1294 = vld [vmem:[#allocation5 + $0x180] sm:$0xff]
    %v1295 = vld [vmem:[#allocation5 + $0x188] sm:$0xff]
    %v1296 = vld [vmem:[#allocation5 + $0x190] sm:$0xff]
    %v1297 = vld [vmem:[#allocation5 + $0x198] sm:$0xff]
    %v1298 = vld [vmem:[#allocation5 + $0x1a0] sm:$0xff]
    %v1299 = vld [vmem:[#allocation5 + $0x1a8] sm:$0xff]
    %v1300 = vld [vmem:[#allocation5 + $0x1b0] sm:$0xff]
    %v1301 = vld [vmem:[#allocation5 + $0x1b8] sm:$0xff]
    %v1302 = vld [vmem:[#allocation5 + $0x1c0] sm:$0xff]
    %v1303 = vld [vmem:[#allocation5 + $0x1c8] sm:$0xff]
    %v1304 = vld [vmem:[#allocation5 + $0x1d0] sm:$0xff]
    %v1305 = vld [vmem:[#allocation5 + $0x1d8] sm:$0xff]
    %v1306 = vld [vmem:[#allocation5 + $0x1e0] sm:$0xff]
    %v1307 = vld [vmem:[#allocation5 + $0x1e8] sm:$0xff]
    %v1308 = vld [vmem:[#allocation5 + $0x1f0] sm:$0xff]
    %v1309 = vld [vmem:[#allocation5 + $0x1f8] sm:$0xff]
    %v1310 = vld [vmem:[#allocation5 + $0x200] sm:$0xff]
    %v1311 = vld [vmem:[#allocation5 + $0x208] sm:$0xff]
    %v1312 = vld [vmem:[#allocation5 + $0x210] sm:$0xff]
    %v1313 = vld [vmem:[#allocation5 + $0x218] sm:$0xff]
    %v1314 = vld [vmem:[#allocation5 + $0x220] sm:$0xff]
    %v1315 = vld [vmem:[#allocation5 + $0x228] sm:$0xff]
    %v1316 = vld [vmem:[#allocation5 + $0x230] sm:$0xff]
    %v1317 = vld [vmem:[#allocation5 + $0x238] sm:$0xff]
    %v1318 = vld [vmem:[#allocation5 + $0x240] sm:$0xff]
    %v1319 = vld [vmem:[#allocation5 + $0x248] sm:$0xff]
    %v1320 = vld [vmem:[#allocation5 + $0x250] sm:$0xff]
    %v1321 = vld [vmem:[#allocation5 + $0x258] sm:$0xff]
    %v1322 = vld [vmem:[#allocation5 + $0x260] sm:$0xff]
    %v1323 = vld [vmem:[#allocation5 + $0x268] sm:$0xff]
    %v1324 = vld [vmem:[#allocation5 + $0x270] sm:$0xff]
    %v1325 = vld [vmem:[#allocation5 + $0x278] sm:$0xff]
    %v1326 = vld [vmem:[#allocation5 + $0x280] sm:$0xff]
    %v1327 = vld [vmem:[#allocation5 + $0x288] sm:$0xff]
    %v1328 = vld [vmem:[#allocation5 + $0x290] sm:$0xff]
    %v1329 = vld [vmem:[#allocation5 + $0x298] sm:$0xff]
    %v1330 = vld [vmem:[#allocation5 + $0x2a0] sm:$0xff]
    %v1331 = vld [vmem:[#allocation5 + $0x2a8] sm:$0xff]
    %v1332 = vld [vmem:[#allocation5 + $0x2b0] sm:$0xff]
    %v1333 = vld [vmem:[#allocation5 + $0x2b8] sm:$0xff]
    %v1334 = vld [vmem:[#allocation5 + $0x2c0] sm:$0xff]
    %v1335 = vld [vmem:[#allocation5 + $0x2c8] sm:$0xff]
    %v1336 = vld [vmem:[#allocation5 + $0x2d0] sm:$0xff]
    %v1337 = vld [vmem:[#allocation5 + $0x2d8] sm:$0xff]
    %v1338 = vld [vmem:[#allocation5 + $0x2e0] sm:$0xff]
    %v1339 = vld [vmem:[#allocation5 + $0x2e8] sm:$0xff]
    %v1340 = vld [vmem:[#allocation5 + $0x2f0] sm:$0xff]
    %v1341 = vld [vmem:[#allocation5 + $0x2f8] sm:$0xff]
    %v1342 = vld [vmem:[#allocation5 + $0x300] sm:$0xff]
    %v1343 = vld [vmem:[#allocation5 + $0x308] sm:$0xff]
    %v1344 = vld [vmem:[#allocation5 + $0x310] sm:$0xff]
    %v1345 = vld [vmem:[#allocation5 + $0x318] sm:$0xff]
    %v1346 = vld [vmem:[#allocation5 + $0x320] sm:$0xff]
    %v1347 = vld [vmem:[#allocation5 + $0x328] sm:$0xff]
    %v1348 = vld [vmem:[#allocation5 + $0x330] sm:$0xff]
    %v1349 = vld [vmem:[#allocation5 + $0x338] sm:$0xff]
    %v1350 = vld [vmem:[#allocation5 + $0x340] sm:$0xff]
    %v1351 = vld [vmem:[#allocation5 + $0x348] sm:$0xff]
    %v1352 = vld [vmem:[#allocation5 + $0x350] sm:$0xff]
    %v1353 = vld [vmem:[#allocation5 + $0x358] sm:$0xff]
    %v1354 = vld [vmem:[#allocation5 + $0x360] sm:$0xff]
    %v1355 = vld [vmem:[#allocation5 + $0x368] sm:$0xff]
    %v1356 = vld [vmem:[#allocation5 + $0x370] sm:$0xff]
    %v1357 = vld [vmem:[#allocation5 + $0x378] sm:$0xff]
    %v1358 = vld [vmem:[#allocation5 + $0x380] sm:$0xff]
    %v1359 = vld [vmem:[#allocation5 + $0x388] sm:$0xff]
    %v1360 = vld [vmem:[#allocation5 + $0x390] sm:$0xff]
    %v1361 = vld [vmem:[#allocation5 + $0x398] sm:$0xff]
    %v1362 = vld [vmem:[#allocation5 + $0x3a0] sm:$0xff]
    %v1363 = vld [vmem:[#allocation5 + $0x3a8] sm:$0xff]
    %v1364 = vld [vmem:[#allocation5 + $0x3b0] sm:$0xff]
    %v1365 = vld [vmem:[#allocation5 + $0x3b8] sm:$0xff]
    %v1366 = vld [vmem:[#allocation5 + $0x3c0] sm:$0xff]
    %v1367 = vld [vmem:[#allocation5 + $0x3c8] sm:$0xff]
    %v1368 = vld [vmem:[#allocation5 + $0x3d0] sm:$0xff]
    %v1369 = vld [vmem:[#allocation5 + $0x3d8] sm:$0xff]
    %v1370 = vld [vmem:[#allocation5 + $0x3e0] sm:$0xff]
    %v1371 = vld [vmem:[#allocation5 + $0x3e8] sm:$0xff]
    %v1372 = vld [vmem:[#allocation5 + $0x3f0] sm:$0xff]
    %v1373 = vld [vmem:[#allocation5 + $0x3f8] sm:$0xff]
    %v1374 = vld [vmem:[#allocation5 + $0x400] sm:$0xff]
    %v1375 = vld [vmem:[#allocation5 + $0x408] sm:$0xff]
    %v1376 = vld [vmem:[#allocation5 + $0x410] sm:$0xff]
    %v1377 = vld [vmem:[#allocation5 + $0x418] sm:$0xff]
    %v1378 = vld [vmem:[#allocation5 + $0x420] sm:$0xff]
    %v1379 = vld [vmem:[#allocation5 + $0x428] sm:$0xff]
    %v1380 = vld [vmem:[#allocation5 + $0x430] sm:$0xff]
    %v1381 = vld [vmem:[#allocation5 + $0x438] sm:$0xff]
    %v1382 = vld [vmem:[#allocation5 + $0x440] sm:$0xff]
    %v1383 = vld [vmem:[#allocation5 + $0x448] sm:$0xff]
    %v1384 = vld [vmem:[#allocation5 + $0x450] sm:$0xff]
    %v1385 = vld [vmem:[#allocation5 + $0x458] sm:$0xff]
    %v1386 = vld [vmem:[#allocation5 + $0x460] sm:$0xff]
    %v1387 = vld [vmem:[#allocation5 + $0x468] sm:$0xff]
    %v1388 = vld [vmem:[#allocation5 + $0x470] sm:$0xff]
    %v1389 = vld [vmem:[#allocation5 + $0x478] sm:$0xff]
    %v1390 = vld [vmem:[#allocation5 + $0x480] sm:$0xff]
    %v1391 = vld [vmem:[#allocation5 + $0x488] sm:$0xff]
    %v1392 = vld [vmem:[#allocation5 + $0x490] sm:$0xff]
    %v1393 = vld [vmem:[#allocation5 + $0x498] sm:$0xff]
    %v1394 = vld [vmem:[#allocation5 + $0x4a0] sm:$0xff]
    %v1395 = vld [vmem:[#allocation5 + $0x4a8] sm:$0xff]
    %v1396 = vld [vmem:[#allocation5 + $0x4b0] sm:$0xff]
    %v1397 = vld [vmem:[#allocation5 + $0x4b8] sm:$0xff]
    %v1398 = vld [vmem:[#allocation5 + $0x4c0] sm:$0xff]
    %v1399 = vld [vmem:[#allocation5 + $0x4c8] sm:$0xff]
    %v1400 = vld [vmem:[#allocation5 + $0x4d0] sm:$0xff]
    %v1401 = vld [vmem:[#allocation5 + $0x4d8] sm:$0xff]
    %v1402 = vld [vmem:[#allocation5 + $0x4e0] sm:$0xff]
    %v1403 = vld [vmem:[#allocation5 + $0x4e8] sm:$0xff]
    %v1404 = vld [vmem:[#allocation5 + $0x4f0] sm:$0xff]
    %v1405 = vld [vmem:[#allocation5 + $0x4f8] sm:$0xff]
    %v1406 = vld [vmem:[#allocation5 + $0x500] sm:$0xff]
    %v1407 = vld [vmem:[#allocation5 + $0x508] sm:$0xff]
    %v1408 = vld [vmem:[#allocation5 + $0x510] sm:$0xff]
    %v1409 = vld [vmem:[#allocation5 + $0x518] sm:$0xff]
    %v1410 = vld [vmem:[#allocation5 + $0x520] sm:$0xff]
    %v1411 = vld [vmem:[#allocation5 + $0x528] sm:$0xff]
    %v1412 = vld [vmem:[#allocation5 + $0x530] sm:$0xff]
    %v1413 = vld [vmem:[#allocation5 + $0x538] sm:$0xff]
    %v1414 = vld [vmem:[#allocation5 + $0x540] sm:$0xff]
    %v1415 = vld [vmem:[#allocation5 + $0x548] sm:$0xff]
    %v1416 = vld [vmem:[#allocation5 + $0x550] sm:$0xff]
    %v1417 = vld [vmem:[#allocation5 + $0x558] sm:$0xff]
    %v1418 = vld [vmem:[#allocation5 + $0x560] sm:$0xff]
    %v1419 = vld [vmem:[#allocation5 + $0x568] sm:$0xff]
    %v1420 = vld [vmem:[#allocation5 + $0x570] sm:$0xff]
    %v1421 = vld [vmem:[#allocation5 + $0x578] sm:$0xff]
    %v1422 = vld [vmem:[#allocation5 + $0x580] sm:$0xff]
    %v1423 = vld [vmem:[#allocation5 + $0x588] sm:$0xff]
    %v1424 = vld [vmem:[#allocation5 + $0x590] sm:$0xff]
    %v1425 = vld [vmem:[#allocation5 + $0x598] sm:$0xff]
    %v1426 = vld [vmem:[#allocation5 + $0x5a0] sm:$0xff]
    %v1427 = vld [vmem:[#allocation5 + $0x5a8] sm:$0xff]
    %v1428 = vld [vmem:[#allocation5 + $0x5b0] sm:$0xff]
    %v1429 = vld [vmem:[#allocation5 + $0x5b8] sm:$0xff]
    %v1430 = vld [vmem:[#allocation5 + $0x5c0] sm:$0xff]
    %v1431 = vld [vmem:[#allocation5 + $0x5c8] sm:$0xff]
    %v1432 = vld [vmem:[#allocation5 + $0x5d0] sm:$0xff]
    %v1433 = vld [vmem:[#allocation5 + $0x5d8] sm:$0xff]
    %v1434 = vld [vmem:[#allocation5 + $0x5e0] sm:$0xff]
    %v1435 = vld [vmem:[#allocation5 + $0x5e8] sm:$0xff]
    %v1436 = vld [vmem:[#allocation5 + $0x5f0] sm:$0xff]
    %v1437 = vld [vmem:[#allocation5 + $0x5f8] sm:$0xff]
    %1438 = vmatprep.subr.mxu0 %v1247
    %1439 = vmatpush1.msra.mxu0 %v1246
    %1440 = vmatprep.subr.mxu0 %v1249
    %1441 = vmatpush1.msra.mxu0 %v1248
    %1442 = vmatprep.subr.mxu0 %v1251
    %1443 = vmatpush1.msra.mxu0 %v1250
    %1444 = vmatprep.subr.mxu0 %v1253
    %1445 = vmatpush1.msra.mxu0 %v1252
    %1446 = vmatprep.subr.mxu0 %v1255
    %1447 = vmatpush1.msra.mxu0 %v1254
    %1448 = vmatprep.subr.mxu0 %v1257
    %1449 = vmatpush1.msra.mxu0 %v1256
    %1450 = vmatprep.subr.mxu0 %v1259
    %1451 = vmatpush1.msra.mxu0 %v1258
    %1452 = vmatprep.subr.mxu0 %v1261
    %1453 = vmatpush1.msra.mxu0 %v1260
    %1454 = vmatprep.subr.mxu0 %v1263
    %1455 = vmatpush1.msra.mxu0 %v1262
    %1456 = vmatprep.subr.mxu0 %v1265
    %1457 = vmatpush1.msra.mxu0 %v1264
    %1458 = vmatprep.subr.mxu0 %v1267
    %1459 = vmatpush1.msra.mxu0 %v1266
    %1460 = vmatprep.subr.mxu0 %v1269
    %1461 = vmatpush1.msra.mxu0 %v1268
    %1462 = vmatprep.subr.mxu0 %v1271
    %1463 = vmatpush1.msra.mxu0 %v1270
    %1464 = vmatprep.subr.mxu0 %v1273
    %1465 = vmatpush1.msra.mxu0 %v1272
    %1466 = vmatprep.subr.mxu0 %v1275
    %1467 = vmatpush1.msra.mxu0 %v1274
    %1468 = vmatprep.subr.mxu0 %v1277
    %1469 = vmatpush1.msra.mxu0 %v1276
    %1470 = vmatprep.subr.mxu0 %v1279
    %1471 = vmatpush1.msra.mxu0 %v1278
    %1472 = vmatprep.subr.mxu0 %v1281
    %1473 = vmatpush1.msra.mxu0 %v1280
    %1474 = vmatprep.subr.mxu0 %v1283
    %1475 = vmatpush1.msra.mxu0 %v1282
    %1476 = vmatprep.subr.mxu0 %v1285
    %1477 = vmatpush1.msra.mxu0 %v1284
    %1478 = vmatprep.subr.mxu0 %v1287
    %1479 = vmatpush1.msra.mxu0 %v1286
    %1480 = vmatprep.subr.mxu0 %v1289
    %1481 = vmatpush1.msra.mxu0 %v1288
    %1482 = vmatprep.subr.mxu0 %v1291
    %1483 = vmatpush1.msra.mxu0 %v1290
    %1484 = vmatprep.subr.mxu0 %v1293
    %1485 = vmatpush1.msra.mxu0 %v1292
    %1486 = vmatprep.subr.mxu0 %v1295
    %1487 = vmatpush1.msra.mxu0 %v1294
    %1488 = vmatprep.subr.mxu0 %v1297
    %1489 = vmatpush1.msra.mxu0 %v1296
    %1490 = vmatprep.subr.mxu0 %v1299
    %1491 = vmatpush1.msra.mxu0 %v1298
    %1492 = vmatprep.subr.mxu0 %v1301
    %1493 = vmatpush1.msra.mxu0 %v1300
    %1494 = vmatprep.subr.mxu0 %v1303
    %1495 = vmatpush1.msra.mxu0 %v1302
    %1496 = vmatprep.subr.mxu0 %v1305
    %1497 = vmatpush1.msra.mxu0 %v1304
    %1498 = vmatprep.subr.mxu0 %v1307
    %1499 = vmatpush1.msra.mxu0 %v1306
    %1500 = vmatprep.subr.mxu0 %v1309
    %1501 = vmatpush1.msra.mxu0 %v1308
    %1502 = vmatprep.mubr.f32.mxu0 %v1153
    %1503 = vmatmul.mubr.f32.gmra.mrb[0].mxu0 %v1151
    %v1504 = vpop.f32.mrb[0].mxu0
    %v1505 = vadd.f32 0.0, %v1504
    %v1506 = vpop.f32.mrb[0].mxu0
    %v1507 = vadd.f32 0.0, %v1506
    %1508 = vmatprep.mubr.f32.mxu0 %v1159
    %1509 = vmatmul.mubr.f32.gmra.mrb[0].mxu0 %v1157
    %v1510 = vpop.f32.mrb[0].mxu0
    %v1511 = vadd.f32 0.0, %v1510
    %v1512 = vpop.f32.mrb[0].mxu0
    %v1513 = vadd.f32 0.0, %v1512
    %1514 = vdwg.mxu0
    %1515 = vmatprep.subr.mxu0 %v1311
    %1516 = vmatpush1.msra.mxu0 %v1310
    %1517 = vmatprep.subr.mxu0 %v1313
    %1518 = vmatpush1.msra.mxu0 %v1312
    %1519 = vmatprep.subr.mxu0 %v1315
    %1520 = vmatpush1.msra.mxu0 %v1314
    %1521 = vmatprep.subr.mxu0 %v1317
    %1522 = vmatpush1.msra.mxu0 %v1316
    %1523 = vmatprep.subr.mxu0 %v1319
    %1524 = vmatpush1.msra.mxu0 %v1318
    %1525 = vmatprep.subr.mxu0 %v1321
    %1526 = vmatpush1.msra.mxu0 %v1320
    %1527 = vmatprep.subr.mxu0 %v1323
    %1528 = vmatpush1.msra.mxu0 %v1322
    %1529 = vmatprep.subr.mxu0 %v1325
    %1530 = vmatpush1.msra.mxu0 %v1324
    %1531 = vmatprep.subr.mxu0 %v1327
    %1532 = vmatpush1.msra.mxu0 %v1326
    %1533 = vmatprep.subr.mxu0 %v1329
    %1534 = vmatpush1.msra.mxu0 %v1328
    %1535 = vmatprep.subr.mxu0 %v1331
    %1536 = vmatpush1.msra.mxu0 %v1330
    %1537 = vmatprep.subr.mxu0 %v1333
    %1538 = vmatpush1.msra.mxu0 %v1332
    %1539 = vmatprep.subr.mxu0 %v1335
    %1540 = vmatpush1.msra.mxu0 %v1334
    %1541 = vmatprep.subr.mxu0 %v1337
    %1542 = vmatpush1.msra.mxu0 %v1336
    %1543 = vmatprep.subr.mxu0 %v1339
    %1544 = vmatpush1.msra.mxu0 %v1338
    %1545 = vmatprep.subr.mxu0 %v1341
    %1546 = vmatpush1.msra.mxu0 %v1340
    %1547 = vmatprep.subr.mxu0 %v1343
    %1548 = vmatpush1.msra.mxu0 %v1342
    %1549 = vmatprep.subr.mxu0 %v1345
    %1550 = vmatpush1.msra.mxu0 %v1344
    %1551 = vmatprep.subr.mxu0 %v1347
    %1552 = vmatpush1.msra.mxu0 %v1346
    %1553 = vmatprep.subr.mxu0 %v1349
    %1554 = vmatpush1.msra.mxu0 %v1348
    %1555 = vmatprep.subr.mxu0 %v1351
    %1556 = vmatpush1.msra.mxu0 %v1350
    %1557 = vmatprep.subr.mxu0 %v1353
    %1558 = vmatpush1.msra.mxu0 %v1352
    %1559 = vmatprep.subr.mxu0 %v1355
    %1560 = vmatpush1.msra.mxu0 %v1354
    %1561 = vmatprep.subr.mxu0 %v1357
    %1562 = vmatpush1.msra.mxu0 %v1356
    %1563 = vmatprep.subr.mxu0 %v1359
    %1564 = vmatpush1.msra.mxu0 %v1358
    %1565 = vmatprep.subr.mxu0 %v1361
    %1566 = vmatpush1.msra.mxu0 %v1360
    %1567 = vmatprep.subr.mxu0 %v1363
    %1568 = vmatpush1.msra.mxu0 %v1362
    %1569 = vmatprep.subr.mxu0 %v1365
    %1570 = vmatpush1.msra.mxu0 %v1364
    %1571 = vmatprep.subr.mxu0 %v1367
    %1572 = vmatpush1.msra.mxu0 %v1366
    %1573 = vmatprep.subr.mxu0 %v1369
    %1574 = vmatpush1.msra.mxu0 %v1368
    %1575 = vmatprep.subr.mxu0 %v1371
    %1576 = vmatpush1.msra.mxu0 %v1370
    %1577 = vmatprep.subr.mxu0 %v1373
    %1578 = vmatpush1.msra.mxu0 %v1372
    %1579 = vmatprep.mubr.f32.mxu0 %v1072
    %1580 = vmatmul.mubr.f32.gmra.mrb[0].mxu0 %v1071
    %v1581 = vpop.f32.mrb[0].mxu0
    %v1582 = vadd.f32 %v1505, %v1581
    %v1583 = vpop.f32.mrb[0].mxu0
    %v1584 = vadd.f32 %v1507, %v1583
    %1585 = vmatprep.mubr.f32.mxu0 %v1074
    %1586 = vmatmul.mubr.f32.gmra.mrb[0].mxu0 %v1073
    %v1587 = vpop.f32.mrb[0].mxu0
    %v1588 = vadd.f32 %v1511, %v1587
    %v1589 = vpop.f32.mrb[0].mxu0
    %v1590 = vadd.f32 %v1513, %v1589
    %1591 = vdwg.mxu0
    %1592 = vmatprep.subr.mxu0 %v1375
    %1593 = vmatpush1.msra.mxu0 %v1374
    %1594 = vmatprep.subr.mxu0 %v1377
    %1595 = vmatpush1.msra.mxu0 %v1376
    %1596 = vmatprep.subr.mxu0 %v1379
    %1597 = vmatpush1.msra.mxu0 %v1378
    %1598 = vmatprep.subr.mxu0 %v1381
    %1599 = vmatpush1.msra.mxu0 %v1380
    %1600 = vmatprep.subr.mxu0 %v1383
    %1601 = vmatpush1.msra.mxu0 %v1382
    %1602 = vmatprep.subr.mxu0 %v1385
    %1603 = vmatpush1.msra.mxu0 %v1384
    %1604 = vmatprep.subr.mxu0 %v1387
    %1605 = vmatpush1.msra.mxu0 %v1386
    %1606 = vmatprep.subr.mxu0 %v1389
    %1607 = vmatpush1.msra.mxu0 %v1388
    %1608 = vmatprep.subr.mxu0 %v1391
    %1609 = vmatpush1.msra.mxu0 %v1390
    %1610 = vmatprep.subr.mxu0 %v1393
    %1611 = vmatpush1.msra.mxu0 %v1392
    %1612 = vmatprep.subr.mxu0 %v1395
    %1613 = vmatpush1.msra.mxu0 %v1394
    %1614 = vmatprep.subr.mxu0 %v1397
    %1615 = vmatpush1.msra.mxu0 %v1396
    %1616 = vmatprep.subr.mxu0 %v1399
    %1617 = vmatpush1.msra.mxu0 %v1398
    %1618 = vmatprep.subr.mxu0 %v1401
    %1619 = vmatpush1.msra.mxu0 %v1400
    %1620 = vmatprep.subr.mxu0 %v1403
    %1621 = vmatpush1.msra.mxu0 %v1402
    %1622 = vmatprep.subr.mxu0 %v1405
    %1623 = vmatpush1.msra.mxu0 %v1404
    %1624 = vmatprep.subr.mxu0 %v1407
    %1625 = vmatpush1.msra.mxu0 %v1406
    %1626 = vmatprep.subr.mxu0 %v1409
    %1627 = vmatpush1.msra.mxu0 %v1408
    %1628 = vmatprep.subr.mxu0 %v1411
    %1629 = vmatpush1.msra.mxu0 %v1410
    %1630 = vmatprep.subr.mxu0 %v1413
    %1631 = vmatpush1.msra.mxu0 %v1412
    %1632 = vmatprep.subr.mxu0 %v1415
    %1633 = vmatpush1.msra.mxu0 %v1414
    %1634 = vmatprep.subr.mxu0 %v1417
    %1635 = vmatpush1.msra.mxu0 %v1416
    %1636 = vmatprep.subr.mxu0 %v1419
    %1637 = vmatpush1.msra.mxu0 %v1418
    %1638 = vmatprep.subr.mxu0 %v1421
    %1639 = vmatpush1.msra.mxu0 %v1420
    %1640 = vmatprep.subr.mxu0 %v1423
    %1641 = vmatpush1.msra.mxu0 %v1422
    %1642 = vmatprep.subr.mxu0 %v1425
    %1643 = vmatpush1.msra.mxu0 %v1424
    %1644 = vmatprep.subr.mxu0 %v1427
    %1645 = vmatpush1.msra.mxu0 %v1426
    %1646 = vmatprep.subr.mxu0 %v1429
    %1647 = vmatpush1.msra.mxu0 %v1428
    %1648 = vmatprep.subr.mxu0 %v1431
    %1649 = vmatpush1.msra.mxu0 %v1430
    %1650 = vmatprep.subr.mxu0 %v1433
    %1651 = vmatpush1.msra.mxu0 %v1432
    %1652 = vmatprep.subr.mxu0 %v1435
    %1653 = vmatpush1.msra.mxu0 %v1434
    %1654 = vmatprep.subr.mxu0 %v1437
    %1655 = vmatpush1.msra.mxu0 %v1436
    %1656 = vmatprep.mubr.f32.mxu0 %v1238
    %1657 = vmatmul.mubr.f32.gmra.mrb[0].mxu0 %v1236
    %v1658 = vpop.f32.mrb[0].mxu0
    %v1659 = vadd.f32 %v1582, %v1658
    %v1660 = vpop.f32.mrb[0].mxu0
    %v1661 = vadd.f32 %v1584, %v1660
    %1662 = vmatprep.mubr.f32.mxu0 %v1244
    %1663 = vmatmul.mubr.f32.gmra.mrb[0].mxu0 %v1242
    %v1664 = vpop.f32.mrb[0].mxu0
    %v1665 = vadd.f32 %v1588, %v1664
    %v1666 = vpop.f32.mrb[0].mxu0
    %v1667 = vadd.f32 %v1590, %v1666
    %1668 = vdwg.mxu0
    %v1669 = vadd.f32 %v1659, %v1665
    %v1670 = vrot.slane %v1669, 4
    %v1671 = vadd.f32 %v1669, %v1670
    %v1672 = vrot.slane %v1671, 2
    %v1673 = vadd.f32 %v1671, %v1672
    %v1674 = vrot.slane %v1673, 1
    %v1675 = vadd.f32 %v1673, %v1674
    %v1676 = vadd.f32 %v1661, %v1667
    %v1677 = vrot.slane %v1676, 4
    %v1678 = vadd.f32 %v1676, %v1677
    %v1679 = vrot.slane %v1678, 2
    %v1680 = vadd.f32 %v1678, %v1679
    %v1681 = vrot.slane %v1680, 1
    %v1682 = vadd.f32 %v1680, %v1681
    %v1683 = vmul.f32 %v1659, %v1659
    %v1684 = vmul.f32 %v1661, %v1661
    %v1685 = vmul.f32 %v1665, %v1665
    %v1686 = vmul.f32 %v1667, %v1667
    %v1687 = vadd.f32 %v1683, %v1685
    %v1688 = vrot.slane %v1687, 4
    %v1689 = vadd.f32 %v1687, %v1688
    %v1690 = vrot.slane %v1689, 2
    %v1691 = vadd.f32 %v1689, %v1690
    %v1692 = vrot.slane %v1691, 1
    %v1693 = vadd.f32 %v1691, %v1692
    %v1694 = vadd.f32 %v1684, %v1686
    %v1695 = vrot.slane %v1694, 4
    %v1696 = vadd.f32 %v1694, %v1695
    %v1697 = vrot.slane %v1696, 2
    %v1698 = vadd.f32 %v1696, %v1697
    %v1699 = vrot.slane %v1698, 1
    %v1700 = vadd.f32 %v1698, %v1699
    %1701 = vmatprep.subr.mxu0 0.0
    %1702 = vmatpush1.msra.mxu0 %v707
    %1703 = vmatprep.subr.mxu0 0.0
    %1704 = vmatpush1.msra.mxu0 %v708
    %1705 = vmatprep.subr.mxu0 0.0
    %1706 = vmatpush1.msra.mxu0 %v709
    %1707 = vmatprep.subr.mxu0 0.0
    %1708 = vmatpush1.msra.mxu0 %v710
    %1709 = vmatprep.subr.mxu0 0.0
    %1710 = vmatpush1.msra.mxu0 %v711
    %1711 = vmatprep.subr.mxu0 0.0
    %1712 = vmatpush1.msra.mxu0 %v712
    %1713 = vmatprep.subr.mxu0 0.0
    %1714 = vmatpush1.msra.mxu0 %v713
    %1715 = vmatprep.subr.mxu0 0.0
    %1716 = vmatpush1.msra.mxu0 %v714
    %1717 = vmatprep.subr.mxu0 0.0
    %1718 = vmatpush1.msra.mxu0 %v715
    %1719 = vmatprep.subr.mxu0 0.0
    %1720 = vmatpush1.msra.mxu0 %v716
    %1721 = vmatprep.subr.mxu0 0.0
    %1722 = vmatpush1.msra.mxu0 %v717
    %1723 = vmatprep.subr.mxu0 0.0
    %1724 = vmatpush1.msra.mxu0 %v718
    %1725 = vmatprep.subr.mxu0 0.0
    %1726 = vmatpush1.msra.mxu0 %v719
    %1727 = vmatprep.subr.mxu0 0.0
    %1728 = vmatpush1.msra.mxu0 %v720
    %1729 = vmatprep.subr.mxu0 0.0
    %1730 = vmatpush1.msra.mxu0 %v721
    %1731 = vmatprep.subr.mxu0 0.0
    %1732 = vmatpush1.msra.mxu0 %v722
    %1733 = vmatprep.subr.mxu0 0.0
    %1734 = vmatpush1.msra.mxu0 %v723
    %1735 = vmatprep.subr.mxu0 0.0
    %1736 = vmatpush1.msra.mxu0 %v724
    %1737 = vmatprep.subr.mxu0 0.0
    %1738 = vmatpush1.msra.mxu0 %v725
    %1739 = vmatprep.subr.mxu0 0.0
    %1740 = vmatpush1.msra.mxu0 %v726
    %1741 = vmatprep.subr.mxu0 0.0
    %1742 = vmatpush1.msra.mxu0 %v727
    %1743 = vmatprep.subr.mxu0 0.0
    %1744 = vmatpush1.msra.mxu0 %v728
    %1745 = vmatprep.subr.mxu0 0.0
    %1746 = vmatpush1.msra.mxu0 %v729
    %1747 = vmatprep.subr.mxu0 0.0
    %1748 = vmatpush1.msra.mxu0 %v730
    %1749 = vmatprep.subr.mxu0 0.0
    %1750 = vmatpush1.msra.mxu0 %v731
    %1751 = vmatprep.subr.mxu0 0.0
    %1752 = vmatpush1.msra.mxu0 %v732
    %1753 = vmatprep.subr.mxu0 0.0
    %1754 = vmatpush1.msra.mxu0 %v733
    %1755 = vmatprep.subr.mxu0 0.0
    %1756 = vmatpush1.msra.mxu0 %v734
    %1757 = vmatprep.subr.mxu0 0.0
    %1758 = vmatpush1.msra.mxu0 %v735
    %1759 = vmatprep.subr.mxu0 0.0
    %1760 = vmatpush1.msra.mxu0 %v736
    %1761 = vmatprep.subr.mxu0 0.0
    %1762 = vmatpush1.msra.mxu0 %v737
    %1763 = vmatprep.subr.mxu0 0.0
    %1764 = vmatpush1.msra.mxu0 %v738
    %1765 = vmatprep.mubr.f32.mxu0 %v1682
    %1766 = vmatmul.mubr.f32.gmra.mrb[0].mxu0 %v1675
    %v1767 = vpop.f32.mrb[0].mxu0
    %v1768 = vadd.f32 0.0, %v1767
    %v1769 = vpop.f32.mrb[0].mxu0
    %1770 = vdwg.mxu0
    %1771 = vmatprep.subr.mxu0 0.0
    %1772 = vmatpush1.msra.mxu0 %v707
    %1773 = vmatprep.subr.mxu0 0.0
    %1774 = vmatpush1.msra.mxu0 %v708
    %1775 = vmatprep.subr.mxu0 0.0
    %1776 = vmatpush1.msra.mxu0 %v709
    %1777 = vmatprep.subr.mxu0 0.0
    %1778 = vmatpush1.msra.mxu0 %v710
    %1779 = vmatprep.subr.mxu0 0.0
    %1780 = vmatpush1.msra.mxu0 %v711
    %1781 = vmatprep.subr.mxu0 0.0
    %1782 = vmatpush1.msra.mxu0 %v712
    %1783 = vmatprep.subr.mxu0 0.0
    %1784 = vmatpush1.msra.mxu0 %v713
    %1785 = vmatprep.subr.mxu0 0.0
    %1786 = vmatpush1.msra.mxu0 %v714
    %1787 = vmatprep.subr.mxu0 0.0
    %1788 = vmatpush1.msra.mxu0 %v715
    %1789 = vmatprep.subr.mxu0 0.0
    %1790 = vmatpush1.msra.mxu0 %v716
    %1791 = vmatprep.subr.mxu0 0.0
    %1792 = vmatpush1.msra.mxu0 %v717
    %1793 = vmatprep.subr.mxu0 0.0
    %1794 = vmatpush1.msra.mxu0 %v718
    %1795 = vmatprep.subr.mxu0 0.0
    %1796 = vmatpush1.msra.mxu0 %v719
    %1797 = vmatprep.subr.mxu0 0.0
    %1798 = vmatpush1.msra.mxu0 %v720
    %1799 = vmatprep.subr.mxu0 0.0
    %1800 = vmatpush1.msra.mxu0 %v721
    %1801 = vmatprep.subr.mxu0 0.0
    %1802 = vmatpush1.msra.mxu0 %v722
    %1803 = vmatprep.subr.mxu0 0.0
    %1804 = vmatpush1.msra.mxu0 %v723
    %1805 = vmatprep.subr.mxu0 0.0
    %1806 = vmatpush1.msra.mxu0 %v724
    %1807 = vmatprep.subr.mxu0 0.0
    %1808 = vmatpush1.msra.mxu0 %v725
    %1809 = vmatprep.subr.mxu0 0.0
    %1810 = vmatpush1.msra.mxu0 %v726
    %1811 = vmatprep.subr.mxu0 0.0
    %1812 = vmatpush1.msra.mxu0 %v727
    %1813 = vmatprep.subr.mxu0 0.0
    %1814 = vmatpush1.msra.mxu0 %v728
    %1815 = vmatprep.subr.mxu0 0.0
    %1816 = vmatpush1.msra.mxu0 %v729
    %1817 = vmatprep.subr.mxu0 0.0
    %1818 = vmatpush1.msra.mxu0 %v730
    %1819 = vmatprep.subr.mxu0 0.0
    %1820 = vmatpush1.msra.mxu0 %v731
    %1821 = vmatprep.subr.mxu0 0.0
    %1822 = vmatpush1.msra.mxu0 %v732
    %1823 = vmatprep.subr.mxu0 0.0
    %1824 = vmatpush1.msra.mxu0 %v733
    %1825 = vmatprep.subr.mxu0 0.0
    %1826 = vmatpush1.msra.mxu0 %v734
    %1827 = vmatprep.subr.mxu0 0.0
    %1828 = vmatpush1.msra.mxu0 %v735
    %1829 = vmatprep.subr.mxu0 0.0
    %1830 = vmatpush1.msra.mxu0 %v736
    %1831 = vmatprep.subr.mxu0 0.0
    %1832 = vmatpush1.msra.mxu0 %v737
    %1833 = vmatprep.subr.mxu0 0.0
    %1834 = vmatpush1.msra.mxu0 %v738
    %1835 = vmatprep.mubr.f32.mxu0 %v1700
    %1836 = vmatmul.mubr.f32.gmra.mrb[0].mxu0 %v1693
    %v1837 = vpop.f32.mrb[0].mxu0
    %v1838 = vadd.f32 0.0, %v1837
    %v1839 = vpop.f32.mrb[0].mxu0
    %1840 = vdwg.mxu0
    %v1841 = vmul.f32 %v1768, 0.0009765625
    %v1842 = vmul.f32 %v1838, 0.0009765625
    %v1843 = vmul.f32 %v1841, %v1841
    %v1844 = vsub.f32 %v1842, %v1843
    %v1845 = vld [vmem:[%s12] sm:$0x1]
    %v1846 = vadd.f32 %v1844, 1e-05
    %v1847 = vrsqrt.pop %v1846
    %v1848 = vmul.f32 %v1845, %v1847
    %v1849 = vld [vmem:[%s13] sm:$0x1]
    %v1850 = vmul.f32 %v1841, %v1848
    %v1851 = vsub.f32 %v1849, %v1850
    %v1853 = vsel %vm893, %v1848, 0
    %1855 = vmatprep.subr.mxu0 %v900
    %1856 = vmatpush1.msra.mxu0 %v898
    %1857 = vmatprep.subr.mxu0 0.0
    %1858 = vmatpush1.msra.mxu0 0.0
    %1859 = vmatprep.subr.mxu0 0.0
    %1860 = vmatpush1.msra.mxu0 0.0
    %1861 = vmatprep.subr.mxu0 0.0
    %1862 = vmatpush1.msra.mxu0 0.0
    %1863 = vmatprep.subr.mxu0 0.0
    %1864 = vmatpush1.msra.mxu0 0.0
    %1865 = vmatprep.subr.mxu0 0.0
    %1866 = vmatpush1.msra.mxu0 0.0
    %1867 = vmatprep.subr.mxu0 0.0
    %1868 = vmatpush1.msra.mxu0 0.0
    %1869 = vmatprep.subr.mxu0 0.0
    %1870 = vmatpush1.msra.mxu0 0.0
    %1871 = vmatprep.subr.mxu0 0.0
    %1872 = vmatpush1.msra.mxu0 0.0
    %1873 = vmatprep.subr.mxu0 0.0
    %1874 = vmatpush1.msra.mxu0 0.0
    %1875 = vmatprep.subr.mxu0 0.0
    %1876 = vmatpush1.msra.mxu0 0.0
    %1877 = vmatprep.subr.mxu0 0.0
    %1878 = vmatpush1.msra.mxu0 0.0
    %1879 = vmatprep.subr.mxu0 0.0
    %1880 = vmatpush1.msra.mxu0 0.0
    %1881 = vmatprep.subr.mxu0 0.0
    %1882 = vmatpush1.msra.mxu0 0.0
    %1883 = vmatprep.subr.mxu0 0.0
    %1884 = vmatpush1.msra.mxu0 0.0
    %1885 = vmatprep.subr.mxu0 0.0
    %1886 = vmatpush1.msra.mxu0 0.0
    %1887 = vmatprep.subr.mxu0 0.0
    %1888 = vmatpush1.msra.mxu0 0.0
    %1889 = vmatprep.subr.mxu0 0.0
    %1890 = vmatpush1.msra.mxu0 0.0
    %1891 = vmatprep.subr.mxu0 0.0
    %1892 = vmatpush1.msra.mxu0 0.0
    %1893 = vmatprep.subr.mxu0 0.0
    %1894 = vmatpush1.msra.mxu0 0.0
    %1895 = vmatprep.subr.mxu0 0.0
    %1896 = vmatpush1.msra.mxu0 0.0
    %1897 = vmatprep.subr.mxu0 0.0
    %1898 = vmatpush1.msra.mxu0 0.0
    %1899 = vmatprep.subr.mxu0 0.0
    %1900 = vmatpush1.msra.mxu0 0.0
    %1901 = vmatprep.subr.mxu0 0.0
    %1902 = vmatpush1.msra.mxu0 0.0
    %1903 = vmatprep.subr.mxu0 0.0
    %1904 = vmatpush1.msra.mxu0 0.0
    %1905 = vmatprep.subr.mxu0 0.0
    %1906 = vmatpush1.msra.mxu0 0.0
    %1907 = vmatprep.subr.mxu0 0.0
    %1908 = vmatpush1.msra.mxu0 0.0
    %1909 = vmatprep.subr.mxu0 0.0
    %1910 = vmatpush1.msra.mxu0 0.0
    %1911 = vmatprep.subr.mxu0 0.0
    %1912 = vmatpush1.msra.mxu0 0.0
    %1913 = vmatprep.subr.mxu0 0.0
    %1914 = vmatpush1.msra.mxu0 0.0
    %1915 = vmatprep.subr.mxu0 0.0
    %1916 = vmatpush1.msra.mxu0 0.0
    %1917 = vmatprep.subr.mxu0 0.0
    %1918 = vmatpush1.msra.mxu0 0.0
    %1919 = vmatprep.mubr.f32.mxu0 0.0
    %1920 = vmatmul.mubr.f32.gmra.mrb[0].mxu0 %v1853
    %v1921 = vpop.f32.mrb[0].mxu0
    %v1922 = vadd.f32 0.0, %v1921
    %v1923 = vpop.f32.mrb[0].mxu0
    %v1924 = vadd.f32 0.0, %v1923
    %1925 = vdwg.mxu0
    %v1927 = vsel %vm893, %v1851, 0
    %1929 = vmatprep.subr.mxu0 %v900
    %1930 = vmatpush1.msra.mxu0 %v898
    %1931 = vmatprep.subr.mxu0 0.0
    %1932 = vmatpush1.msra.mxu0 0.0
    %1933 = vmatprep.subr.mxu0 0.0
    %1934 = vmatpush1.msra.mxu0 0.0
    %1935 = vmatprep.subr.mxu0 0.0
    %1936 = vmatpush1.msra.mxu0 0.0
    %1937 = vmatprep.subr.mxu0 0.0
    %1938 = vmatpush1.msra.mxu0 0.0
    %1939 = vmatprep.subr.mxu0 0.0
    %1940 = vmatpush1.msra.mxu0 0.0
    %1941 = vmatprep.subr.mxu0 0.0
    %1942 = vmatpush1.msra.mxu0 0.0
    %1943 = vmatprep.subr.mxu0 0.0
    %1944 = vmatpush1.msra.mxu0 0.0
    %1945 = vmatprep.subr.mxu0 0.0
    %1946 = vmatpush1.msra.mxu0 0.0
    %1947 = vmatprep.subr.mxu0 0.0
    %1948 = vmatpush1.msra.mxu0 0.0
    %1949 = vmatprep.subr.mxu0 0.0
    %1950 = vmatpush1.msra.mxu0 0.0
    %1951 = vmatprep.subr.mxu0 0.0
    %1952 = vmatpush1.msra.mxu0 0.0
    %1953 = vmatprep.subr.mxu0 0.0
    %1954 = vmatpush1.msra.mxu0 0.0
    %1955 = vmatprep.subr.mxu0 0.0
    %1956 = vmatpush1.msra.mxu0 0.0
    %1957 = vmatprep.subr.mxu0 0.0
    %1958 = vmatpush1.msra.mxu0 0.0
    %1959 = vmatprep.subr.mxu0 0.0
    %1960 = vmatpush1.msra.mxu0 0.0
    %1961 = vmatprep.subr.mxu0 0.0
    %1962 = vmatpush1.msra.mxu0 0.0
    %1963 = vmatprep.subr.mxu0 0.0
    %1964 = vmatpush1.msra.mxu0 0.0
    %1965 = vmatprep.subr.mxu0 0.0
    %1966 = vmatpush1.msra.mxu0 0.0
    %1967 = vmatprep.subr.mxu0 0.0
    %1968 = vmatpush1.msra.mxu0 0.0
    %1969 = vmatprep.subr.mxu0 0.0
    %1970 = vmatpush1.msra.mxu0 0.0
    %1971 = vmatprep.subr.mxu0 0.0
    %1972 = vmatpush1.msra.mxu0 0.0
    %1973 = vmatprep.subr.mxu0 0.0
    %1974 = vmatpush1.msra.mxu0 0.0
    %1975 = vmatprep.subr.mxu0 0.0
    %1976 = vmatpush1.msra.mxu0 0.0
    %1977 = vmatprep.subr.mxu0 0.0
    %1978 = vmatpush1.msra.mxu0 0.0
    %1979 = vmatprep.subr.mxu0 0.0
    %1980 = vmatpush1.msra.mxu0 0.0
    %1981 = vmatprep.subr.mxu0 0.0
    %1982 = vmatpush1.msra.mxu0 0.0
    %1983 = vmatprep.subr.mxu0 0.0
    %1984 = vmatpush1.msra.mxu0 0.0
    %1985 = vmatprep.subr.mxu0 0.0
    %1986 = vmatpush1.msra.mxu0 0.0
    %1987 = vmatprep.subr.mxu0 0.0
    %1988 = vmatpush1.msra.mxu0 0.0
    %1989 = vmatprep.subr.mxu0 0.0
    %1990 = vmatpush1.msra.mxu0 0.0
    %1991 = vmatprep.subr.mxu0 0.0
    %1992 = vmatpush1.msra.mxu0 0.0
    %1993 = vmatprep.mubr.f32.mxu0 0.0
    %1994 = vmatmul.mubr.f32.gmra.mrb[0].mxu0 %v1927
    %v1995 = vpop.f32.mrb[0].mxu0
    %v1996 = vadd.f32 0.0, %v1995
    %v1997 = vpop.f32.mrb[0].mxu0
    %v1998 = vadd.f32 0.0, %v1997
    %1999 = vdwg.mxu0
    %v2000 = vlaneseq
    %v2001 = vshrl.u32 %v2000, 7
    %v2002 = vsub.s32 0, %v2001
    %v2003 = vrot.slane %v1922, %v2002
    %v2004 = vlaneseq
    %v2005 = vshrl.u32 %v2004, 7
    %v2006 = vsub.s32 0, %v2005
    %v2007 = vrot.slane %v1924, %v2006
    %v2008 = vmul.f32 %v1659, %v2003
    %v2009 = vmul.f32 %v1661, %v2007
    %v2010 = vmul.f32 %v1665, %v2003
    %v2011 = vmul.f32 %v1667, %v2007
    %v2012 = vlaneseq
    %v2013 = vshrl.u32 %v2012, 7
    %v2014 = vsub.s32 0, %v2013
    %v2015 = vrot.slane %v1996, %v2014
    %v2016 = vlaneseq
    %v2017 = vshrl.u32 %v2016, 7
    %v2018 = vsub.s32 0, %v2017
    %v2019 = vrot.slane %v1998, %v2018
    %v2020 = vadd.f32 %v2008, %v2015
    %v2021 = vadd.f32 %v2009, %v2019
    %v2022 = vadd.f32 %v2010, %v2015
    %v2023 = vadd.f32 %v2011, %v2019
    %v2024 = vmax.f32 %v2020, 0.0
    %v2025 = vmax.f32 %v2021, 0.0
    %v2026 = vmax.f32 %v2022, 0.0
    %v2027 = vmax.f32 %v2023, 0.0
    %v2028 = vld [vmem:[#allocation7] sm:$0xff]
    %v2029 = vld [vmem:[#allocation7 + $0x8] sm:$0xff]
    %v2030 = vld [vmem:[#allocation7 + $0x10] sm:$0xff]
    %v2031 = vld [vmem:[#allocation7 + $0x18] sm:$0xff]
    %v2032 = vld [vmem:[#allocation7 + $0x20] sm:$0xff]
    %v2033 = vld [vmem:[#allocation7 + $0x28] sm:$0xff]
    %v2034 = vld [vmem:[#allocation7 + $0x30] sm:$0xff]
    %v2035 = vld [vmem:[#allocation7 + $0x38] sm:$0xff]
    %v2036 = vld [vmem:[#allocation7 + $0x40] sm:$0xff]
    %v2037 = vld [vmem:[#allocation7 + $0x48] sm:$0xff]
    %v2038 = vld [vmem:[#allocation7 + $0x50] sm:$0xff]
    %v2039 = vld [vmem:[#allocation7 + $0x58] sm:$0xff]
    %v2040 = vld [vmem:[#allocation7 + $0x60] sm:$0xff]
    %v2041 = vld [vmem:[#allocation7 + $0x68] sm:$0xff]
    %v2042 = vld [vmem:[#allocation7 + $0x70] sm:$0xff]
    %v2043 = vld [vmem:[#allocation7 + $0x78] sm:$0xff]
    %v2044 = vld [vmem:[#allocation7 + $0x80] sm:$0xff]
    %v2045 = vld [vmem:[#allocation7 + $0x88] sm:$0xff]
    %v2046 = vld [vmem:[#allocation7 + $0x90] sm:$0xff]
    %v2047 = vld [vmem:[#allocation7 + $0x98] sm:$0xff]
    %v2048 = vld [vmem:[#allocation7 + $0xa0] sm:$0xff]
    %v2049 = vld [vmem:[#allocation7 + $0xa8] sm:$0xff]
    %v2050 = vld [vmem:[#allocation7 + $0xb0] sm:$0xff]
    %v2051 = vld [vmem:[#allocation7 + $0xb8] sm:$0xff]
    %v2052 = vld [vmem:[#allocation7 + $0xc0] sm:$0xff]
    %v2053 = vld [vmem:[#allocation7 + $0xc8] sm:$0xff]
    %v2054 = vld [vmem:[#allocation7 + $0xd0] sm:$0xff]
    %v2055 = vld [vmem:[#allocation7 + $0xd8] sm:$0xff]
    %v2056 = vld [vmem:[#allocation7 + $0xe0] sm:$0xff]
    %v2057 = vld [vmem:[#allocation7 + $0xe8] sm:$0xff]
    %v2058 = vld [vmem:[#allocation7 + $0xf0] sm:$0xff]
    %v2059 = vld [vmem:[#allocation7 + $0xf8] sm:$0xff]
    %v2060 = vld [vmem:[#allocation7 + $0x100] sm:$0xff]
    %v2061 = vld [vmem:[#allocation7 + $0x108] sm:$0xff]
    %v2062 = vld [vmem:[#allocation7 + $0x110] sm:$0xff]
    %v2063 = vld [vmem:[#allocation7 + $0x118] sm:$0xff]
    %v2064 = vld [vmem:[#allocation7 + $0x120] sm:$0xff]
    %v2065 = vld [vmem:[#allocation7 + $0x128] sm:$0xff]
    %v2066 = vld [vmem:[#allocation7 + $0x130] sm:$0xff]
    %v2067 = vld [vmem:[#allocation7 + $0x138] sm:$0xff]
    %v2068 = vld [vmem:[#allocation7 + $0x140] sm:$0xff]
    %v2069 = vld [vmem:[#allocation7 + $0x148] sm:$0xff]
    %v2070 = vld [vmem:[#allocation7 + $0x150] sm:$0xff]
    %v2071 = vld [vmem:[#allocation7 + $0x158] sm:$0xff]
    %v2072 = vld [vmem:[#allocation7 + $0x160] sm:$0xff]
    %v2073 = vld [vmem:[#allocation7 + $0x168] sm:$0xff]
    %v2074 = vld [vmem:[#allocation7 + $0x170] sm:$0xff]
    %v2075 = vld [vmem:[#allocation7 + $0x178] sm:$0xff]
    %v2076 = vld [vmem:[#allocation7 + $0x180] sm:$0xff]
    %v2077 = vld [vmem:[#allocation7 + $0x188] sm:$0xff]
    %v2078 = vld [vmem:[#allocation7 + $0x190] sm:$0xff]
    %v2079 = vld [vmem:[#allocation7 + $0x198] sm:$0xff]
    %v2080 = vld [vmem:[#allocation7 + $0x1a0] sm:$0xff]
    %v2081 = vld [vmem:[#allocation7 + $0x1a8] sm:$0xff]
    %v2082 = vld [vmem:[#allocation7 + $0x1b0] sm:$0xff]
    %v2083 = vld [vmem:[#allocation7 + $0x1b8] sm:$0xff]
    %v2084 = vld [vmem:[#allocation7 + $0x1c0] sm:$0xff]
    %v2085 = vld [vmem:[#allocation7 + $0x1c8] sm:$0xff]
    %v2086 = vld [vmem:[#allocation7 + $0x1d0] sm:$0xff]
    %v2087 = vld [vmem:[#allocation7 + $0x1d8] sm:$0xff]
    %v2088 = vld [vmem:[#allocation7 + $0x1e0] sm:$0xff]
    %v2089 = vld [vmem:[#allocation7 + $0x1e8] sm:$0xff]
    %v2090 = vld [vmem:[#allocation7 + $0x1f0] sm:$0xff]
    %v2091 = vld [vmem:[#allocation7 + $0x1f8] sm:$0xff]
    %v2092 = vld [vmem:[#allocation7 + $0x200] sm:$0xff]
    %v2093 = vld [vmem:[#allocation7 + $0x208] sm:$0xff]
    %v2094 = vld [vmem:[#allocation7 + $0x210] sm:$0xff]
    %v2095 = vld [vmem:[#allocation7 + $0x218] sm:$0xff]
    %v2096 = vld [vmem:[#allocation7 + $0x220] sm:$0xff]
    %v2097 = vld [vmem:[#allocation7 + $0x228] sm:$0xff]
    %v2098 = vld [vmem:[#allocation7 + $0x230] sm:$0xff]
    %v2099 = vld [vmem:[#allocation7 + $0x238] sm:$0xff]
    %v2100 = vld [vmem:[#allocation7 + $0x240] sm:$0xff]
    %v2101 = vld [vmem:[#allocation7 + $0x248] sm:$0xff]
    %v2102 = vld [vmem:[#allocation7 + $0x250] sm:$0xff]
    %v2103 = vld [vmem:[#allocation7 + $0x258] sm:$0xff]
    %v2104 = vld [vmem:[#allocation7 + $0x260] sm:$0xff]
    %v2105 = vld [vmem:[#allocation7 + $0x268] sm:$0xff]
    %v2106 = vld [vmem:[#allocation7 + $0x270] sm:$0xff]
    %v2107 = vld [vmem:[#allocation7 + $0x278] sm:$0xff]
    %v2108 = vld [vmem:[#allocation7 + $0x280] sm:$0xff]
    %v2109 = vld [vmem:[#allocation7 + $0x288] sm:$0xff]
    %v2110 = vld [vmem:[#allocation7 + $0x290] sm:$0xff]
    %v2111 = vld [vmem:[#allocation7 + $0x298] sm:$0xff]
    %v2112 = vld [vmem:[#allocation7 + $0x2a0] sm:$0xff]
    %v2113 = vld [vmem:[#allocation7 + $0x2a8] sm:$0xff]
    %v2114 = vld [vmem:[#allocation7 + $0x2b0] sm:$0xff]
    %v2115 = vld [vmem:[#allocation7 + $0x2b8] sm:$0xff]
    %v2116 = vld [vmem:[#allocation7 + $0x2c0] sm:$0xff]
    %v2117 = vld [vmem:[#allocation7 + $0x2c8] sm:$0xff]
    %v2118 = vld [vmem:[#allocation7 + $0x2d0] sm:$0xff]
    %v2119 = vld [vmem:[#allocation7 + $0x2d8] sm:$0xff]
    %v2120 = vld [vmem:[#allocation7 + $0x2e0] sm:$0xff]
    %v2121 = vld [vmem:[#allocation7 + $0x2e8] sm:$0xff]
    %v2122 = vld [vmem:[#allocation7 + $0x2f0] sm:$0xff]
    %v2123 = vld [vmem:[#allocation7 + $0x2f8] sm:$0xff]
    %v2124 = vld [vmem:[#allocation7 + $0x300] sm:$0xff]
    %v2125 = vld [vmem:[#allocation7 + $0x308] sm:$0xff]
    %v2126 = vld [vmem:[#allocation7 + $0x310] sm:$0xff]
    %v2127 = vld [vmem:[#allocation7 + $0x318] sm:$0xff]
    %v2128 = vld [vmem:[#allocation7 + $0x320] sm:$0xff]
    %v2129 = vld [vmem:[#allocation7 + $0x328] sm:$0xff]
    %v2130 = vld [vmem:[#allocation7 + $0x330] sm:$0xff]
    %v2131 = vld [vmem:[#allocation7 + $0x338] sm:$0xff]
    %v2132 = vld [vmem:[#allocation7 + $0x340] sm:$0xff]
    %v2133 = vld [vmem:[#allocation7 + $0x348] sm:$0xff]
    %v2134 = vld [vmem:[#allocation7 + $0x350] sm:$0xff]
    %v2135 = vld [vmem:[#allocation7 + $0x358] sm:$0xff]
    %v2136 = vld [vmem:[#allocation7 + $0x360] sm:$0xff]
    %v2137 = vld [vmem:[#allocation7 + $0x368] sm:$0xff]
    %v2138 = vld [vmem:[#allocation7 + $0x370] sm:$0xff]
    %v2139 = vld [vmem:[#allocation7 + $0x378] sm:$0xff]
    %v2140 = vld [vmem:[#allocation7 + $0x380] sm:$0xff]
    %v2141 = vld [vmem:[#allocation7 + $0x388] sm:$0xff]
    %v2142 = vld [vmem:[#allocation7 + $0x390] sm:$0xff]
    %v2143 = vld [vmem:[#allocation7 + $0x398] sm:$0xff]
    %v2144 = vld [vmem:[#allocation7 + $0x3a0] sm:$0xff]
    %v2145 = vld [vmem:[#allocation7 + $0x3a8] sm:$0xff]
    %v2146 = vld [vmem:[#allocation7 + $0x3b0] sm:$0xff]
    %v2147 = vld [vmem:[#allocation7 + $0x3b8] sm:$0xff]
    %v2148 = vld [vmem:[#allocation7 + $0x3c0] sm:$0xff]
    %v2149 = vld [vmem:[#allocation7 + $0x3c8] sm:$0xff]
    %v2150 = vld [vmem:[#allocation7 + $0x3d0] sm:$0xff]
    %v2151 = vld [vmem:[#allocation7 + $0x3d8] sm:$0xff]
    %v2152 = vld [vmem:[#allocation7 + $0x3e0] sm:$0xff]
    %v2153 = vld [vmem:[#allocation7 + $0x3e8] sm:$0xff]
    %v2154 = vld [vmem:[#allocation7 + $0x3f0] sm:$0xff]
    %v2155 = vld [vmem:[#allocation7 + $0x3f8] sm:$0xff]
    %v2156 = vld [vmem:[#allocation7 + $0x400] sm:$0xff]
    %v2157 = vld [vmem:[#allocation7 + $0x408] sm:$0xff]
    %v2158 = vld [vmem:[#allocation7 + $0x410] sm:$0xff]
    %v2159 = vld [vmem:[#allocation7 + $0x418] sm:$0xff]
    %v2160 = vld [vmem:[#allocation7 + $0x420] sm:$0xff]
    %v2161 = vld [vmem:[#allocation7 + $0x428] sm:$0xff]
    %v2162 = vld [vmem:[#allocation7 + $0x430] sm:$0xff]
    %v2163 = vld [vmem:[#allocation7 + $0x438] sm:$0xff]
    %v2164 = vld [vmem:[#allocation7 + $0x440] sm:$0xff]
    %v2165 = vld [vmem:[#allocation7 + $0x448] sm:$0xff]
    %v2166 = vld [vmem:[#allocation7 + $0x450] sm:$0xff]
    %v2167 = vld [vmem:[#allocation7 + $0x458] sm:$0xff]
    %v2168 = vld [vmem:[#allocation7 + $0x460] sm:$0xff]
    %v2169 = vld [vmem:[#allocation7 + $0x468] sm:$0xff]
    %v2170 = vld [vmem:[#allocation7 + $0x470] sm:$0xff]
    %v2171 = vld [vmem:[#allocation7 + $0x478] sm:$0xff]
    %v2172 = vld [vmem:[#allocation7 + $0x480] sm:$0xff]
    %v2173 = vld [vmem:[#allocation7 + $0x488] sm:$0xff]
    %v2174 = vld [vmem:[#allocation7 + $0x490] sm:$0xff]
    %v2175 = vld [vmem:[#allocation7 + $0x498] sm:$0xff]
    %v2176 = vld [vmem:[#allocation7 + $0x4a0] sm:$0xff]
    %v2177 = vld [vmem:[#allocation7 + $0x4a8] sm:$0xff]
    %v2178 = vld [vmem:[#allocation7 + $0x4b0] sm:$0xff]
    %v2179 = vld [vmem:[#allocation7 + $0x4b8] sm:$0xff]
    %v2180 = vld [vmem:[#allocation7 + $0x4c0] sm:$0xff]
    %v2181 = vld [vmem:[#allocation7 + $0x4c8] sm:$0xff]
    %v2182 = vld [vmem:[#allocation7 + $0x4d0] sm:$0xff]
    %v2183 = vld [vmem:[#allocation7 + $0x4d8] sm:$0xff]
    %v2184 = vld [vmem:[#allocation7 + $0x4e0] sm:$0xff]
    %v2185 = vld [vmem:[#allocation7 + $0x4e8] sm:$0xff]
    %v2186 = vld [vmem:[#allocation7 + $0x4f0] sm:$0xff]
    %v2187 = vld [vmem:[#allocation7 + $0x4f8] sm:$0xff]
    %v2188 = vld [vmem:[#allocation7 + $0x500] sm:$0xff]
    %v2189 = vld [vmem:[#allocation7 + $0x508] sm:$0xff]
    %v2190 = vld [vmem:[#allocation7 + $0x510] sm:$0xff]
    %v2191 = vld [vmem:[#allocation7 + $0x518] sm:$0xff]
    %v2192 = vld [vmem:[#allocation7 + $0x520] sm:$0xff]
    %v2193 = vld [vmem:[#allocation7 + $0x528] sm:$0xff]
    %v2194 = vld [vmem:[#allocation7 + $0x530] sm:$0xff]
    %v2195 = vld [vmem:[#allocation7 + $0x538] sm:$0xff]
    %v2196 = vld [vmem:[#allocation7 + $0x540] sm:$0xff]
    %v2197 = vld [vmem:[#allocation7 + $0x548] sm:$0xff]
    %v2198 = vld [vmem:[#allocation7 + $0x550] sm:$0xff]
    %v2199 = vld [vmem:[#allocation7 + $0x558] sm:$0xff]
    %v2200 = vld [vmem:[#allocation7 + $0x560] sm:$0xff]
    %v2201 = vld [vmem:[#allocation7 + $0x568] sm:$0xff]
    %v2202 = vld [vmem:[#allocation7 + $0x570] sm:$0xff]
    %v2203 = vld [vmem:[#allocation7 + $0x578] sm:$0xff]
    %v2204 = vld [vmem:[#allocation7 + $0x580] sm:$0xff]
    %v2205 = vld [vmem:[#allocation7 + $0x588] sm:$0xff]
    %v2206 = vld [vmem:[#allocation7 + $0x590] sm:$0xff]
    %v2207 = vld [vmem:[#allocation7 + $0x598] sm:$0xff]
    %v2208 = vld [vmem:[#allocation7 + $0x5a0] sm:$0xff]
    %v2209 = vld [vmem:[#allocation7 + $0x5a8] sm:$0xff]
    %v2210 = vld [vmem:[#allocation7 + $0x5b0] sm:$0xff]
    %v2211 = vld [vmem:[#allocation7 + $0x5b8] sm:$0xff]
    %v2212 = vld [vmem:[#allocation7 + $0x5c0] sm:$0xff]
    %v2213 = vld [vmem:[#allocation7 + $0x5c8] sm:$0xff]
    %v2214 = vld [vmem:[#allocation7 + $0x5d0] sm:$0xff]
    %v2215 = vld [vmem:[#allocation7 + $0x5d8] sm:$0xff]
    %v2216 = vld [vmem:[#allocation7 + $0x5e0] sm:$0xff]
    %v2217 = vld [vmem:[#allocation7 + $0x5e8] sm:$0xff]
    %v2218 = vld [vmem:[#allocation7 + $0x5f0] sm:$0xff]
    %v2219 = vld [vmem:[#allocation7 + $0x5f8] sm:$0xff]
    %v2220 = vld [vmem:[#allocation7 + $0x600] sm:$0xff]
    %v2221 = vld [vmem:[#allocation7 + $0x608] sm:$0xff]
    %v2222 = vld [vmem:[#allocation7 + $0x610] sm:$0xff]
    %v2223 = vld [vmem:[#allocation7 + $0x618] sm:$0xff]
    %v2224 = vld [vmem:[#allocation7 + $0x620] sm:$0xff]
    %v2225 = vld [vmem:[#allocation7 + $0x628] sm:$0xff]
    %v2226 = vld [vmem:[#allocation7 + $0x630] sm:$0xff]
    %v2227 = vld [vmem:[#allocation7 + $0x638] sm:$0xff]
    %v2228 = vld [vmem:[#allocation7 + $0x640] sm:$0xff]
    %v2229 = vld [vmem:[#allocation7 + $0x648] sm:$0xff]
    %v2230 = vld [vmem:[#allocation7 + $0x650] sm:$0xff]
    %v2231 = vld [vmem:[#allocation7 + $0x658] sm:$0xff]
    %v2232 = vld [vmem:[#allocation7 + $0x660] sm:$0xff]
    %v2233 = vld [vmem:[#allocation7 + $0x668] sm:$0xff]
    %v2234 = vld [vmem:[#allocation7 + $0x670] sm:$0xff]
    %v2235 = vld [vmem:[#allocation7 + $0x678] sm:$0xff]
    %v2236 = vld [vmem:[#allocation7 + $0x680] sm:$0xff]
    %v2237 = vld [vmem:[#allocation7 + $0x688] sm:$0xff]
    %v2238 = vld [vmem:[#allocation7 + $0x690] sm:$0xff]
    %v2239 = vld [vmem:[#allocation7 + $0x698] sm:$0xff]
    %v2240 = vld [vmem:[#allocation7 + $0x6a0] sm:$0xff]
    %v2241 = vld [vmem:[#allocation7 + $0x6a8] sm:$0xff]
    %v2242 = vld [vmem:[#allocation7 + $0x6b0] sm:$0xff]
    %v2243 = vld [vmem:[#allocation7 + $0x6b8] sm:$0xff]
    %v2244 = vld [vmem:[#allocation7 + $0x6c0] sm:$0xff]
    %v2245 = vld [vmem:[#allocation7 + $0x6c8] sm:$0xff]
    %v2246 = vld [vmem:[#allocation7 + $0x6d0] sm:$0xff]
    %v2247 = vld [vmem:[#allocation7 + $0x6d8] sm:$0xff]
    %v2248 = vld [vmem:[#allocation7 + $0x6e0] sm:$0xff]
    %v2249 = vld [vmem:[#allocation7 + $0x6e8] sm:$0xff]
    %v2250 = vld [vmem:[#allocation7 + $0x6f0] sm:$0xff]
    %v2251 = vld [vmem:[#allocation7 + $0x6f8] sm:$0xff]
    %v2252 = vld [vmem:[#allocation7 + $0x700] sm:$0xff]
    %v2253 = vld [vmem:[#allocation7 + $0x708] sm:$0xff]
    %v2254 = vld [vmem:[#allocation7 + $0x710] sm:$0xff]
    %v2255 = vld [vmem:[#allocation7 + $0x718] sm:$0xff]
    %v2256 = vld [vmem:[#allocation7 + $0x720] sm:$0xff]
    %v2257 = vld [vmem:[#allocation7 + $0x728] sm:$0xff]
    %v2258 = vld [vmem:[#allocation7 + $0x730] sm:$0xff]
    %v2259 = vld [vmem:[#allocation7 + $0x738] sm:$0xff]
    %v2260 = vld [vmem:[#allocation7 + $0x740] sm:$0xff]
    %v2261 = vld [vmem:[#allocation7 + $0x748] sm:$0xff]
    %v2262 = vld [vmem:[#allocation7 + $0x750] sm:$0xff]
    %v2263 = vld [vmem:[#allocation7 + $0x758] sm:$0xff]
    %v2264 = vld [vmem:[#allocation7 + $0x760] sm:$0xff]
    %v2265 = vld [vmem:[#allocation7 + $0x768] sm:$0xff]
    %v2266 = vld [vmem:[#allocation7 + $0x770] sm:$0xff]
    %v2267 = vld [vmem:[#allocation7 + $0x778] sm:$0xff]
    %v2268 = vld [vmem:[#allocation7 + $0x780] sm:$0xff]
    %v2269 = vld [vmem:[#allocation7 + $0x788] sm:$0xff]
    %v2270 = vld [vmem:[#allocation7 + $0x790] sm:$0xff]
    %v2271 = vld [vmem:[#allocation7 + $0x798] sm:$0xff]
    %v2272 = vld [vmem:[#allocation7 + $0x7a0] sm:$0xff]
    %v2273 = vld [vmem:[#allocation7 + $0x7a8] sm:$0xff]
    %v2274 = vld [vmem:[#allocation7 + $0x7b0] sm:$0xff]
    %v2275 = vld [vmem:[#allocation7 + $0x7b8] sm:$0xff]
    %v2276 = vld [vmem:[#allocation7 + $0x7c0] sm:$0xff]
    %v2277 = vld [vmem:[#allocation7 + $0x7c8] sm:$0xff]
    %v2278 = vld [vmem:[#allocation7 + $0x7d0] sm:$0xff]
    %v2279 = vld [vmem:[#allocation7 + $0x7d8] sm:$0xff]
    %v2280 = vld [vmem:[#allocation7 + $0x7e0] sm:$0xff]
    %v2281 = vld [vmem:[#allocation7 + $0x7e8] sm:$0xff]
    %v2282 = vld [vmem:[#allocation7 + $0x7f0] sm:$0xff]
    %v2283 = vld [vmem:[#allocation7 + $0x7f8] sm:$0xff]
    %2284 = vmatprep.subr.mxu0 %v2029
    %2285 = vmatpush1.msra.mxu0 %v2028
    %2286 = vmatprep.subr.mxu0 %v2037
    %2287 = vmatpush1.msra.mxu0 %v2036
    %2288 = vmatprep.subr.mxu0 %v2045
    %2289 = vmatpush1.msra.mxu0 %v2044
    %2290 = vmatprep.subr.mxu0 %v2053
    %2291 = vmatpush1.msra.mxu0 %v2052
    %2292 = vmatprep.subr.mxu0 %v2061
    %2293 = vmatpush1.msra.mxu0 %v2060
    %2294 = vmatprep.subr.mxu0 %v2069
    %2295 = vmatpush1.msra.mxu0 %v2068
    %2296 = vmatprep.subr.mxu0 %v2077
    %2297 = vmatpush1.msra.mxu0 %v2076
    %2298 = vmatprep.subr.mxu0 %v2085
    %2299 = vmatpush1.msra.mxu0 %v2084
    %2300 = vmatprep.subr.mxu0 %v2093
    %2301 = vmatpush1.msra.mxu0 %v2092
    %2302 = vmatprep.subr.mxu0 %v2101
    %2303 = vmatpush1.msra.mxu0 %v2100
    %2304 = vmatprep.subr.mxu0 %v2109
    %2305 = vmatpush1.msra.mxu0 %v2108
    %2306 = vmatprep.subr.mxu0 %v2117
    %2307 = vmatpush1.msra.mxu0 %v2116
    %2308 = vmatprep.subr.mxu0 %v2125
    %2309 = vmatpush1.msra.mxu0 %v2124
    %2310 = vmatprep.subr.mxu0 %v2133
    %2311 = vmatpush1.msra.mxu0 %v2132
    %2312 = vmatprep.subr.mxu0 %v2141
    %2313 = vmatpush1.msra.mxu0 %v2140
    %2314 = vmatprep.subr.mxu0 %v2149
    %2315 = vmatpush1.msra.mxu0 %v2148
    %2316 = vmatprep.subr.mxu0 %v2157
    %2317 = vmatpush1.msra.mxu0 %v2156
    %2318 = vmatprep.subr.mxu0 %v2165
    %2319 = vmatpush1.msra.mxu0 %v2164
    %2320 = vmatprep.subr.mxu0 %v2173
    %2321 = vmatpush1.msra.mxu0 %v2172
    %2322 = vmatprep.subr.mxu0 %v2181
    %2323 = vmatpush1.msra.mxu0 %v2180
    %2324 = vmatprep.subr.mxu0 %v2189
    %2325 = vmatpush1.msra.mxu0 %v2188
    %2326 = vmatprep.subr.mxu0 %v2197
    %2327 = vmatpush1.msra.mxu0 %v2196
    %2328 = vmatprep.subr.mxu0 %v2205
    %2329 = vmatpush1.msra.mxu0 %v2204
    %2330 = vmatprep.subr.mxu0 %v2213
    %2331 = vmatpush1.msra.mxu0 %v2212
    %2332 = vmatprep.subr.mxu0 %v2221
    %2333 = vmatpush1.msra.mxu0 %v2220
    %2334 = vmatprep.subr.mxu0 %v2229
    %2335 = vmatpush1.msra.mxu0 %v2228
    %2336 = vmatprep.subr.mxu0 %v2237
    %2337 = vmatpush1.msra.mxu0 %v2236
    %2338 = vmatprep.subr.mxu0 %v2245
    %2339 = vmatpush1.msra.mxu0 %v2244
    %2340 = vmatprep.subr.mxu0 %v2253
    %2341 = vmatpush1.msra.mxu0 %v2252
    %2342 = vmatprep.subr.mxu0 %v2261
    %2343 = vmatpush1.msra.mxu0 %v2260
    %2344 = vmatprep.subr.mxu0 %v2269
    %2345 = vmatpush1.msra.mxu0 %v2268
    %2346 = vmatprep.subr.mxu0 %v2277
    %2347 = vmatpush1.msra.mxu0 %v2276
    %2348 = vmatprep.mubr.f32.mxu0 %v2025
    %2349 = vmatmul.mubr.f32.gmra.mrb[0].mxu0 %v2024
    %v2350 = vpop.f32.mrb[0].mxu0
    %v2351 = vadd.f32 0.0, %v2350
    %v2352 = vpop.f32.mrb[0].mxu0
    %v2353 = vadd.f32 0.0, %v2352
    %2354 = vmatprep.mubr.f32.mxu0 %v2027
    %2355 = vmatmul.mubr.f32.gmra.mrb[0].mxu0 %v2026
    %v2356 = vpop.f32.mrb[0].mxu0
    %v2357 = vadd.f32 0.0, %v2356
    %v2358 = vpop.f32.mrb[0].mxu0
    %v2359 = vadd.f32 0.0, %v2358
    %2360 = vdwg.mxu0
    %2361 = vmatprep.subr.mxu0 %v2031
    %2362 = vmatpush1.msra.mxu0 %v2030
    %2363 = vmatprep.subr.mxu0 %v2039
    %2364 = vmatpush1.msra.mxu0 %v2038
    %2365 = vmatprep.subr.mxu0 %v2047
    %2366 = vmatpush1.msra.mxu0 %v2046
    %2367 = vmatprep.subr.mxu0 %v2055
    %2368 = vmatpush1.msra.mxu0 %v2054
    %2369 = vmatprep.subr.mxu0 %v2063
    %2370 = vmatpush1.msra.mxu0 %v2062
    %2371 = vmatprep.subr.mxu0 %v2071
    %2372 = vmatpush1.msra.mxu0 %v2070
    %2373 = vmatprep.subr.mxu0 %v2079
    %2374 = vmatpush1.msra.mxu0 %v2078
    %2375 = vmatprep.subr.mxu0 %v2087
    %2376 = vmatpush1.msra.mxu0 %v2086
    %2377 = vmatprep.subr.mxu0 %v2095
    %2378 = vmatpush1.msra.mxu0 %v2094
    %2379 = vmatprep.subr.mxu0 %v2103
    %2380 = vmatpush1.msra.mxu0 %v2102
    %2381 = vmatprep.subr.mxu0 %v2111
    %2382 = vmatpush1.msra.mxu0 %v2110
    %2383 = vmatprep.subr.mxu0 %v2119
    %2384 = vmatpush1.msra.mxu0 %v2118
    %2385 = vmatprep.subr.mxu0 %v2127
    %2386 = vmatpush1.msra.mxu0 %v2126
    %2387 = vmatprep.subr.mxu0 %v2135
    %2388 = vmatpush1.msra.mxu0 %v2134
    %2389 = vmatprep.subr.mxu0 %v2143
    %2390 = vmatpush1.msra.mxu0 %v2142
    %2391 = vmatprep.subr.mxu0 %v2151
    %2392 = vmatpush1.msra.mxu0 %v2150
    %2393 = vmatprep.subr.mxu0 %v2159
    %2394 = vmatpush1.msra.mxu0 %v2158
    %2395 = vmatprep.subr.mxu0 %v2167
    %2396 = vmatpush1.msra.mxu0 %v2166
    %2397 = vmatprep.subr.mxu0 %v2175
    %2398 = vmatpush1.msra.mxu0 %v2174
    %2399 = vmatprep.subr.mxu0 %v2183
    %2400 = vmatpush1.msra.mxu0 %v2182
    %2401 = vmatprep.subr.mxu0 %v2191
    %2402 = vmatpush1.msra.mxu0 %v2190
    %2403 = vmatprep.subr.mxu0 %v2199
    %2404 = vmatpush1.msra.mxu0 %v2198
    %2405 = vmatprep.subr.mxu0 %v2207
    %2406 = vmatpush1.msra.mxu0 %v2206
    %2407 = vmatprep.subr.mxu0 %v2215
    %2408 = vmatpush1.msra.mxu0 %v2214
    %2409 = vmatprep.subr.mxu0 %v2223
    %2410 = vmatpush1.msra.mxu0 %v2222
    %2411 = vmatprep.subr.mxu0 %v2231
    %2412 = vmatpush1.msra.mxu0 %v2230
    %2413 = vmatprep.subr.mxu0 %v2239
    %2414 = vmatpush1.msra.mxu0 %v2238
    %2415 = vmatprep.subr.mxu0 %v2247
    %2416 = vmatpush1.msra.mxu0 %v2246
    %2417 = vmatprep.subr.mxu0 %v2255
    %2418 = vmatpush1.msra.mxu0 %v2254
    %2419 = vmatprep.subr.mxu0 %v2263
    %2420 = vmatpush1.msra.mxu0 %v2262
    %2421 = vmatprep.subr.mxu0 %v2271
    %2422 = vmatpush1.msra.mxu0 %v2270
    %2423 = vmatprep.subr.mxu0 %v2279
    %2424 = vmatpush1.msra.mxu0 %v2278
    %2425 = vmatprep.mubr.f32.mxu0 %v2025
    %2426 = vmatmul.mubr.f32.gmra.mrb[0].mxu0 %v2024
    %v2427 = vpop.f32.mrb[0].mxu0
    %v2428 = vadd.f32 0.0, %v2427
    %v2429 = vpop.f32.mrb[0].mxu0
    %v2430 = vadd.f32 0.0, %v2429
    %2431 = vmatprep.mubr.f32.mxu0 %v2027
    %2432 = vmatmul.mubr.f32.gmra.mrb[0].mxu0 %v2026
    %v2433 = vpop.f32.mrb[0].mxu0
    %v2434 = vadd.f32 0.0, %v2433
    %v2435 = vpop.f32.mrb[0].mxu0
    %v2436 = vadd.f32 0.0, %v2435
    %2437 = vdwg.mxu0
    %2438 = vmatprep.subr.mxu0 %v2033
    %2439 = vmatpush1.msra.mxu0 %v2032
    %2440 = vmatprep.subr.mxu0 %v2041
    %2441 = vmatpush1.msra.mxu0 %v2040
    %2442 = vmatprep.subr.mxu0 %v2049
    %2443 = vmatpush1.msra.mxu0 %v2048
    %2444 = vmatprep.subr.mxu0 %v2057
    %2445 = vmatpush1.msra.mxu0 %v2056
    %2446 = vmatprep.subr.mxu0 %v2065
    %2447 = vmatpush1.msra.mxu0 %v2064
    %2448 = vmatprep.subr.mxu0 %v2073
    %2449 = vmatpush1.msra.mxu0 %v2072
    %2450 = vmatprep.subr.mxu0 %v2081
    %2451 = vmatpush1.msra.mxu0 %v2080
    %2452 = vmatprep.subr.mxu0 %v2089
    %2453 = vmatpush1.msra.mxu0 %v2088
    %2454 = vmatprep.subr.mxu0 %v2097
    %2455 = vmatpush1.msra.mxu0 %v2096
    %2456 = vmatprep.subr.mxu0 %v2105
    %2457 = vmatpush1.msra.mxu0 %v2104
    %2458 = vmatprep.subr.mxu0 %v2113
    %2459 = vmatpush1.msra.mxu0 %v2112
    %2460 = vmatprep.subr.mxu0 %v2121
    %2461 = vmatpush1.msra.mxu0 %v2120
    %2462 = vmatprep.subr.mxu0 %v2129
    %2463 = vmatpush1.msra.mxu0 %v2128
    %2464 = vmatprep.subr.mxu0 %v2137
    %2465 = vmatpush1.msra.mxu0 %v2136
    %2466 = vmatprep.subr.mxu0 %v2145
    %2467 = vmatpush1.msra.mxu0 %v2144
    %2468 = vmatprep.subr.mxu0 %v2153
    %2469 = vmatpush1.msra.mxu0 %v2152
    %2470 = vmatprep.subr.mxu0 %v2161
    %2471 = vmatpush1.msra.mxu0 %v2160
    %2472 = vmatprep.subr.mxu0 %v2169
    %2473 = vmatpush1.msra.mxu0 %v2168
    %2474 = vmatprep.subr.mxu0 %v2177
    %2475 = vmatpush1.msra.mxu0 %v2176
    %2476 = vmatprep.subr.mxu0 %v2185
    %2477 = vmatpush1.msra.mxu0 %v2184
    %2478 = vmatprep.subr.mxu0 %v2193
    %2479 = vmatpush1.msra.mxu0 %v2192
    %2480 = vmatprep.subr.mxu0 %v2201
    %2481 = vmatpush1.msra.mxu0 %v2200
    %2482 = vmatprep.subr.mxu0 %v2209
    %2483 = vmatpush1.msra.mxu0 %v2208
    %2484 = vmatprep.subr.mxu0 %v2217
    %2485 = vmatpush1.msra.mxu0 %v2216
    %2486 = vmatprep.subr.mxu0 %v2225
    %2487 = vmatpush1.msra.mxu0 %v2224
    %2488 = vmatprep.subr.mxu0 %v2233
    %2489 = vmatpush1.msra.mxu0 %v2232
    %2490 = vmatprep.subr.mxu0 %v2241
    %2491 = vmatpush1.msra.mxu0 %v2240
    %2492 = vmatprep.subr.mxu0 %v2249
    %2493 = vmatpush1.msra.mxu0 %v2248
    %2494 = vmatprep.subr.mxu0 %v2257
    %2495 = vmatpush1.msra.mxu0 %v2256
    %2496 = vmatprep.subr.mxu0 %v2265
    %2497 = vmatpush1.msra.mxu0 %v2264
    %2498 = vmatprep.subr.mxu0 %v2273
    %2499 = vmatpush1.msra.mxu0 %v2272
    %2500 = vmatprep.subr.mxu0 %v2281
    %2501 = vmatpush1.msra.mxu0 %v2280
    %2502 = vmatprep.mubr.f32.mxu0 %v2025
    %2503 = vmatmul.mubr.f32.gmra.mrb[0].mxu0 %v2024
    %v2504 = vpop.f32.mrb[0].mxu0
    %v2505 = vadd.f32 0.0, %v2504
    %v2506 = vpop.f32.mrb[0].mxu0
    %v2507 = vadd.f32 0.0, %v2506
    %2508 = vmatprep.mubr.f32.mxu0 %v2027
    %2509 = vmatmul.mubr.f32.gmra.mrb[0].mxu0 %v2026
    %v2510 = vpop.f32.mrb[0].mxu0
    %v2511 = vadd.f32 0.0, %v2510
    %v2512 = vpop.f32.mrb[0].mxu0
    %v2513 = vadd.f32 0.0, %v2512
    %2514 = vdwg.mxu0
    %2515 = vmatprep.subr.mxu0 %v2035
    %2516 = vmatpush1.msra.mxu0 %v2034
    %2517 = vmatprep.subr.mxu0 %v2043
    %2518 = vmatpush1.msra.mxu0 %v2042
    %2519 = vmatprep.subr.mxu0 %v2051
    %2520 = vmatpush1.msra.mxu0 %v2050
    %2521 = vmatprep.subr.mxu0 %v2059
    %2522 = vmatpush1.msra.mxu0 %v2058
    %2523 = vmatprep.subr.mxu0 %v2067
    %2524 = vmatpush1.msra.mxu0 %v2066
    %2525 = vmatprep.subr.mxu0 %v2075
    %2526 = vmatpush1.msra.mxu0 %v2074
    %2527 = vmatprep.subr.mxu0 %v2083
    %2528 = vmatpush1.msra.mxu0 %v2082
    %2529 = vmatprep.subr.mxu0 %v2091
    %2530 = vmatpush1.msra.mxu0 %v2090
    %2531 = vmatprep.subr.mxu0 %v2099
    %2532 = vmatpush1.msra.mxu0 %v2098
    %2533 = vmatprep.subr.mxu0 %v2107
    %2534 = vmatpush1.msra.mxu0 %v2106
    %2535 = vmatprep.subr.mxu0 %v2115
    %2536 = vmatpush1.msra.mxu0 %v2114
    %2537 = vmatprep.subr.mxu0 %v2123
    %2538 = vmatpush1.msra.mxu0 %v2122
    %2539 = vmatprep.subr.mxu0 %v2131
    %2540 = vmatpush1.msra.mxu0 %v2130
    %2541 = vmatprep.subr.mxu0 %v2139
    %2542 = vmatpush1.msra.mxu0 %v2138
    %2543 = vmatprep.subr.mxu0 %v2147
    %2544 = vmatpush1.msra.mxu0 %v2146
    %2545 = vmatprep.subr.mxu0 %v2155
    %2546 = vmatpush1.msra.mxu0 %v2154
    %2547 = vmatprep.subr.mxu0 %v2163
    %2548 = vmatpush1.msra.mxu0 %v2162
    %2549 = vmatprep.subr.mxu0 %v2171
    %2550 = vmatpush1.msra.mxu0 %v2170
    %2551 = vmatprep.subr.mxu0 %v2179
    %2552 = vmatpush1.msra.mxu0 %v2178
    %2553 = vmatprep.subr.mxu0 %v2187
    %2554 = vmatpush1.msra.mxu0 %v2186
    %2555 = vmatprep.subr.mxu0 %v2195
    %2556 = vmatpush1.msra.mxu0 %v2194
    %2557 = vmatprep.subr.mxu0 %v2203
    %2558 = vmatpush1.msra.mxu0 %v2202
    %2559 = vmatprep.subr.mxu0 %v2211
    %2560 = vmatpush1.msra.mxu0 %v2210
    %2561 = vmatprep.subr.mxu0 %v2219
    %2562 = vmatpush1.msra.mxu0 %v2218
    %2563 = vmatprep.subr.mxu0 %v2227
    %2564 = vmatpush1.msra.mxu0 %v2226
    %2565 = vmatprep.subr.mxu0 %v2235
    %2566 = vmatpush1.msra.mxu0 %v2234
    %2567 = vmatprep.subr.mxu0 %v2243
    %2568 = vmatpush1.msra.mxu0 %v2242
    %2569 = vmatprep.subr.mxu0 %v2251
    %2570 = vmatpush1.msra.mxu0 %v2250
    %2571 = vmatprep.subr.mxu0 %v2259
    %2572 = vmatpush1.msra.mxu0 %v2258
    %2573 = vmatprep.subr.mxu0 %v2267
    %2574 = vmatpush1.msra.mxu0 %v2266
    %2575 = vmatprep.subr.mxu0 %v2275
    %2576 = vmatpush1.msra.mxu0 %v2274
    %2577 = vmatprep.subr.mxu0 %v2283
    %2578 = vmatpush1.msra.mxu0 %v2282
    %2579 = vmatprep.mubr.f32.mxu0 %v2025
    %2580 = vmatmul.mubr.f32.gmra.mrb[0].mxu0 %v2024
    %v2581 = vpop.f32.mrb[0].mxu0
    %v2582 = vadd.f32 0.0, %v2581
    %v2583 = vpop.f32.mrb[0].mxu0
    %v2584 = vadd.f32 0.0, %v2583
    %2585 = vmatprep.mubr.f32.mxu0 %v2027
    %2586 = vmatmul.mubr.f32.gmra.mrb[0].mxu0 %v2026
    %v2587 = vpop.f32.mrb[0].mxu0
    %v2588 = vadd.f32 0.0, %v2587
    %v2589 = vpop.f32.mrb[0].mxu0
    %v2590 = vadd.f32 0.0, %v2589
    %2591 = vdwg.mxu0
    %v2592 = vadd.f32 %v2351, %v2357
    %v2593 = vrot.slane %v2592, 4
    %v2594 = vadd.f32 %v2592, %v2593
    %v2595 = vrot.slane %v2594, 2
    %v2596 = vadd.f32 %v2594, %v2595
    %v2597 = vrot.slane %v2596, 1
    %v2598 = vadd.f32 %v2596, %v2597
    %v2599 = vadd.f32 %v2353, %v2359
    %v2600 = vrot.slane %v2599, 4
    %v2601 = vadd.f32 %v2599, %v2600
    %v2602 = vrot.slane %v2601, 2
    %v2603 = vadd.f32 %v2601, %v2602
    %v2604 = vrot.slane %v2603, 1
    %v2605 = vadd.f32 %v2603, %v2604
    %v2606 = vadd.f32 %v2428, %v2434
    %v2607 = vrot.slane %v2606, 4
    %v2608 = vadd.f32 %v2606, %v2607
    %v2609 = vrot.slane %v2608, 2
    %v2610 = vadd.f32 %v2608, %v2609
    %v2611 = vrot.slane %v2610, 1
    %v2612 = vadd.f32 %v2610, %v2611
    %v2613 = vadd.f32 %v2430, %v2436
    %v2614 = vrot.slane %v2613, 4
    %v2615 = vadd.f32 %v2613, %v2614
    %v2616 = vrot.slane %v2615, 2
    %v2617 = vadd.f32 %v2615, %v2616
    %v2618 = vrot.slane %v2617, 1
    %v2619 = vadd.f32 %v2617, %v2618
    %v2620 = vadd.f32 %v2505, %v2511
    %v2621 = vrot.slane %v2620, 4
    %v2622 = vadd.f32 %v2620, %v2621
    %v2623 = vrot.slane %v2622, 2
    %v2624 = vadd.f32 %v2622, %v2623
    %v2625 = vrot.slane %v2624, 1
    %v2626 = vadd.f32 %v2624, %v2625
    %v2627 = vadd.f32 %v2507, %v2513
    %v2628 = vrot.slane %v2627, 4
    %v2629 = vadd.f32 %v2627, %v2628
    %v2630 = vrot.slane %v2629, 2
    %v2631 = vadd.f32 %v2629, %v2630
    %v2632 = vrot.slane %v2631, 1
    %v2633 = vadd.f32 %v2631, %v2632
    %v2634 = vadd.f32 %v2582, %v2588
    %v2635 = vrot.slane %v2634, 4
    %v2636 = vadd.f32 %v2634, %v2635
    %v2637 = vrot.slane %v2636, 2
    %v2638 = vadd.f32 %v2636, %v2637
    %v2639 = vrot.slane %v2638, 1
    %v2640 = vadd.f32 %v2638, %v2639
    %v2641 = vadd.f32 %v2584, %v2590
    %v2642 = vrot.slane %v2641, 4
    %v2643 = vadd.f32 %v2641, %v2642
    %v2644 = vrot.slane %v2643, 2
    %v2645 = vadd.f32 %v2643, %v2644
    %v2646 = vrot.slane %v2645, 1
    %v2647 = vadd.f32 %v2645, %v2646
    %v2648 = vmul.f32 %v2351, %v2351
    %v2649 = vmul.f32 %v2353, %v2353
    %v2650 = vmul.f32 %v2428, %v2428
    %v2651 = vmul.f32 %v2430, %v2430
    %v2652 = vmul.f32 %v2505, %v2505
    %v2653 = vmul.f32 %v2507, %v2507
    %v2654 = vmul.f32 %v2582, %v2582
    %v2655 = vmul.f32 %v2584, %v2584
    %v2656 = vmul.f32 %v2357, %v2357
    %v2657 = vmul.f32 %v2359, %v2359
    %v2658 = vmul.f32 %v2434, %v2434
    %v2659 = vmul.f32 %v2436, %v2436
    %v2660 = vmul.f32 %v2511, %v2511
    %v2661 = vmul.f32 %v2513, %v2513
    %v2662 = vmul.f32 %v2588, %v2588
    %v2663 = vmul.f32 %v2590, %v2590
    %v2664 = vadd.f32 %v2648, %v2656
    %v2665 = vrot.slane %v2664, 4
    %v2666 = vadd.f32 %v2664, %v2665
    %v2667 = vrot.slane %v2666, 2
    %v2668 = vadd.f32 %v2666, %v2667
    %v2669 = vrot.slane %v2668, 1
    %v2670 = vadd.f32 %v2668, %v2669
    %v2671 = vadd.f32 %v2649, %v2657
    %v2672 = vrot.slane %v2671, 4
    %v2673 = vadd.f32 %v2671, %v2672
    %v2674 = vrot.slane %v2673, 2
    %v2675 = vadd.f32 %v2673, %v2674
    %v2676 = vrot.slane %v2675, 1
    %v2677 = vadd.f32 %v2675, %v2676
    %v2678 = vadd.f32 %v2650, %v2658
    %v2679 = vrot.slane %v2678, 4
    %v2680 = vadd.f32 %v2678, %v2679
    %v2681 = vrot.slane %v2680, 2
    %v2682 = vadd.f32 %v2680, %v2681
    %v2683 = vrot.slane %v2682, 1
    %v2684 = vadd.f32 %v2682, %v2683
    %v2685 = vadd.f32 %v2651, %v2659
    %v2686 = vrot.slane %v2685, 4
    %v2687 = vadd.f32 %v2685, %v2686
    %v2688 = vrot.slane %v2687, 2
    %v2689 = vadd.f32 %v2687, %v2688
    %v2690 = vrot.slane %v2689, 1
    %v2691 = vadd.f32 %v2689, %v2690
    %v2692 = vadd.f32 %v2652, %v2660
    %v2693 = vrot.slane %v2692, 4
    %v2694 = vadd.f32 %v2692, %v2693
    %v2695 = vrot.slane %v2694, 2
    %v2696 = vadd.f32 %v2694, %v2695
    %v2697 = vrot.slane %v2696, 1
    %v2698 = vadd.f32 %v2696, %v2697
    %v2699 = vadd.f32 %v2653, %v2661
    %v2700 = vrot.slane %v2699, 4
    %v2701 = vadd.f32 %v2699, %v2700
    %v2702 = vrot.slane %v2701, 2
    %v2703 = vadd.f32 %v2701, %v2702
    %v2704 = vrot.slane %v2703, 1
    %v2705 = vadd.f32 %v2703, %v2704
    %v2706 = vadd.f32 %v2654, %v2662
    %v2707 = vrot.slane %v2706, 4
    %v2708 = vadd.f32 %v2706, %v2707
    %v2709 = vrot.slane %v2708, 2
    %v2710 = vadd.f32 %v2708, %v2709
    %v2711 = vrot.slane %v2710, 1
    %v2712 = vadd.f32 %v2710, %v2711
    %v2713 = vadd.f32 %v2655, %v2663
    %v2714 = vrot.slane %v2713, 4
    %v2715 = vadd.f32 %v2713, %v2714
    %v2716 = vrot.slane %v2715, 2
    %v2717 = vadd.f32 %v2715, %v2716
    %v2718 = vrot.slane %v2717, 1
    %v2719 = vadd.f32 %v2717, %v2718
    %v2720 = vld [vmem:[%s8] sm:$0xff]
    %v2721 = vld [vmem:[%s8 + $0x8] sm:$0xff]
    %v2722 = vld [vmem:[%s8 + $0x10] sm:$0xff]
    %v2723 = vld [vmem:[%s8 + $0x18] sm:$0xff]
    %v2724 = vld [vmem:[%s8 + $0x20] sm:$0xff]
    %v2725 = vld [vmem:[%s8 + $0x28] sm:$0xff]
    %v2726 = vld [vmem:[%s8 + $0x30] sm:$0xff]
    %v2727 = vld [vmem:[%s8 + $0x38] sm:$0xff]
    %v2728 = vld [vmem:[%s8 + $0x40] sm:$0xff]
    %v2729 = vld [vmem:[%s8 + $0x48] sm:$0xff]
    %v2730 = vld [vmem:[%s8 + $0x50] sm:$0xff]
    %v2731 = vld [vmem:[%s8 + $0x58] sm:$0xff]
    %v2732 = vld [vmem:[%s8 + $0x60] sm:$0xff]
    %v2733 = vld [vmem:[%s8 + $0x68] sm:$0xff]
    %v2734 = vld [vmem:[%s8 + $0x70] sm:$0xff]
    %v2735 = vld [vmem:[%s8 + $0x78] sm:$0xff]
    %v2736 = vld [vmem:[%s8 + $0x80] sm:$0xff]
    %v2737 = vld [vmem:[%s8 + $0x88] sm:$0xff]
    %v2738 = vld [vmem:[%s8 + $0x90] sm:$0xff]
    %v2739 = vld [vmem:[%s8 + $0x98] sm:$0xff]
    %v2740 = vld [vmem:[%s8 + $0xa0] sm:$0xff]
    %v2741 = vld [vmem:[%s8 + $0xa8] sm:$0xff]
    %v2742 = vld [vmem:[%s8 + $0xb0] sm:$0xff]
    %v2743 = vld [vmem:[%s8 + $0xb8] sm:$0xff]
    %v2744 = vld [vmem:[%s8 + $0xc0] sm:$0xff]
    %v2745 = vld [vmem:[%s8 + $0xc8] sm:$0xff]
    %v2746 = vld [vmem:[%s8 + $0xd0] sm:$0xff]
    %v2747 = vld [vmem:[%s8 + $0xd8] sm:$0xff]
    %v2748 = vld [vmem:[%s8 + $0xe0] sm:$0xff]
    %v2749 = vld [vmem:[%s8 + $0xe8] sm:$0xff]
    %v2750 = vld [vmem:[%s8 + $0xf0] sm:$0xff]
    %v2751 = vld [vmem:[%s8 + $0xf8] sm:$0xff]
    %v2752 = vld [vmem:[%s8 + $0x100] sm:$0xff]
    %v2753 = vld [vmem:[%s8 + $0x108] sm:$0xff]
    %v2754 = vld [vmem:[%s8 + $0x110] sm:$0xff]
    %v2755 = vld [vmem:[%s8 + $0x118] sm:$0xff]
    %v2756 = vld [vmem:[%s8 + $0x120] sm:$0xff]
    %v2757 = vld [vmem:[%s8 + $0x128] sm:$0xff]
    %v2758 = vld [vmem:[%s8 + $0x130] sm:$0xff]
    %v2759 = vld [vmem:[%s8 + $0x138] sm:$0xff]
    %v2760 = vld [vmem:[%s8 + $0x140] sm:$0xff]
    %v2761 = vld [vmem:[%s8 + $0x148] sm:$0xff]
    %v2762 = vld [vmem:[%s8 + $0x150] sm:$0xff]
    %v2763 = vld [vmem:[%s8 + $0x158] sm:$0xff]
    %v2764 = vld [vmem:[%s8 + $0x160] sm:$0xff]
    %v2765 = vld [vmem:[%s8 + $0x168] sm:$0xff]
    %v2766 = vld [vmem:[%s8 + $0x170] sm:$0xff]
    %v2767 = vld [vmem:[%s8 + $0x178] sm:$0xff]
    %v2768 = vld [vmem:[%s8 + $0x180] sm:$0xff]
    %v2769 = vld [vmem:[%s8 + $0x188] sm:$0xff]
    %v2770 = vld [vmem:[%s8 + $0x190] sm:$0xff]
    %v2771 = vld [vmem:[%s8 + $0x198] sm:$0xff]
    %v2772 = vld [vmem:[%s8 + $0x1a0] sm:$0xff]
    %v2773 = vld [vmem:[%s8 + $0x1a8] sm:$0xff]
    %v2774 = vld [vmem:[%s8 + $0x1b0] sm:$0xff]
    %v2775 = vld [vmem:[%s8 + $0x1b8] sm:$0xff]
    %v2776 = vld [vmem:[%s8 + $0x1c0] sm:$0xff]
    %v2777 = vld [vmem:[%s8 + $0x1c8] sm:$0xff]
    %v2778 = vld [vmem:[%s8 + $0x1d0] sm:$0xff]
    %v2779 = vld [vmem:[%s8 + $0x1d8] sm:$0xff]
    %v2780 = vld [vmem:[%s8 + $0x1e0] sm:$0xff]
    %v2781 = vld [vmem:[%s8 + $0x1e8] sm:$0xff]
    %v2782 = vld [vmem:[%s8 + $0x1f0] sm:$0xff]
    %v2783 = vld [vmem:[%s8 + $0x1f8] sm:$0xff]
    %v2784 = vld [vmem:[%s8 + $0x200] sm:$0xff]
    %v2785 = vld [vmem:[%s8 + $0x208] sm:$0xff]
    %v2786 = vld [vmem:[%s8 + $0x210] sm:$0xff]
    %v2787 = vld [vmem:[%s8 + $0x218] sm:$0xff]
    %v2788 = vld [vmem:[%s8 + $0x220] sm:$0xff]
    %v2789 = vld [vmem:[%s8 + $0x228] sm:$0xff]
    %v2790 = vld [vmem:[%s8 + $0x230] sm:$0xff]
    %v2791 = vld [vmem:[%s8 + $0x238] sm:$0xff]
    %v2792 = vld [vmem:[%s8 + $0x240] sm:$0xff]
    %v2793 = vld [vmem:[%s8 + $0x248] sm:$0xff]
    %v2794 = vld [vmem:[%s8 + $0x250] sm:$0xff]
    %v2795 = vld [vmem:[%s8 + $0x258] sm:$0xff]
    %v2796 = vld [vmem:[%s8 + $0x260] sm:$0xff]
    %v2797 = vld [vmem:[%s8 + $0x268] sm:$0xff]
    %v2798 = vld [vmem:[%s8 + $0x270] sm:$0xff]
    %v2799 = vld [vmem:[%s8 + $0x278] sm:$0xff]
    %v2800 = vld [vmem:[%s8 + $0x280] sm:$0xff]
    %v2801 = vld [vmem:[%s8 + $0x288] sm:$0xff]
    %v2802 = vld [vmem:[%s8 + $0x290] sm:$0xff]
    %v2803 = vld [vmem:[%s8 + $0x298] sm:$0xff]
    %v2804 = vld [vmem:[%s8 + $0x2a0] sm:$0xff]
    %v2805 = vld [vmem:[%s8 + $0x2a8] sm:$0xff]
    %v2806 = vld [vmem:[%s8 + $0x2b0] sm:$0xff]
    %v2807 = vld [vmem:[%s8 + $0x2b8] sm:$0xff]
    %v2808 = vld [vmem:[%s8 + $0x2c0] sm:$0xff]
    %v2809 = vld [vmem:[%s8 + $0x2c8] sm:$0xff]
    %v2810 = vld [vmem:[%s8 + $0x2d0] sm:$0xff]
    %v2811 = vld [vmem:[%s8 + $0x2d8] sm:$0xff]
    %v2812 = vld [vmem:[%s8 + $0x2e0] sm:$0xff]
    %v2813 = vld [vmem:[%s8 + $0x2e8] sm:$0xff]
    %v2814 = vld [vmem:[%s8 + $0x2f0] sm:$0xff]
    %v2815 = vld [vmem:[%s8 + $0x2f8] sm:$0xff]
    %v2816 = vld [vmem:[%s8 + $0x300] sm:$0xff]
    %v2817 = vld [vmem:[%s8 + $0x308] sm:$0xff]
    %v2818 = vld [vmem:[%s8 + $0x310] sm:$0xff]
    %v2819 = vld [vmem:[%s8 + $0x318] sm:$0xff]
    %v2820 = vld [vmem:[%s8 + $0x320] sm:$0xff]
    %v2821 = vld [vmem:[%s8 + $0x328] sm:$0xff]
    %v2822 = vld [vmem:[%s8 + $0x330] sm:$0xff]
    %v2823 = vld [vmem:[%s8 + $0x338] sm:$0xff]
    %v2824 = vld [vmem:[%s8 + $0x340] sm:$0xff]
    %v2825 = vld [vmem:[%s8 + $0x348] sm:$0xff]
    %v2826 = vld [vmem:[%s8 + $0x350] sm:$0xff]
    %v2827 = vld [vmem:[%s8 + $0x358] sm:$0xff]
    %v2828 = vld [vmem:[%s8 + $0x360] sm:$0xff]
    %v2829 = vld [vmem:[%s8 + $0x368] sm:$0xff]
    %v2830 = vld [vmem:[%s8 + $0x370] sm:$0xff]
    %v2831 = vld [vmem:[%s8 + $0x378] sm:$0xff]
    %v2832 = vld [vmem:[%s8 + $0x380] sm:$0xff]
    %v2833 = vld [vmem:[%s8 + $0x388] sm:$0xff]
    %v2834 = vld [vmem:[%s8 + $0x390] sm:$0xff]
    %v2835 = vld [vmem:[%s8 + $0x398] sm:$0xff]
    %v2836 = vld [vmem:[%s8 + $0x3a0] sm:$0xff]
    %v2837 = vld [vmem:[%s8 + $0x3a8] sm:$0xff]
    %v2838 = vld [vmem:[%s8 + $0x3b0] sm:$0xff]
    %v2839 = vld [vmem:[%s8 + $0x3b8] sm:$0xff]
    %v2840 = vld [vmem:[%s8 + $0x3c0] sm:$0xff]
    %v2841 = vld [vmem:[%s8 + $0x3c8] sm:$0xff]
    %v2842 = vld [vmem:[%s8 + $0x3d0] sm:$0xff]
    %v2843 = vld [vmem:[%s8 + $0x3d8] sm:$0xff]
    %v2844 = vld [vmem:[%s8 + $0x3e0] sm:$0xff]
    %v2845 = vld [vmem:[%s8 + $0x3e8] sm:$0xff]
    %v2846 = vld [vmem:[%s8 + $0x3f0] sm:$0xff]
    %v2847 = vld [vmem:[%s8 + $0x3f8] sm:$0xff]
    %2848 = vmatprep.subr.mxu0 0.0
    %2849 = vmatpush1.msra.mxu0 %v2720
    %2850 = vmatprep.subr.mxu0 0.0
    %2851 = vmatpush1.msra.mxu0 %v2721
    %2852 = vmatprep.subr.mxu0 0.0
    %2853 = vmatpush1.msra.mxu0 %v2722
    %2854 = vmatprep.subr.mxu0 0.0
    %2855 = vmatpush1.msra.mxu0 %v2723
    %2856 = vmatprep.subr.mxu0 0.0
    %2857 = vmatpush1.msra.mxu0 %v2724
    %2858 = vmatprep.subr.mxu0 0.0
    %2859 = vmatpush1.msra.mxu0 %v2725
    %2860 = vmatprep.subr.mxu0 0.0
    %2861 = vmatpush1.msra.mxu0 %v2726
    %2862 = vmatprep.subr.mxu0 0.0
    %2863 = vmatpush1.msra.mxu0 %v2727
    %2864 = vmatprep.subr.mxu0 0.0
    %2865 = vmatpush1.msra.mxu0 %v2728
    %2866 = vmatprep.subr.mxu0 0.0
    %2867 = vmatpush1.msra.mxu0 %v2729
    %2868 = vmatprep.subr.mxu0 0.0
    %2869 = vmatpush1.msra.mxu0 %v2730
    %2870 = vmatprep.subr.mxu0 0.0
    %2871 = vmatpush1.msra.mxu0 %v2731
    %2872 = vmatprep.subr.mxu0 0.0
    %2873 = vmatpush1.msra.mxu0 %v2732
    %2874 = vmatprep.subr.mxu0 0.0
    %2875 = vmatpush1.msra.mxu0 %v2733
    %2876 = vmatprep.subr.mxu0 0.0
    %2877 = vmatpush1.msra.mxu0 %v2734
    %2878 = vmatprep.subr.mxu0 0.0
    %2879 = vmatpush1.msra.mxu0 %v2735
    %2880 = vmatprep.subr.mxu0 0.0
    %2881 = vmatpush1.msra.mxu0 %v2736
    %2882 = vmatprep.subr.mxu0 0.0
    %2883 = vmatpush1.msra.mxu0 %v2737
    %2884 = vmatprep.subr.mxu0 0.0
    %2885 = vmatpush1.msra.mxu0 %v2738
    %2886 = vmatprep.subr.mxu0 0.0
    %2887 = vmatpush1.msra.mxu0 %v2739
    %2888 = vmatprep.subr.mxu0 0.0
    %2889 = vmatpush1.msra.mxu0 %v2740
    %2890 = vmatprep.subr.mxu0 0.0
    %2891 = vmatpush1.msra.mxu0 %v2741
    %2892 = vmatprep.subr.mxu0 0.0
    %2893 = vmatpush1.msra.mxu0 %v2742
    %2894 = vmatprep.subr.mxu0 0.0
    %2895 = vmatpush1.msra.mxu0 %v2743
    %2896 = vmatprep.subr.mxu0 0.0
    %2897 = vmatpush1.msra.mxu0 %v2744
    %2898 = vmatprep.subr.mxu0 0.0
    %2899 = vmatpush1.msra.mxu0 %v2745
    %2900 = vmatprep.subr.mxu0 0.0
    %2901 = vmatpush1.msra.mxu0 %v2746
    %2902 = vmatprep.subr.mxu0 0.0
    %2903 = vmatpush1.msra.mxu0 %v2747
    %2904 = vmatprep.subr.mxu0 0.0
    %2905 = vmatpush1.msra.mxu0 %v2748
    %2906 = vmatprep.subr.mxu0 0.0
    %2907 = vmatpush1.msra.mxu0 %v2749
    %2908 = vmatprep.subr.mxu0 0.0
    %2909 = vmatpush1.msra.mxu0 %v2750
    %2910 = vmatprep.subr.mxu0 0.0
    %2911 = vmatpush1.msra.mxu0 %v2751
    %2912 = vmatprep.mubr.f32.mxu0 %v2605
    %2913 = vmatmul.mubr.f32.gmra.mrb[0].mxu0 %v2598
    %v2914 = vpop.f32.mrb[0].mxu0
    %v2915 = vadd.f32 0.0, %v2914
    %v2916 = vpop.f32.mrb[0].mxu0
    %2917 = vdwg.mxu0
    %2918 = vmatprep.subr.mxu0 0.0
    %2919 = vmatpush1.msra.mxu0 %v2752
    %2920 = vmatprep.subr.mxu0 0.0
    %2921 = vmatpush1.msra.mxu0 %v2753
    %2922 = vmatprep.subr.mxu0 0.0
    %2923 = vmatpush1.msra.mxu0 %v2754
    %2924 = vmatprep.subr.mxu0 0.0
    %2925 = vmatpush1.msra.mxu0 %v2755
    %2926 = vmatprep.subr.mxu0 0.0
    %2927 = vmatpush1.msra.mxu0 %v2756
    %2928 = vmatprep.subr.mxu0 0.0
    %2929 = vmatpush1.msra.mxu0 %v2757
    %2930 = vmatprep.subr.mxu0 0.0
    %2931 = vmatpush1.msra.mxu0 %v2758
    %2932 = vmatprep.subr.mxu0 0.0
    %2933 = vmatpush1.msra.mxu0 %v2759
    %2934 = vmatprep.subr.mxu0 0.0
    %2935 = vmatpush1.msra.mxu0 %v2760
    %2936 = vmatprep.subr.mxu0 0.0
    %2937 = vmatpush1.msra.mxu0 %v2761
    %2938 = vmatprep.subr.mxu0 0.0
    %2939 = vmatpush1.msra.mxu0 %v2762
    %2940 = vmatprep.subr.mxu0 0.0
    %2941 = vmatpush1.msra.mxu0 %v2763
    %2942 = vmatprep.subr.mxu0 0.0
    %2943 = vmatpush1.msra.mxu0 %v2764
    %2944 = vmatprep.subr.mxu0 0.0
    %2945 = vmatpush1.msra.mxu0 %v2765
    %2946 = vmatprep.subr.mxu0 0.0
    %2947 = vmatpush1.msra.mxu0 %v2766
    %2948 = vmatprep.subr.mxu0 0.0
    %2949 = vmatpush1.msra.mxu0 %v2767
    %2950 = vmatprep.subr.mxu0 0.0
    %2951 = vmatpush1.msra.mxu0 %v2768
    %2952 = vmatprep.subr.mxu0 0.0
    %2953 = vmatpush1.msra.mxu0 %v2769
    %2954 = vmatprep.subr.mxu0 0.0
    %2955 = vmatpush1.msra.mxu0 %v2770
    %2956 = vmatprep.subr.mxu0 0.0
    %2957 = vmatpush1.msra.mxu0 %v2771
    %2958 = vmatprep.subr.mxu0 0.0
    %2959 = vmatpush1.msra.mxu0 %v2772
    %2960 = vmatprep.subr.mxu0 0.0
    %2961 = vmatpush1.msra.mxu0 %v2773
    %2962 = vmatprep.subr.mxu0 0.0
    %2963 = vmatpush1.msra.mxu0 %v2774
    %2964 = vmatprep.subr.mxu0 0.0
    %2965 = vmatpush1.msra.mxu0 %v2775
    %2966 = vmatprep.subr.mxu0 0.0
    %2967 = vmatpush1.msra.mxu0 %v2776
    %2968 = vmatprep.subr.mxu0 0.0
    %2969 = vmatpush1.msra.mxu0 %v2777
    %2970 = vmatprep.subr.mxu0 0.0
    %2971 = vmatpush1.msra.mxu0 %v2778
    %2972 = vmatprep.subr.mxu0 0.0
    %2973 = vmatpush1.msra.mxu0 %v2779
    %2974 = vmatprep.subr.mxu0 0.0
    %2975 = vmatpush1.msra.mxu0 %v2780
    %2976 = vmatprep.subr.mxu0 0.0
    %2977 = vmatpush1.msra.mxu0 %v2781
    %2978 = vmatprep.subr.mxu0 0.0
    %2979 = vmatpush1.msra.mxu0 %v2782
    %2980 = vmatprep.subr.mxu0 0.0
    %2981 = vmatpush1.msra.mxu0 %v2783
    %2982 = vmatprep.mubr.f32.mxu0 %v2619
    %2983 = vmatmul.mubr.f32.gmra.mrb[0].mxu0 %v2612
    %v2984 = vpop.f32.mrb[0].mxu0
    %v2985 = vadd.f32 %v2915, %v2984
    %v2986 = vpop.f32.mrb[0].mxu0
    %2987 = vdwg.mxu0
    %2988 = vmatprep.subr.mxu0 0.0
    %2989 = vmatpush1.msra.mxu0 %v2784
    %2990 = vmatprep.subr.mxu0 0.0
    %2991 = vmatpush1.msra.mxu0 %v2785
    %2992 = vmatprep.subr.mxu0 0.0
    %2993 = vmatpush1.msra.mxu0 %v2786
    %2994 = vmatprep.subr.mxu0 0.0
    %2995 = vmatpush1.msra.mxu0 %v2787
    %2996 = vmatprep.subr.mxu0 0.0
    %2997 = vmatpush1.msra.mxu0 %v2788
    %2998 = vmatprep.subr.mxu0 0.0
    %2999 = vmatpush1.msra.mxu0 %v2789
    %3000 = vmatprep.subr.mxu0 0.0
    %3001 = vmatpush1.msra.mxu0 %v2790
    %3002 = vmatprep.subr.mxu0 0.0
    %3003 = vmatpush1.msra.mxu0 %v2791
    %3004 = vmatprep.subr.mxu0 0.0
    %3005 = vmatpush1.msra.mxu0 %v2792
    %3006 = vmatprep.subr.mxu0 0.0
    %3007 = vmatpush1.msra.mxu0 %v2793
    %3008 = vmatprep.subr.mxu0 0.0
    %3009 = vmatpush1.msra.mxu0 %v2794
    %3010 = vmatprep.subr.mxu0 0.0
    %3011 = vmatpush1.msra.mxu0 %v2795
    %3012 = vmatprep.subr.mxu0 0.0
    %3013 = vmatpush1.msra.mxu0 %v2796
    %3014 = vmatprep.subr.mxu0 0.0
    %3015 = vmatpush1.msra.mxu0 %v2797
    %3016 = vmatprep.subr.mxu0 0.0
    %3017 = vmatpush1.msra.mxu0 %v2798
    %3018 = vmatprep.subr.mxu0 0.0
    %3019 = vmatpush1.msra.mxu0 %v2799
    %3020 = vmatprep.subr.mxu0 0.0
    %3021 = vmatpush1.msra.mxu0 %v2800
    %3022 = vmatprep.subr.mxu0 0.0
    %3023 = vmatpush1.msra.mxu0 %v2801
    %3024 = vmatprep.subr.mxu0 0.0
    %3025 = vmatpush1.msra.mxu0 %v2802
    %3026 = vmatprep.subr.mxu0 0.0
    %3027 = vmatpush1.msra.mxu0 %v2803
    %3028 = vmatprep.subr.mxu0 0.0
    %3029 = vmatpush1.msra.mxu0 %v2804
    %3030 = vmatprep.subr.mxu0 0.0
    %3031 = vmatpush1.msra.mxu0 %v2805
    %3032 = vmatprep.subr.mxu0 0.0
    %3033 = vmatpush1.msra.mxu0 %v2806
    %3034 = vmatprep.subr.mxu0 0.0
    %3035 = vmatpush1.msra.mxu0 %v2807
    %3036 = vmatprep.subr.mxu0 0.0
    %3037 = vmatpush1.msra.mxu0 %v2808
    %3038 = vmatprep.subr.mxu0 0.0
    %3039 = vmatpush1.msra.mxu0 %v2809
    %3040 = vmatprep.subr.mxu0 0.0
    %3041 = vmatpush1.msra.mxu0 %v2810
    %3042 = vmatprep.subr.mxu0 0.0
    %3043 = vmatpush1.msra.mxu0 %v2811
    %3044 = vmatprep.subr.mxu0 0.0
    %3045 = vmatpush1.msra.mxu0 %v2812
    %3046 = vmatprep.subr.mxu0 0.0
    %3047 = vmatpush1.msra.mxu0 %v2813
    %3048 = vmatprep.subr.mxu0 0.0
    %3049 = vmatpush1.msra.mxu0 %v2814
    %3050 = vmatprep.subr.mxu0 0.0
    %3051 = vmatpush1.msra.mxu0 %v2815
    %3052 = vmatprep.mubr.f32.mxu0 %v2633
    %3053 = vmatmul.mubr.f32.gmra.mrb[0].mxu0 %v2626
    %v3054 = vpop.f32.mrb[0].mxu0
    %v3055 = vadd.f32 %v2985, %v3054
    %v3056 = vpop.f32.mrb[0].mxu0
    %3057 = vdwg.mxu0
    %3058 = vmatprep.subr.mxu0 0.0
    %3059 = vmatpush1.msra.mxu0 %v2816
    %3060 = vmatprep.subr.mxu0 0.0
    %3061 = vmatpush1.msra.mxu0 %v2817
    %3062 = vmatprep.subr.mxu0 0.0
    %3063 = vmatpush1.msra.mxu0 %v2818
    %3064 = vmatprep.subr.mxu0 0.0
    %3065 = vmatpush1.msra.mxu0 %v2819
    %3066 = vmatprep.subr.mxu0 0.0
    %3067 = vmatpush1.msra.mxu0 %v2820
    %3068 = vmatprep.subr.mxu0 0.0
    %3069 = vmatpush1.msra.mxu0 %v2821
    %3070 = vmatprep.subr.mxu0 0.0
    %3071 = vmatpush1.msra.mxu0 %v2822
    %3072 = vmatprep.subr.mxu0 0.0
    %3073 = vmatpush1.msra.mxu0 %v2823
    %3074 = vmatprep.subr.mxu0 0.0
    %3075 = vmatpush1.msra.mxu0 %v2824
    %3076 = vmatprep.subr.mxu0 0.0
    %3077 = vmatpush1.msra.mxu0 %v2825
    %3078 = vmatprep.subr.mxu0 0.0
    %3079 = vmatpush1.msra.mxu0 %v2826
    %3080 = vmatprep.subr.mxu0 0.0
    %3081 = vmatpush1.msra.mxu0 %v2827
    %3082 = vmatprep.subr.mxu0 0.0
    %3083 = vmatpush1.msra.mxu0 %v2828
    %3084 = vmatprep.subr.mxu0 0.0
    %3085 = vmatpush1.msra.mxu0 %v2829
    %3086 = vmatprep.subr.mxu0 0.0
    %3087 = vmatpush1.msra.mxu0 %v2830
    %3088 = vmatprep.subr.mxu0 0.0
    %3089 = vmatpush1.msra.mxu0 %v2831
    %3090 = vmatprep.subr.mxu0 0.0
    %3091 = vmatpush1.msra.mxu0 %v2832
    %3092 = vmatprep.subr.mxu0 0.0
    %3093 = vmatpush1.msra.mxu0 %v2833
    %3094 = vmatprep.subr.mxu0 0.0
    %3095 = vmatpush1.msra.mxu0 %v2834
    %3096 = vmatprep.subr.mxu0 0.0
    %3097 = vmatpush1.msra.mxu0 %v2835
    %3098 = vmatprep.subr.mxu0 0.0
    %3099 = vmatpush1.msra.mxu0 %v2836
    %3100 = vmatprep.subr.mxu0 0.0
    %3101 = vmatpush1.msra.mxu0 %v2837
    %3102 = vmatprep.subr.mxu0 0.0
    %3103 = vmatpush1.msra.mxu0 %v2838
    %3104 = vmatprep.subr.mxu0 0.0
    %3105 = vmatpush1.msra.mxu0 %v2839
    %3106 = vmatprep.subr.mxu0 0.0
    %3107 = vmatpush1.msra.mxu0 %v2840
    %3108 = vmatprep.subr.mxu0 0.0
    %3109 = vmatpush1.msra.mxu0 %v2841
    %3110 = vmatprep.subr.mxu0 0.0
    %3111 = vmatpush1.msra.mxu0 %v2842
    %3112 = vmatprep.subr.mxu0 0.0
    %3113 = vmatpush1.msra.mxu0 %v2843
    %3114 = vmatprep.subr.mxu0 0.0
    %3115 = vmatpush1.msra.mxu0 %v2844
    %3116 = vmatprep.subr.mxu0 0.0
    %3117 = vmatpush1.msra.mxu0 %v2845
    %3118 = vmatprep.subr.mxu0 0.0
    %3119 = vmatpush1.msra.mxu0 %v2846
    %3120 = vmatprep.subr.mxu0 0.0
    %3121 = vmatpush1.msra.mxu0 %v2847
    %3122 = vmatprep.mubr.f32.mxu0 %v2647
    %3123 = vmatmul.mubr.f32.gmra.mrb[0].mxu0 %v2640
    %v3124 = vpop.f32.mrb[0].mxu0
    %v3125 = vadd.f32 %v3055, %v3124
    %v3126 = vpop.f32.mrb[0].mxu0
    %3127 = vdwg.mxu0
    %3128 = vmatprep.subr.mxu0 0.0
    %3129 = vmatpush1.msra.mxu0 %v2720
    %3130 = vmatprep.subr.mxu0 0.0
    %3131 = vmatpush1.msra.mxu0 %v2721
    %3132 = vmatprep.subr.mxu0 0.0
    %3133 = vmatpush1.msra.mxu0 %v2722
    %3134 = vmatprep.subr.mxu0 0.0
    %3135 = vmatpush1.msra.mxu0 %v2723
    %3136 = vmatprep.subr.mxu0 0.0
    %3137 = vmatpush1.msra.mxu0 %v2724
    %3138 = vmatprep.subr.mxu0 0.0
    %3139 = vmatpush1.msra.mxu0 %v2725
    %3140 = vmatprep.subr.mxu0 0.0
    %3141 = vmatpush1.msra.mxu0 %v2726
    %3142 = vmatprep.subr.mxu0 0.0
    %3143 = vmatpush1.msra.mxu0 %v2727
    %3144 = vmatprep.subr.mxu0 0.0
    %3145 = vmatpush1.msra.mxu0 %v2728
    %3146 = vmatprep.subr.mxu0 0.0
    %3147 = vmatpush1.msra.mxu0 %v2729
    %3148 = vmatprep.subr.mxu0 0.0
    %3149 = vmatpush1.msra.mxu0 %v2730
    %3150 = vmatprep.subr.mxu0 0.0
    %3151 = vmatpush1.msra.mxu0 %v2731
    %3152 = vmatprep.subr.mxu0 0.0
    %3153 = vmatpush1.msra.mxu0 %v2732
    %3154 = vmatprep.subr.mxu0 0.0
    %3155 = vmatpush1.msra.mxu0 %v2733
    %3156 = vmatprep.subr.mxu0 0.0
    %3157 = vmatpush1.msra.mxu0 %v2734
    %3158 = vmatprep.subr.mxu0 0.0
    %3159 = vmatpush1.msra.mxu0 %v2735
    %3160 = vmatprep.subr.mxu0 0.0
    %3161 = vmatpush1.msra.mxu0 %v2736
    %3162 = vmatprep.subr.mxu0 0.0
    %3163 = vmatpush1.msra.mxu0 %v2737
    %3164 = vmatprep.subr.mxu0 0.0
    %3165 = vmatpush1.msra.mxu0 %v2738
    %3166 = vmatprep.subr.mxu0 0.0
    %3167 = vmatpush1.msra.mxu0 %v2739
    %3168 = vmatprep.subr.mxu0 0.0
    %3169 = vmatpush1.msra.mxu0 %v2740
    %3170 = vmatprep.subr.mxu0 0.0
    %3171 = vmatpush1.msra.mxu0 %v2741
    %3172 = vmatprep.subr.mxu0 0.0
    %3173 = vmatpush1.msra.mxu0 %v2742
    %3174 = vmatprep.subr.mxu0 0.0
    %3175 = vmatpush1.msra.mxu0 %v2743
    %3176 = vmatprep.subr.mxu0 0.0
    %3177 = vmatpush1.msra.mxu0 %v2744
    %3178 = vmatprep.subr.mxu0 0.0
    %3179 = vmatpush1.msra.mxu0 %v2745
    %3180 = vmatprep.subr.mxu0 0.0
    %3181 = vmatpush1.msra.mxu0 %v2746
    %3182 = vmatprep.subr.mxu0 0.0
    %3183 = vmatpush1.msra.mxu0 %v2747
    %3184 = vmatprep.subr.mxu0 0.0
    %3185 = vmatpush1.msra.mxu0 %v2748
    %3186 = vmatprep.subr.mxu0 0.0
    %3187 = vmatpush1.msra.mxu0 %v2749
    %3188 = vmatprep.subr.mxu0 0.0
    %3189 = vmatpush1.msra.mxu0 %v2750
    %3190 = vmatprep.subr.mxu0 0.0
    %3191 = vmatpush1.msra.mxu0 %v2751
    %3192 = vmatprep.mubr.f32.mxu0 %v2677
    %3193 = vmatmul.mubr.f32.gmra.mrb[0].mxu0 %v2670
    %v3194 = vpop.f32.mrb[0].mxu0
    %v3195 = vadd.f32 0.0, %v3194
    %v3196 = vpop.f32.mrb[0].mxu0
    %3197 = vdwg.mxu0
    %3198 = vmatprep.subr.mxu0 0.0
    %3199 = vmatpush1.msra.mxu0 %v2752
    %3200 = vmatprep.subr.mxu0 0.0
    %3201 = vmatpush1.msra.mxu0 %v2753
    %3202 = vmatprep.subr.mxu0 0.0
    %3203 = vmatpush1.msra.mxu0 %v2754
    %3204 = vmatprep.subr.mxu0 0.0
    %3205 = vmatpush1.msra.mxu0 %v2755
    %3206 = vmatprep.subr.mxu0 0.0
    %3207 = vmatpush1.msra.mxu0 %v2756
    %3208 = vmatprep.subr.mxu0 0.0
    %3209 = vmatpush1.msra.mxu0 %v2757
    %3210 = vmatprep.subr.mxu0 0.0
    %3211 = vmatpush1.msra.mxu0 %v2758
    %3212 = vmatprep.subr.mxu0 0.0
    %3213 = vmatpush1.msra.mxu0 %v2759
    %3214 = vmatprep.subr.mxu0 0.0
    %3215 = vmatpush1.msra.mxu0 %v2760
    %3216 = vmatprep.subr.mxu0 0.0
    %3217 = vmatpush1.msra.mxu0 %v2761
    %3218 = vmatprep.subr.mxu0 0.0
    %3219 = vmatpush1.msra.mxu0 %v2762
    %3220 = vmatprep.subr.mxu0 0.0
    %3221 = vmatpush1.msra.mxu0 %v2763
    %3222 = vmatprep.subr.mxu0 0.0
    %3223 = vmatpush1.msra.mxu0 %v2764
    %3224 = vmatprep.subr.mxu0 0.0
    %3225 = vmatpush1.msra.mxu0 %v2765
    %3226 = vmatprep.subr.mxu0 0.0
    %3227 = vmatpush1.msra.mxu0 %v2766
    %3228 = vmatprep.subr.mxu0 0.0
    %3229 = vmatpush1.msra.mxu0 %v2767
    %3230 = vmatprep.subr.mxu0 0.0
    %3231 = vmatpush1.msra.mxu0 %v2768
    %3232 = vmatprep.subr.mxu0 0.0
    %3233 = vmatpush1.msra.mxu0 %v2769
    %3234 = vmatprep.subr.mxu0 0.0
    %3235 = vmatpush1.msra.mxu0 %v2770
    %3236 = vmatprep.subr.mxu0 0.0
    %3237 = vmatpush1.msra.mxu0 %v2771
    %3238 = vmatprep.subr.mxu0 0.0
    %3239 = vmatpush1.msra.mxu0 %v2772
    %3240 = vmatprep.subr.mxu0 0.0
    %3241 = vmatpush1.msra.mxu0 %v2773
    %3242 = vmatprep.subr.mxu0 0.0
    %3243 = vmatpush1.msra.mxu0 %v2774
    %3244 = vmatprep.subr.mxu0 0.0
    %3245 = vmatpush1.msra.mxu0 %v2775
    %3246 = vmatprep.subr.mxu0 0.0
    %3247 = vmatpush1.msra.mxu0 %v2776
    %3248 = vmatprep.subr.mxu0 0.0
    %3249 = vmatpush1.msra.mxu0 %v2777
    %3250 = vmatprep.subr.mxu0 0.0
    %3251 = vmatpush1.msra.mxu0 %v2778
    %3252 = vmatprep.subr.mxu0 0.0
    %3253 = vmatpush1.msra.mxu0 %v2779
    %3254 = vmatprep.subr.mxu0 0.0
    %3255 = vmatpush1.msra.mxu0 %v2780
    %3256 = vmatprep.subr.mxu0 0.0
    %3257 = vmatpush1.msra.mxu0 %v2781
    %3258 = vmatprep.subr.mxu0 0.0
    %3259 = vmatpush1.msra.mxu0 %v2782
    %3260 = vmatprep.subr.mxu0 0.0
    %3261 = vmatpush1.msra.mxu0 %v2783
    %3262 = vmatprep.mubr.f32.mxu0 %v2691
    %3263 = vmatmul.mubr.f32.gmra.mrb[0].mxu0 %v2684
    %v3264 = vpop.f32.mrb[0].mxu0
    %v3265 = vadd.f32 %v3195, %v3264
    %v3266 = vpop.f32.mrb[0].mxu0
    %3267 = vdwg.mxu0
    %3268 = vmatprep.subr.mxu0 0.0
    %3269 = vmatpush1.msra.mxu0 %v2784
    %3270 = vmatprep.subr.mxu0 0.0
    %3271 = vmatpush1.msra.mxu0 %v2785
    %3272 = vmatprep.subr.mxu0 0.0
    %3273 = vmatpush1.msra.mxu0 %v2786
    %3274 = vmatprep.subr.mxu0 0.0
    %3275 = vmatpush1.msra.mxu0 %v2787
    %3276 = vmatprep.subr.mxu0 0.0
    %3277 = vmatpush1.msra.mxu0 %v2788
    %3278 = vmatprep.subr.mxu0 0.0
    %3279 = vmatpush1.msra.mxu0 %v2789
    %3280 = vmatprep.subr.mxu0 0.0
    %3281 = vmatpush1.msra.mxu0 %v2790
    %3282 = vmatprep.subr.mxu0 0.0
    %3283 = vmatpush1.msra.mxu0 %v2791
    %3284 = vmatprep.subr.mxu0 0.0
    %3285 = vmatpush1.msra.mxu0 %v2792
    %3286 = vmatprep.subr.mxu0 0.0
    %3287 = vmatpush1.msra.mxu0 %v2793
    %3288 = vmatprep.subr.mxu0 0.0
    %3289 = vmatpush1.msra.mxu0 %v2794
    %3290 = vmatprep.subr.mxu0 0.0
    %3291 = vmatpush1.msra.mxu0 %v2795
    %3292 = vmatprep.subr.mxu0 0.0
    %3293 = vmatpush1.msra.mxu0 %v2796
    %3294 = vmatprep.subr.mxu0 0.0
    %3295 = vmatpush1.msra.mxu0 %v2797
    %3296 = vmatprep.subr.mxu0 0.0
    %3297 = vmatpush1.msra.mxu0 %v2798
    %3298 = vmatprep.subr.mxu0 0.0
    %3299 = vmatpush1.msra.mxu0 %v2799
    %3300 = vmatprep.subr.mxu0 0.0
    %3301 = vmatpush1.msra.mxu0 %v2800
    %3302 = vmatprep.subr.mxu0 0.0
    %3303 = vmatpush1.msra.mxu0 %v2801
    %3304 = vmatprep.subr.mxu0 0.0
    %3305 = vmatpush1.msra.mxu0 %v2802
    %3306 = vmatprep.subr.mxu0 0.0
    %3307 = vmatpush1.msra.mxu0 %v2803
    %3308 = vmatprep.subr.mxu0 0.0
    %3309 = vmatpush1.msra.mxu0 %v2804
    %3310 = vmatprep.subr.mxu0 0.0
    %3311 = vmatpush1.msra.mxu0 %v2805
    %3312 = vmatprep.subr.mxu0 0.0
    %3313 = vmatpush1.msra.mxu0 %v2806
    %3314 = vmatprep.subr.mxu0 0.0
    %3315 = vmatpush1.msra.mxu0 %v2807
    %3316 = vmatprep.subr.mxu0 0.0
    %3317 = vmatpush1.msra.mxu0 %v2808
    %3318 = vmatprep.subr.mxu0 0.0
    %3319 = vmatpush1.msra.mxu0 %v2809
    %3320 = vmatprep.subr.mxu0 0.0
    %3321 = vmatpush1.msra.mxu0 %v2810
    %3322 = vmatprep.subr.mxu0 0.0
    %3323 = vmatpush1.msra.mxu0 %v2811
    %3324 = vmatprep.subr.mxu0 0.0
    %3325 = vmatpush1.msra.mxu0 %v2812
    %3326 = vmatprep.subr.mxu0 0.0
    %3327 = vmatpush1.msra.mxu0 %v2813
    %3328 = vmatprep.subr.mxu0 0.0
    %3329 = vmatpush1.msra.mxu0 %v2814
    %3330 = vmatprep.subr.mxu0 0.0
    %3331 = vmatpush1.msra.mxu0 %v2815
    %3332 = vmatprep.mubr.f32.mxu0 %v2705
    %3333 = vmatmul.mubr.f32.gmra.mrb[0].mxu0 %v2698
    %v3334 = vpop.f32.mrb[0].mxu0
    %v3335 = vadd.f32 %v3265, %v3334
    %v3336 = vpop.f32.mrb[0].mxu0
    %3337 = vdwg.mxu0
    %3338 = vmatprep.subr.mxu0 0.0
    %3339 = vmatpush1.msra.mxu0 %v2816
    %3340 = vmatprep.subr.mxu0 0.0
    %3341 = vmatpush1.msra.mxu0 %v2817
    %3342 = vmatprep.subr.mxu0 0.0
    %3343 = vmatpush1.msra.mxu0 %v2818
    %3344 = vmatprep.subr.mxu0 0.0
    %3345 = vmatpush1.msra.mxu0 %v2819
    %3346 = vmatprep.subr.mxu0 0.0
    %3347 = vmatpush1.msra.mxu0 %v2820
    %3348 = vmatprep.subr.mxu0 0.0
    %3349 = vmatpush1.msra.mxu0 %v2821
    %3350 = vmatprep.subr.mxu0 0.0
    %3351 = vmatpush1.msra.mxu0 %v2822
    %3352 = vmatprep.subr.mxu0 0.0
    %3353 = vmatpush1.msra.mxu0 %v2823
    %3354 = vmatprep.subr.mxu0 0.0
    %3355 = vmatpush1.msra.mxu0 %v2824
    %3356 = vmatprep.subr.mxu0 0.0
    %3357 = vmatpush1.msra.mxu0 %v2825
    %3358 = vmatprep.subr.mxu0 0.0
    %3359 = vmatpush1.msra.mxu0 %v2826
    %3360 = vmatprep.subr.mxu0 0.0
    %3361 = vmatpush1.msra.mxu0 %v2827
    %3362 = vmatprep.subr.mxu0 0.0
    %3363 = vmatpush1.msra.mxu0 %v2828
    %3364 = vmatprep.subr.mxu0 0.0
    %3365 = vmatpush1.msra.mxu0 %v2829
    %3366 = vmatprep.subr.mxu0 0.0
    %3367 = vmatpush1.msra.mxu0 %v2830
    %3368 = vmatprep.subr.mxu0 0.0
    %3369 = vmatpush1.msra.mxu0 %v2831
    %3370 = vmatprep.subr.mxu0 0.0
    %3371 = vmatpush1.msra.mxu0 %v2832
    %3372 = vmatprep.subr.mxu0 0.0
    %3373 = vmatpush1.msra.mxu0 %v2833
    %3374 = vmatprep.subr.mxu0 0.0
    %3375 = vmatpush1.msra.mxu0 %v2834
    %3376 = vmatprep.subr.mxu0 0.0
    %3377 = vmatpush1.msra.mxu0 %v2835
    %3378 = vmatprep.subr.mxu0 0.0
    %3379 = vmatpush1.msra.mxu0 %v2836
    %3380 = vmatprep.subr.mxu0 0.0
    %3381 = vmatpush1.msra.mxu0 %v2837
    %3382 = vmatprep.subr.mxu0 0.0
    %3383 = vmatpush1.msra.mxu0 %v2838
    %3384 = vmatprep.subr.mxu0 0.0
    %3385 = vmatpush1.msra.mxu0 %v2839
    %3386 = vmatprep.subr.mxu0 0.0
    %3387 = vmatpush1.msra.mxu0 %v2840
    %3388 = vmatprep.subr.mxu0 0.0
    %3389 = vmatpush1.msra.mxu0 %v2841
    %3390 = vmatprep.subr.mxu0 0.0
    %3391 = vmatpush1.msra.mxu0 %v2842
    %3392 = vmatprep.subr.mxu0 0.0
    %3393 = vmatpush1.msra.mxu0 %v2843
    %3394 = vmatprep.subr.mxu0 0.0
    %3395 = vmatpush1.msra.mxu0 %v2844
    %3396 = vmatprep.subr.mxu0 0.0
    %3397 = vmatpush1.msra.mxu0 %v2845
    %3398 = vmatprep.subr.mxu0 0.0
    %3399 = vmatpush1.msra.mxu0 %v2846
    %3400 = vmatprep.subr.mxu0 0.0
    %3401 = vmatpush1.msra.mxu0 %v2847
    %3402 = vmatprep.mubr.f32.mxu0 %v2719
    %3403 = vmatmul.mubr.f32.gmra.mrb[0].mxu0 %v2712
    %v3404 = vpop.f32.mrb[0].mxu0
    %v3405 = vadd.f32 %v3335, %v3404
    %v3406 = vpop.f32.mrb[0].mxu0
    %3407 = vdwg.mxu0
    %v3408 = vmul.f32 %v3125, 0.0009765625
    %v3409 = vmul.f32 %v3405, 0.0009765625
    %v3410 = vmul.f32 %v3408, %v3408
    %v3411 = vsub.f32 %v3409, %v3410
    %v3412 = vld [vmem:[%s14] sm:$0x1]
    %v3413 = vadd.f32 %v3411, 1e-05
    %v3414 = vrsqrt.pop %v3413
    %v3415 = vmul.f32 %v3412, %v3414
    %v3416 = vld [vmem:[%s15] sm:$0x1]
    %v3417 = vmul.f32 %v3408, %v3415
    %v3418 = vsub.f32 %v3416, %v3417
    %v3419 = vld [vmem:[%s9] sm:$0xff]
    %v3420 = vld [vmem:[%s9 + $0x8] sm:$0xff]
    %v3421 = vld [vmem:[%s9 + $0x10] sm:$0xff]
    %v3422 = vld [vmem:[%s9 + $0x18] sm:$0xff]
    %v3423 = vld [vmem:[%s9 + $0x20] sm:$0xff]
    %v3424 = vld [vmem:[%s9 + $0x28] sm:$0xff]
    %v3425 = vld [vmem:[%s9 + $0x30] sm:$0xff]
    %v3426 = vld [vmem:[%s9 + $0x38] sm:$0xff]
    %v3427 = vld [vmem:[%s9 + $0x40] sm:$0xff]
    %v3428 = vld [vmem:[%s9 + $0x48] sm:$0xff]
    %v3429 = vld [vmem:[%s9 + $0x50] sm:$0xff]
    %v3430 = vld [vmem:[%s9 + $0x58] sm:$0xff]
    %v3431 = vld [vmem:[%s9 + $0x60] sm:$0xff]
    %v3432 = vld [vmem:[%s9 + $0x68] sm:$0xff]
    %v3433 = vld [vmem:[%s9 + $0x70] sm:$0xff]
    %v3434 = vld [vmem:[%s9 + $0x78] sm:$0xff]
    %v3436 = vsel %vm1077, %v3415, 0
    %3438 = vmatprep.subr.mxu0 %v3420
    %3439 = vmatpush1.msra.mxu0 %v3419
    %3440 = vmatprep.subr.mxu0 %v3428
    %3441 = vmatpush1.msra.mxu0 %v3427
    %3442 = vmatprep.subr.mxu0 0.0
    %3443 = vmatpush1.msra.mxu0 0.0
    %3444 = vmatprep.subr.mxu0 0.0
    %3445 = vmatpush1.msra.mxu0 0.0
    %3446 = vmatprep.subr.mxu0 0.0
    %3447 = vmatpush1.msra.mxu0 0.0
    %3448 = vmatprep.subr.mxu0 0.0
    %3449 = vmatpush1.msra.mxu0 0.0
    %3450 = vmatprep.subr.mxu0 0.0
    %3451 = vmatpush1.msra.mxu0 0.0
    %3452 = vmatprep.subr.mxu0 0.0
    %3453 = vmatpush1.msra.mxu0 0.0
    %3454 = vmatprep.subr.mxu0 0.0
    %3455 = vmatpush1.msra.mxu0 0.0
    %3456 = vmatprep.subr.mxu0 0.0
    %3457 = vmatpush1.msra.mxu0 0.0
    %3458 = vmatprep.subr.mxu0 0.0
    %3459 = vmatpush1.msra.mxu0 0.0
    %3460 = vmatprep.subr.mxu0 0.0
    %3461 = vmatpush1.msra.mxu0 0.0
    %3462 = vmatprep.subr.mxu0 0.0
    %3463 = vmatpush1.msra.mxu0 0.0
    %3464 = vmatprep.subr.mxu0 0.0
    %3465 = vmatpush1.msra.mxu0 0.0
    %3466 = vmatprep.subr.mxu0 0.0
    %3467 = vmatpush1.msra.mxu0 0.0
    %3468 = vmatprep.subr.mxu0 0.0
    %3469 = vmatpush1.msra.mxu0 0.0
    %3470 = vmatprep.subr.mxu0 0.0
    %3471 = vmatpush1.msra.mxu0 0.0
    %3472 = vmatprep.subr.mxu0 0.0
    %3473 = vmatpush1.msra.mxu0 0.0
    %3474 = vmatprep.subr.mxu0 0.0
    %3475 = vmatpush1.msra.mxu0 0.0
    %3476 = vmatprep.subr.mxu0 0.0
    %3477 = vmatpush1.msra.mxu0 0.0
    %3478 = vmatprep.subr.mxu0 0.0
    %3479 = vmatpush1.msra.mxu0 0.0
    %3480 = vmatprep.subr.mxu0 0.0
    %3481 = vmatpush1.msra.mxu0 0.0
    %3482 = vmatprep.subr.mxu0 0.0
    %3483 = vmatpush1.msra.mxu0 0.0
    %3484 = vmatprep.subr.mxu0 0.0
    %3485 = vmatpush1.msra.mxu0 0.0
    %3486 = vmatprep.subr.mxu0 0.0
    %3487 = vmatpush1.msra.mxu0 0.0
    %3488 = vmatprep.subr.mxu0 0.0
    %3489 = vmatpush1.msra.mxu0 0.0
    %3490 = vmatprep.subr.mxu0 0.0
    %3491 = vmatpush1.msra.mxu0 0.0
    %3492 = vmatprep.subr.mxu0 0.0
    %3493 = vmatpush1.msra.mxu0 0.0
    %3494 = vmatprep.subr.mxu0 0.0
    %3495 = vmatpush1.msra.mxu0 0.0
    %3496 = vmatprep.subr.mxu0 0.0
    %3497 = vmatpush1.msra.mxu0 0.0
    %3498 = vmatprep.subr.mxu0 0.0
    %3499 = vmatpush1.msra.mxu0 0.0
    %3500 = vmatprep.subr.mxu0 0.0
    %3501 = vmatpush1.msra.mxu0 0.0
    %3502 = vmatprep.mubr.f32.mxu0 0.0
    %3503 = vmatmul.mubr.f32.gmra.mrb[0].mxu0 %v3436
    %v3504 = vpop.f32.mrb[0].mxu0
    %v3505 = vadd.f32 0.0, %v3504
    %v3506 = vpop.f32.mrb[0].mxu0
    %v3507 = vadd.f32 0.0, %v3506
    %3508 = vdwg.mxu0
    %3509 = vmatprep.subr.mxu0 %v3422
    %3510 = vmatpush1.msra.mxu0 %v3421
    %3511 = vmatprep.subr.mxu0 %v3430
    %3512 = vmatpush1.msra.mxu0 %v3429
    %3513 = vmatprep.subr.mxu0 0.0
    %3514 = vmatpush1.msra.mxu0 0.0
    %3515 = vmatprep.subr.mxu0 0.0
    %3516 = vmatpush1.msra.mxu0 0.0
    %3517 = vmatprep.subr.mxu0 0.0
    %3518 = vmatpush1.msra.mxu0 0.0
    %3519 = vmatprep.subr.mxu0 0.0
    %3520 = vmatpush1.msra.mxu0 0.0
    %3521 = vmatprep.subr.mxu0 0.0
    %3522 = vmatpush1.msra.mxu0 0.0
    %3523 = vmatprep.subr.mxu0 0.0
    %3524 = vmatpush1.msra.mxu0 0.0
    %3525 = vmatprep.subr.mxu0 0.0
    %3526 = vmatpush1.msra.mxu0 0.0
    %3527 = vmatprep.subr.mxu0 0.0
    %3528 = vmatpush1.msra.mxu0 0.0
    %3529 = vmatprep.subr.mxu0 0.0
    %3530 = vmatpush1.msra.mxu0 0.0
    %3531 = vmatprep.subr.mxu0 0.0
    %3532 = vmatpush1.msra.mxu0 0.0
    %3533 = vmatprep.subr.mxu0 0.0
    %3534 = vmatpush1.msra.mxu0 0.0
    %3535 = vmatprep.subr.mxu0 0.0
    %3536 = vmatpush1.msra.mxu0 0.0
    %3537 = vmatprep.subr.mxu0 0.0
    %3538 = vmatpush1.msra.mxu0 0.0
    %3539 = vmatprep.subr.mxu0 0.0
    %3540 = vmatpush1.msra.mxu0 0.0
    %3541 = vmatprep.subr.mxu0 0.0
    %3542 = vmatpush1.msra.mxu0 0.0
    %3543 = vmatprep.subr.mxu0 0.0
    %3544 = vmatpush1.msra.mxu0 0.0
    %3545 = vmatprep.subr.mxu0 0.0
    %3546 = vmatpush1.msra.mxu0 0.0
    %3547 = vmatprep.subr.mxu0 0.0
    %3548 = vmatpush1.msra.mxu0 0.0
    %3549 = vmatprep.subr.mxu0 0.0
    %3550 = vmatpush1.msra.mxu0 0.0
    %3551 = vmatprep.subr.mxu0 0.0
    %3552 = vmatpush1.msra.mxu0 0.0
    %3553 = vmatprep.subr.mxu0 0.0
    %3554 = vmatpush1.msra.mxu0 0.0
    %3555 = vmatprep.subr.mxu0 0.0
    %3556 = vmatpush1.msra.mxu0 0.0
    %3557 = vmatprep.subr.mxu0 0.0
    %3558 = vmatpush1.msra.mxu0 0.0
    %3559 = vmatprep.subr.mxu0 0.0
    %3560 = vmatpush1.msra.mxu0 0.0
    %3561 = vmatprep.subr.mxu0 0.0
    %3562 = vmatpush1.msra.mxu0 0.0
    %3563 = vmatprep.subr.mxu0 0.0
    %3564 = vmatpush1.msra.mxu0 0.0
    %3565 = vmatprep.subr.mxu0 0.0
    %3566 = vmatpush1.msra.mxu0 0.0
    %3567 = vmatprep.subr.mxu0 0.0
    %3568 = vmatpush1.msra.mxu0 0.0
    %3569 = vmatprep.subr.mxu0 0.0
    %3570 = vmatpush1.msra.mxu0 0.0
    %3571 = vmatprep.subr.mxu0 0.0
    %3572 = vmatpush1.msra.mxu0 0.0
    %3573 = vmatprep.mubr.f32.mxu0 0.0
    %3574 = vmatmul.mubr.f32.gmra.mrb[0].mxu0 %v3436
    %v3575 = vpop.f32.mrb[0].mxu0
    %v3576 = vadd.f32 0.0, %v3575
    %v3577 = vpop.f32.mrb[0].mxu0
    %v3578 = vadd.f32 0.0, %v3577
    %3579 = vdwg.mxu0
    %3580 = vmatprep.subr.mxu0 %v3424
    %3581 = vmatpush1.msra.mxu0 %v3423
    %3582 = vmatprep.subr.mxu0 %v3432
    %3583 = vmatpush1.msra.mxu0 %v3431
    %3584 = vmatprep.subr.mxu0 0.0
    %3585 = vmatpush1.msra.mxu0 0.0
    %3586 = vmatprep.subr.mxu0 0.0
    %3587 = vmatpush1.msra.mxu0 0.0
    %3588 = vmatprep.subr.mxu0 0.0
    %3589 = vmatpush1.msra.mxu0 0.0
    %3590 = vmatprep.subr.mxu0 0.0
    %3591 = vmatpush1.msra.mxu0 0.0
    %3592 = vmatprep.subr.mxu0 0.0
    %3593 = vmatpush1.msra.mxu0 0.0
    %3594 = vmatprep.subr.mxu0 0.0
    %3595 = vmatpush1.msra.mxu0 0.0
    %3596 = vmatprep.subr.mxu0 0.0
    %3597 = vmatpush1.msra.mxu0 0.0
    %3598 = vmatprep.subr.mxu0 0.0
    %3599 = vmatpush1.msra.mxu0 0.0
    %3600 = vmatprep.subr.mxu0 0.0
    %3601 = vmatpush1.msra.mxu0 0.0
    %3602 = vmatprep.subr.mxu0 0.0
    %3603 = vmatpush1.msra.mxu0 0.0
    %3604 = vmatprep.subr.mxu0 0.0
    %3605 = vmatpush1.msra.mxu0 0.0
    %3606 = vmatprep.subr.mxu0 0.0
    %3607 = vmatpush1.msra.mxu0 0.0
    %3608 = vmatprep.subr.mxu0 0.0
    %3609 = vmatpush1.msra.mxu0 0.0
    %3610 = vmatprep.subr.mxu0 0.0
    %3611 = vmatpush1.msra.mxu0 0.0
    %3612 = vmatprep.subr.mxu0 0.0
    %3613 = vmatpush1.msra.mxu0 0.0
    %3614 = vmatprep.subr.mxu0 0.0
    %3615 = vmatpush1.msra.mxu0 0.0
    %3616 = vmatprep.subr.mxu0 0.0
    %3617 = vmatpush1.msra.mxu0 0.0
    %3618 = vmatprep.subr.mxu0 0.0
    %3619 = vmatpush1.msra.mxu0 0.0
    %3620 = vmatprep.subr.mxu0 0.0
    %3621 = vmatpush1.msra.mxu0 0.0
    %3622 = vmatprep.subr.mxu0 0.0
    %3623 = vmatpush1.msra.mxu0 0.0
    %3624 = vmatprep.subr.mxu0 0.0
    %3625 = vmatpush1.msra.mxu0 0.0
    %3626 = vmatprep.subr.mxu0 0.0
    %3627 = vmatpush1.msra.mxu0 0.0
    %3628 = vmatprep.subr.mxu0 0.0
    %3629 = vmatpush1.msra.mxu0 0.0
    %3630 = vmatprep.subr.mxu0 0.0
    %3631 = vmatpush1.msra.mxu0 0.0
    %3632 = vmatprep.subr.mxu0 0.0
    %3633 = vmatpush1.msra.mxu0 0.0
    %3634 = vmatprep.subr.mxu0 0.0
    %3635 = vmatpush1.msra.mxu0 0.0
    %3636 = vmatprep.subr.mxu0 0.0
    %3637 = vmatpush1.msra.mxu0 0.0
    %3638 = vmatprep.subr.mxu0 0.0
    %3639 = vmatpush1.msra.mxu0 0.0
    %3640 = vmatprep.subr.mxu0 0.0
    %3641 = vmatpush1.msra.mxu0 0.0
    %3642 = vmatprep.subr.mxu0 0.0
    %3643 = vmatpush1.msra.mxu0 0.0
    %3644 = vmatprep.mubr.f32.mxu0 0.0
    %3645 = vmatmul.mubr.f32.gmra.mrb[0].mxu0 %v3436
    %v3646 = vpop.f32.mrb[0].mxu0
    %v3647 = vadd.f32 0.0, %v3646
    %v3648 = vpop.f32.mrb[0].mxu0
    %v3649 = vadd.f32 0.0, %v3648
    %3650 = vdwg.mxu0
    %3651 = vmatprep.subr.mxu0 %v3426
    %3652 = vmatpush1.msra.mxu0 %v3425
    %3653 = vmatprep.subr.mxu0 %v3434
    %3654 = vmatpush1.msra.mxu0 %v3433
    %3655 = vmatprep.subr.mxu0 0.0
    %3656 = vmatpush1.msra.mxu0 0.0
    %3657 = vmatprep.subr.mxu0 0.0
    %3658 = vmatpush1.msra.mxu0 0.0
    %3659 = vmatprep.subr.mxu0 0.0
    %3660 = vmatpush1.msra.mxu0 0.0
    %3661 = vmatprep.subr.mxu0 0.0
    %3662 = vmatpush1.msra.mxu0 0.0
    %3663 = vmatprep.subr.mxu0 0.0
    %3664 = vmatpush1.msra.mxu0 0.0
    %3665 = vmatprep.subr.mxu0 0.0
    %3666 = vmatpush1.msra.mxu0 0.0
    %3667 = vmatprep.subr.mxu0 0.0
    %3668 = vmatpush1.msra.mxu0 0.0
    %3669 = vmatprep.subr.mxu0 0.0
    %3670 = vmatpush1.msra.mxu0 0.0
    %3671 = vmatprep.subr.mxu0 0.0
    %3672 = vmatpush1.msra.mxu0 0.0
    %3673 = vmatprep.subr.mxu0 0.0
    %3674 = vmatpush1.msra.mxu0 0.0
    %3675 = vmatprep.subr.mxu0 0.0
    %3676 = vmatpush1.msra.mxu0 0.0
    %3677 = vmatprep.subr.mxu0 0.0
    %3678 = vmatpush1.msra.mxu0 0.0
    %3679 = vmatprep.subr.mxu0 0.0
    %3680 = vmatpush1.msra.mxu0 0.0
    %3681 = vmatprep.subr.mxu0 0.0
    %3682 = vmatpush1.msra.mxu0 0.0
    %3683 = vmatprep.subr.mxu0 0.0
    %3684 = vmatpush1.msra.mxu0 0.0
    %3685 = vmatprep.subr.mxu0 0.0
    %3686 = vmatpush1.msra.mxu0 0.0
    %3687 = vmatprep.subr.mxu0 0.0
    %3688 = vmatpush1.msra.mxu0 0.0
    %3689 = vmatprep.subr.mxu0 0.0
    %3690 = vmatpush1.msra.mxu0 0.0
    %3691 = vmatprep.subr.mxu0 0.0
    %3692 = vmatpush1.msra.mxu0 0.0
    %3693 = vmatprep.subr.mxu0 0.0
    %3694 = vmatpush1.msra.mxu0 0.0
    %3695 = vmatprep.subr.mxu0 0.0
    %3696 = vmatpush1.msra.mxu0 0.0
    %3697 = vmatprep.subr.mxu0 0.0
    %3698 = vmatpush1.msra.mxu0 0.0
    %3699 = vmatprep.subr.mxu0 0.0
    %3700 = vmatpush1.msra.mxu0 0.0
    %3701 = vmatprep.subr.mxu0 0.0
    %3702 = vmatpush1.msra.mxu0 0.0
    %3703 = vmatprep.subr.mxu0 0.0
    %3704 = vmatpush1.msra.mxu0 0.0
    %3705 = vmatprep.subr.mxu0 0.0
    %3706 = vmatpush1.msra.mxu0 0.0
    %3707 = vmatprep.subr.mxu0 0.0
    %3708 = vmatpush1.msra.mxu0 0.0
    %3709 = vmatprep.subr.mxu0 0.0
    %3710 = vmatpush1.msra.mxu0 0.0
    %3711 = vmatprep.subr.mxu0 0.0
    %3712 = vmatpush1.msra.mxu0 0.0
    %3713 = vmatprep.subr.mxu0 0.0
    %3714 = vmatpush1.msra.mxu0 0.0
    %3715 = vmatprep.mubr.f32.mxu0 0.0
    %3716 = vmatmul.mubr.f32.gmra.mrb[0].mxu0 %v3436
    %v3717 = vpop.f32.mrb[0].mxu0
    %v3718 = vadd.f32 0.0, %v3717
    %v3719 = vpop.f32.mrb[0].mxu0
    %v3720 = vadd.f32 0.0, %v3719
    %3721 = vdwg.mxu0
    %v3723 = vsel %vm1077, %v3418, 0
    %3725 = vmatprep.subr.mxu0 %v3420
    %3726 = vmatpush1.msra.mxu0 %v3419
    %3727 = vmatprep.subr.mxu0 %v3428
    %3728 = vmatpush1.msra.mxu0 %v3427
    %3729 = vmatprep.subr.mxu0 0.0
    %3730 = vmatpush1.msra.mxu0 0.0
    %3731 = vmatprep.subr.mxu0 0.0
    %3732 = vmatpush1.msra.mxu0 0.0
    %3733 = vmatprep.subr.mxu0 0.0
    %3734 = vmatpush1.msra.mxu0 0.0
    %3735 = vmatprep.subr.mxu0 0.0
    %3736 = vmatpush1.msra.mxu0 0.0
    %3737 = vmatprep.subr.mxu0 0.0
    %3738 = vmatpush1.msra.mxu0 0.0
    %3739 = vmatprep.subr.mxu0 0.0
    %3740 = vmatpush1.msra.mxu0 0.0
    %3741 = vmatprep.subr.mxu0 0.0
    %3742 = vmatpush1.msra.mxu0 0.0
    %3743 = vmatprep.subr.mxu0 0.0
    %3744 = vmatpush1.msra.mxu0 0.0
    %3745 = vmatprep.subr.mxu0 0.0
    %3746 = vmatpush1.msra.mxu0 0.0
    %3747 = vmatprep.subr.mxu0 0.0
    %3748 = vmatpush1.msra.mxu0 0.0
    %3749 = vmatprep.subr.mxu0 0.0
    %3750 = vmatpush1.msra.mxu0 0.0
    %3751 = vmatprep.subr.mxu0 0.0
    %3752 = vmatpush1.msra.mxu0 0.0
    %3753 = vmatprep.subr.mxu0 0.0
    %3754 = vmatpush1.msra.mxu0 0.0
    %3755 = vmatprep.subr.mxu0 0.0
    %3756 = vmatpush1.msra.mxu0 0.0
    %3757 = vmatprep.subr.mxu0 0.0
    %3758 = vmatpush1.msra.mxu0 0.0
    %3759 = vmatprep.subr.mxu0 0.0
    %3760 = vmatpush1.msra.mxu0 0.0
    %3761 = vmatprep.subr.mxu0 0.0
    %3762 = vmatpush1.msra.mxu0 0.0
    %3763 = vmatprep.subr.mxu0 0.0
    %3764 = vmatpush1.msra.mxu0 0.0
    %3765 = vmatprep.subr.mxu0 0.0
    %3766 = vmatpush1.msra.mxu0 0.0
    %3767 = vmatprep.subr.mxu0 0.0
    %3768 = vmatpush1.msra.mxu0 0.0
    %3769 = vmatprep.subr.mxu0 0.0
    %3770 = vmatpush1.msra.mxu0 0.0
    %3771 = vmatprep.subr.mxu0 0.0
    %3772 = vmatpush1.msra.mxu0 0.0
    %3773 = vmatprep.subr.mxu0 0.0
    %3774 = vmatpush1.msra.mxu0 0.0
    %3775 = vmatprep.subr.mxu0 0.0
    %3776 = vmatpush1.msra.mxu0 0.0
    %3777 = vmatprep.subr.mxu0 0.0
    %3778 = vmatpush1.msra.mxu0 0.0
    %3779 = vmatprep.subr.mxu0 0.0
    %3780 = vmatpush1.msra.mxu0 0.0
    %3781 = vmatprep.subr.mxu0 0.0
    %3782 = vmatpush1.msra.mxu0 0.0
    %3783 = vmatprep.subr.mxu0 0.0
    %3784 = vmatpush1.msra.mxu0 0.0
    %3785 = vmatprep.subr.mxu0 0.0
    %3786 = vmatpush1.msra.mxu0 0.0
    %3787 = vmatprep.subr.mxu0 0.0
    %3788 = vmatpush1.msra.mxu0 0.0
    %3789 = vmatprep.mubr.f32.mxu0 0.0
    %3790 = vmatmul.mubr.f32.gmra.mrb[0].mxu0 %v3723
    %v3791 = vpop.f32.mrb[0].mxu0
    %v3792 = vadd.f32 0.0, %v3791
    %v3793 = vpop.f32.mrb[0].mxu0
    %v3794 = vadd.f32 0.0, %v3793
    %3795 = vdwg.mxu0
    %3796 = vmatprep.subr.mxu0 %v3422
    %3797 = vmatpush1.msra.mxu0 %v3421
    %3798 = vmatprep.subr.mxu0 %v3430
    %3799 = vmatpush1.msra.mxu0 %v3429
    %3800 = vmatprep.subr.mxu0 0.0
    %3801 = vmatpush1.msra.mxu0 0.0
    %3802 = vmatprep.subr.mxu0 0.0
    %3803 = vmatpush1.msra.mxu0 0.0
    %3804 = vmatprep.subr.mxu0 0.0
    %3805 = vmatpush1.msra.mxu0 0.0
    %3806 = vmatprep.subr.mxu0 0.0
    %3807 = vmatpush1.msra.mxu0 0.0
    %3808 = vmatprep.subr.mxu0 0.0
    %3809 = vmatpush1.msra.mxu0 0.0
    %3810 = vmatprep.subr.mxu0 0.0
    %3811 = vmatpush1.msra.mxu0 0.0
    %3812 = vmatprep.subr.mxu0 0.0
    %3813 = vmatpush1.msra.mxu0 0.0
    %3814 = vmatprep.subr.mxu0 0.0
    %3815 = vmatpush1.msra.mxu0 0.0
    %3816 = vmatprep.subr.mxu0 0.0
    %3817 = vmatpush1.msra.mxu0 0.0
    %3818 = vmatprep.subr.mxu0 0.0
    %3819 = vmatpush1.msra.mxu0 0.0
    %3820 = vmatprep.subr.mxu0 0.0
    %3821 = vmatpush1.msra.mxu0 0.0
    %3822 = vmatprep.subr.mxu0 0.0
    %3823 = vmatpush1.msra.mxu0 0.0
    %3824 = vmatprep.subr.mxu0 0.0
    %3825 = vmatpush1.msra.mxu0 0.0
    %3826 = vmatprep.subr.mxu0 0.0
    %3827 = vmatpush1.msra.mxu0 0.0
    %3828 = vmatprep.subr.mxu0 0.0
    %3829 = vmatpush1.msra.mxu0 0.0
    %3830 = vmatprep.subr.mxu0 0.0
    %3831 = vmatpush1.msra.mxu0 0.0
    %3832 = vmatprep.subr.mxu0 0.0
    %3833 = vmatpush1.msra.mxu0 0.0
    %3834 = vmatprep.subr.mxu0 0.0
    %3835 = vmatpush1.msra.mxu0 0.0
    %3836 = vmatprep.subr.mxu0 0.0
    %3837 = vmatpush1.msra.mxu0 0.0
    %3838 = vmatprep.subr.mxu0 0.0
    %3839 = vmatpush1.msra.mxu0 0.0
    %3840 = vmatprep.subr.mxu0 0.0
    %3841 = vmatpush1.msra.mxu0 0.0
    %3842 = vmatprep.subr.mxu0 0.0
    %3843 = vmatpush1.msra.mxu0 0.0
    %3844 = vmatprep.subr.mxu0 0.0
    %3845 = vmatpush1.msra.mxu0 0.0
    %3846 = vmatprep.subr.mxu0 0.0
    %3847 = vmatpush1.msra.mxu0 0.0
    %3848 = vmatprep.subr.mxu0 0.0
    %3849 = vmatpush1.msra.mxu0 0.0
    %3850 = vmatprep.subr.mxu0 0.0
    %3851 = vmatpush1.msra.mxu0 0.0
    %3852 = vmatprep.subr.mxu0 0.0
    %3853 = vmatpush1.msra.mxu0 0.0
    %3854 = vmatprep.subr.mxu0 0.0
    %3855 = vmatpush1.msra.mxu0 0.0
    %3856 = vmatprep.subr.mxu0 0.0
    %3857 = vmatpush1.msra.mxu0 0.0
    %3858 = vmatprep.subr.mxu0 0.0
    %3859 = vmatpush1.msra.mxu0 0.0
    %3860 = vmatprep.mubr.f32.mxu0 0.0
    %3861 = vmatmul.mubr.f32.gmra.mrb[0].mxu0 %v3723
    %v3862 = vpop.f32.mrb[0].mxu0
    %v3863 = vadd.f32 0.0, %v3862
    %v3864 = vpop.f32.mrb[0].mxu0
    %v3865 = vadd.f32 0.0, %v3864
    %3866 = vdwg.mxu0
    %3867 = vmatprep.subr.mxu0 %v3424
    %3868 = vmatpush1.msra.mxu0 %v3423
    %3869 = vmatprep.subr.mxu0 %v3432
    %3870 = vmatpush1.msra.mxu0 %v3431
    %3871 = vmatprep.subr.mxu0 0.0
    %3872 = vmatpush1.msra.mxu0 0.0
    %3873 = vmatprep.subr.mxu0 0.0
    %3874 = vmatpush1.msra.mxu0 0.0
    %3875 = vmatprep.subr.mxu0 0.0
    %3876 = vmatpush1.msra.mxu0 0.0
    %3877 = vmatprep.subr.mxu0 0.0
    %3878 = vmatpush1.msra.mxu0 0.0
    %3879 = vmatprep.subr.mxu0 0.0
    %3880 = vmatpush1.msra.mxu0 0.0
    %3881 = vmatprep.subr.mxu0 0.0
    %3882 = vmatpush1.msra.mxu0 0.0
    %3883 = vmatprep.subr.mxu0 0.0
    %3884 = vmatpush1.msra.mxu0 0.0
    %3885 = vmatprep.subr.mxu0 0.0
    %3886 = vmatpush1.msra.mxu0 0.0
    %3887 = vmatprep.subr.mxu0 0.0
    %3888 = vmatpush1.msra.mxu0 0.0
    %3889 = vmatprep.subr.mxu0 0.0
    %3890 = vmatpush1.msra.mxu0 0.0
    %3891 = vmatprep.subr.mxu0 0.0
    %3892 = vmatpush1.msra.mxu0 0.0
    %3893 = vmatprep.subr.mxu0 0.0
    %3894 = vmatpush1.msra.mxu0 0.0
    %3895 = vmatprep.subr.mxu0 0.0
    %3896 = vmatpush1.msra.mxu0 0.0
    %3897 = vmatprep.subr.mxu0 0.0
    %3898 = vmatpush1.msra.mxu0 0.0
    %3899 = vmatprep.subr.mxu0 0.0
    %3900 = vmatpush1.msra.mxu0 0.0
    %3901 = vmatprep.subr.mxu0 0.0
    %3902 = vmatpush1.msra.mxu0 0.0
    %3903 = vmatprep.subr.mxu0 0.0
    %3904 = vmatpush1.msra.mxu0 0.0
    %3905 = vmatprep.subr.mxu0 0.0
    %3906 = vmatpush1.msra.mxu0 0.0
    %3907 = vmatprep.subr.mxu0 0.0
    %3908 = vmatpush1.msra.mxu0 0.0
    %3909 = vmatprep.subr.mxu0 0.0
    %3910 = vmatpush1.msra.mxu0 0.0
    %3911 = vmatprep.subr.mxu0 0.0
    %3912 = vmatpush1.msra.mxu0 0.0
    %3913 = vmatprep.subr.mxu0 0.0
    %3914 = vmatpush1.msra.mxu0 0.0
    %3915 = vmatprep.subr.mxu0 0.0
    %3916 = vmatpush1.msra.mxu0 0.0
    %3917 = vmatprep.subr.mxu0 0.0
    %3918 = vmatpush1.msra.mxu0 0.0
    %3919 = vmatprep.subr.mxu0 0.0
    %3920 = vmatpush1.msra.mxu0 0.0
    %3921 = vmatprep.subr.mxu0 0.0
    %3922 = vmatpush1.msra.mxu0 0.0
    %3923 = vmatprep.subr.mxu0 0.0
    %3924 = vmatpush1.msra.mxu0 0.0
    %3925 = vmatprep.subr.mxu0 0.0
    %3926 = vmatpush1.msra.mxu0 0.0
    %3927 = vmatprep.subr.mxu0 0.0
    %3928 = vmatpush1.msra.mxu0 0.0
    %3929 = vmatprep.subr.mxu0 0.0
    %3930 = vmatpush1.msra.mxu0 0.0
    %3931 = vmatprep.mubr.f32.mxu0 0.0
    %3932 = vmatmul.mubr.f32.gmra.mrb[0].mxu0 %v3723
    %v3933 = vpop.f32.mrb[0].mxu0
    %v3934 = vadd.f32 0.0, %v3933
    %v3935 = vpop.f32.mrb[0].mxu0
    %v3936 = vadd.f32 0.0, %v3935
    %3937 = vdwg.mxu0
    %3938 = vmatprep.subr.mxu0 %v3426
    %3939 = vmatpush1.msra.mxu0 %v3425
    %3940 = vmatprep.subr.mxu0 %v3434
    %3941 = vmatpush1.msra.mxu0 %v3433
    %3942 = vmatprep.subr.mxu0 0.0
    %3943 = vmatpush1.msra.mxu0 0.0
    %3944 = vmatprep.subr.mxu0 0.0
    %3945 = vmatpush1.msra.mxu0 0.0
    %3946 = vmatprep.subr.mxu0 0.0
    %3947 = vmatpush1.msra.mxu0 0.0
    %3948 = vmatprep.subr.mxu0 0.0
    %3949 = vmatpush1.msra.mxu0 0.0
    %3950 = vmatprep.subr.mxu0 0.0
    %3951 = vmatpush1.msra.mxu0 0.0
    %3952 = vmatprep.subr.mxu0 0.0
    %3953 = vmatpush1.msra.mxu0 0.0
    %3954 = vmatprep.subr.mxu0 0.0
    %3955 = vmatpush1.msra.mxu0 0.0
    %3956 = vmatprep.subr.mxu0 0.0
    %3957 = vmatpush1.msra.mxu0 0.0
    %3958 = vmatprep.subr.mxu0 0.0
    %3959 = vmatpush1.msra.mxu0 0.0
    %3960 = vmatprep.subr.mxu0 0.0
    %3961 = vmatpush1.msra.mxu0 0.0
    %3962 = vmatprep.subr.mxu0 0.0
    %3963 = vmatpush1.msra.mxu0 0.0
    %3964 = vmatprep.subr.mxu0 0.0
    %3965 = vmatpush1.msra.mxu0 0.0
    %3966 = vmatprep.subr.mxu0 0.0
    %3967 = vmatpush1.msra.mxu0 0.0
    %3968 = vmatprep.subr.mxu0 0.0
    %3969 = vmatpush1.msra.mxu0 0.0
    %3970 = vmatprep.subr.mxu0 0.0
    %3971 = vmatpush1.msra.mxu0 0.0
    %3972 = vmatprep.subr.mxu0 0.0
    %3973 = vmatpush1.msra.mxu0 0.0
    %3974 = vmatprep.subr.mxu0 0.0
    %3975 = vmatpush1.msra.mxu0 0.0
    %3976 = vmatprep.subr.mxu0 0.0
    %3977 = vmatpush1.msra.mxu0 0.0
    %3978 = vmatprep.subr.mxu0 0.0
    %3979 = vmatpush1.msra.mxu0 0.0
    %3980 = vmatprep.subr.mxu0 0.0
    %3981 = vmatpush1.msra.mxu0 0.0
    %3982 = vmatprep.subr.mxu0 0.0
    %3983 = vmatpush1.msra.mxu0 0.0
    %3984 = vmatprep.subr.mxu0 0.0
    %3985 = vmatpush1.msra.mxu0 0.0
    %3986 = vmatprep.subr.mxu0 0.0
    %3987 = vmatpush1.msra.mxu0 0.0
    %3988 = vmatprep.subr.mxu0 0.0
    %3989 = vmatpush1.msra.mxu0 0.0
    %3990 = vmatprep.subr.mxu0 0.0
    %3991 = vmatpush1.msra.mxu0 0.0
    %3992 = vmatprep.subr.mxu0 0.0
    %3993 = vmatpush1.msra.mxu0 0.0
    %3994 = vmatprep.subr.mxu0 0.0
    %3995 = vmatpush1.msra.mxu0 0.0
    %3996 = vmatprep.subr.mxu0 0.0
    %3997 = vmatpush1.msra.mxu0 0.0
    %3998 = vmatprep.subr.mxu0 0.0
    %3999 = vmatpush1.msra.mxu0 0.0
    %4000 = vmatprep.subr.mxu0 0.0
    %4001 = vmatpush1.msra.mxu0 0.0
    %4002 = vmatprep.mubr.f32.mxu0 0.0
    %4003 = vmatmul.mubr.f32.gmra.mrb[0].mxu0 %v3723
    %v4004 = vpop.f32.mrb[0].mxu0
    %v4005 = vadd.f32 0.0, %v4004
    %v4006 = vpop.f32.mrb[0].mxu0
    %v4007 = vadd.f32 0.0, %v4006
    %4008 = vdwg.mxu0
    %v4009 = vlaneseq
    %v4010 = vshrl.u32 %v4009, 7
    %v4011 = vsub.s32 0, %v4010
    %v4012 = vrot.slane %v3505, %v4011
    %v4013 = vlaneseq
    %v4014 = vshrl.u32 %v4013, 7
    %v4015 = vsub.s32 0, %v4014
    %v4016 = vrot.slane %v3507, %v4015
    %v4017 = vlaneseq
    %v4018 = vshrl.u32 %v4017, 7
    %v4019 = vsub.s32 0, %v4018
    %v4020 = vrot.slane %v3576, %v4019
    %v4021 = vlaneseq
    %v4022 = vshrl.u32 %v4021, 7
    %v4023 = vsub.s32 0, %v4022
    %v4024 = vrot.slane %v3578, %v4023
    %v4025 = vlaneseq
    %v4026 = vshrl.u32 %v4025, 7
    %v4027 = vsub.s32 0, %v4026
    %v4028 = vrot.slane %v3647, %v4027
    %v4029 = vlaneseq
    %v4030 = vshrl.u32 %v4029, 7
    %v4031 = vsub.s32 0, %v4030
    %v4032 = vrot.slane %v3649, %v4031
    %v4033 = vlaneseq
    %v4034 = vshrl.u32 %v4033, 7
    %v4035 = vsub.s32 0, %v4034
    %v4036 = vrot.slane %v3718, %v4035
    %v4037 = vlaneseq
    %v4038 = vshrl.u32 %v4037, 7
    %v4039 = vsub.s32 0, %v4038
    %v4040 = vrot.slane %v3720, %v4039
    %v4041 = vmul.f32 %v2351, %v4012
    %v4042 = vmul.f32 %v2353, %v4016
    %v4043 = vmul.f32 %v2428, %v4020
    %v4044 = vmul.f32 %v2430, %v4024
    %v4045 = vmul.f32 %v2505, %v4028
    %v4046 = vmul.f32 %v2507, %v4032
    %v4047 = vmul.f32 %v2582, %v4036
    %v4048 = vmul.f32 %v2584, %v4040
    %v4049 = vmul.f32 %v2357, %v4012
    %v4050 = vmul.f32 %v2359, %v4016
    %v4051 = vmul.f32 %v2434, %v4020
    %v4052 = vmul.f32 %v2436, %v4024
    %v4053 = vmul.f32 %v2511, %v4028
    %v4054 = vmul.f32 %v2513, %v4032
    %v4055 = vmul.f32 %v2588, %v4036
    %v4056 = vmul.f32 %v2590, %v4040
    %v4057 = vlaneseq
    %v4058 = vshrl.u32 %v4057, 7
    %v4059 = vsub.s32 0, %v4058
    %v4060 = vrot.slane %v3792, %v4059
    %v4061 = vlaneseq
    %v4062 = vshrl.u32 %v4061, 7
    %v4063 = vsub.s32 0, %v4062
    %v4064 = vrot.slane %v3794, %v4063
    %v4065 = vlaneseq
    %v4066 = vshrl.u32 %v4065, 7
    %v4067 = vsub.s32 0, %v4066
    %v4068 = vrot.slane %v3863, %v4067
    %v4069 = vlaneseq
    %v4070 = vshrl.u32 %v4069, 7
    %v4071 = vsub.s32 0, %v4070
    %v4072 = vrot.slane %v3865, %v4071
    %v4073 = vlaneseq
    %v4074 = vshrl.u32 %v4073, 7
    %v4075 = vsub.s32 0, %v4074
    %v4076 = vrot.slane %v3934, %v4075
    %v4077 = vlaneseq
    %v4078 = vshrl.u32 %v4077, 7
    %v4079 = vsub.s32 0, %v4078
    %v4080 = vrot.slane %v3936, %v4079
    %v4081 = vlaneseq
    %v4082 = vshrl.u32 %v4081, 7
    %v4083 = vsub.s32 0, %v4082
    %v4084 = vrot.slane %v4005, %v4083
    %v4085 = vlaneseq
    %v4086 = vshrl.u32 %v4085, 7
    %v4087 = vsub.s32 0, %v4086
    %v4088 = vrot.slane %v4007, %v4087
    %v4089 = vadd.f32 %v4041, %v4060
    %v4090 = vadd.f32 %v4042, %v4064
    %v4091 = vadd.f32 %v4043, %v4068
    %v4092 = vadd.f32 %v4044, %v4072
    %v4093 = vadd.f32 %v4045, %v4076
    %v4094 = vadd.f32 %v4046, %v4080
    %v4095 = vadd.f32 %v4047, %v4084
    %v4096 = vadd.f32 %v4048, %v4088
    %v4097 = vadd.f32 %v4049, %v4060
    %v4098 = vadd.f32 %v4050, %v4064
    %v4099 = vadd.f32 %v4051, %v4068
    %v4100 = vadd.f32 %v4052, %v4072
    %v4101 = vadd.f32 %v4053, %v4076
    %v4102 = vadd.f32 %v4054, %v4080
    %v4103 = vadd.f32 %v4055, %v4084
    %v4104 = vadd.f32 %v4056, %v4088
    %v4105 = vadd.f32 %v4089, %v95
    %v4106 = vadd.f32 %v4090, %v96
    %v4107 = vadd.f32 %v4091, %v97
    %v4108 = vadd.f32 %v4092, %v98
    %v4109 = vadd.f32 %v4093, %v99
    %v4110 = vadd.f32 %v4094, %v100
    %v4111 = vadd.f32 %v4095, %v101
    %v4112 = vadd.f32 %v4096, %v102
    %v4113 = vadd.f32 %v4097, %v103
    %v4114 = vadd.f32 %v4098, %v104
    %v4115 = vadd.f32 %v4099, %v105
    %v4116 = vadd.f32 %v4100, %v106
    %v4117 = vadd.f32 %v4101, %v107
    %v4118 = vadd.f32 %v4102, %v108
    %v4119 = vadd.f32 %v4103, %v109
    %v4120 = vadd.f32 %v4104, %v110
    %v4121 = vmax.f32 %v4105, 0.0
    %v4122 = vmax.f32 %v4106, 0.0
    %v4123 = vmax.f32 %v4107, 0.0
    %v4124 = vmax.f32 %v4108, 0.0
    %v4125 = vmax.f32 %v4109, 0.0
    %v4126 = vmax.f32 %v4110, 0.0
    %v4127 = vmax.f32 %v4111, 0.0
    %v4128 = vmax.f32 %v4112, 0.0
    %v4129 = vmax.f32 %v4113, 0.0
    %v4130 = vmax.f32 %v4114, 0.0
    %v4131 = vmax.f32 %v4115, 0.0
    %v4132 = vmax.f32 %v4116, 0.0
    %v4133 = vmax.f32 %v4117, 0.0
    %v4134 = vmax.f32 %v4118, 0.0
    %v4135 = vmax.f32 %v4119, 0.0
    %v4136 = vmax.f32 %v4120, 0.0
    %4137 = vst [vmem:[#allocation8] sm:$0xff] %v4121
    %4138 = vst [vmem:[#allocation8 + $0x8] sm:$0xff] %v4122
    %4139 = vst [vmem:[#allocation8 + $0x10] sm:$0xff] %v4123
    %4140 = vst [vmem:[#allocation8 + $0x18] sm:$0xff] %v4124
    %4141 = vst [vmem:[#allocation8 + $0x20] sm:$0xff] %v4125
    %4142 = vst [vmem:[#allocation8 + $0x28] sm:$0xff] %v4126
    %4143 = vst [vmem:[#allocation8 + $0x30] sm:$0xff] %v4127
    %4144 = vst [vmem:[#allocation8 + $0x38] sm:$0xff] %v4128
    %4145 = vst [vmem:[#allocation8 + $0x40] sm:$0xff] %v4129
    %4146 = vst [vmem:[#allocation8 + $0x48] sm:$0xff] %v4130
    %4147 = vst [vmem:[#allocation8 + $0x50] sm:$0xff] %v4131
    %4148 = vst [vmem:[#allocation8 + $0x58] sm:$0xff] %v4132
    %4149 = vst [vmem:[#allocation8 + $0x60] sm:$0xff] %v4133
    %4150 = vst [vmem:[#allocation8 + $0x68] sm:$0xff] %v4134
    %4151 = vst [vmem:[#allocation8 + $0x70] sm:$0xff] %v4135
    %4152 = vst [vmem:[#allocation8 + $0x78] sm:$0xff] %v4136
    // Predicated region
    $region78: #{tpu_custom_call.1} parent=1 // pred_check
      _
    $region79: #{tpu_custom_call.1} parent=1 // pred_check_branch
      %4154 = sbr.rel (0) target = $region81
    $region80: #{tpu_custom_call.1} parent=1 // pred_region
      %s4156 = ssub.s32 2048, 2048
      %4157 = vsyncadd [#allocation4], %s4156
      %s4158 = sshll.u32 [#allocation8], 4
      %s4159 = int_to_ptr.vmem [resolvable:$true] %s4158
      %4164 = dma.vmem_to_hbm [thread:$0]  %s4159, 2048, %s16, [#allocation4], 1024, 1024, 64
    $region81: #{tpu_custom_call.1} parent=1 // pred_fallthru
      _
    // Predicated region
    $region82: #{tpu_custom_call.1} parent=1 // pred_check
      _
    $region83: #{tpu_custom_call.1} parent=1 // pred_check_branch
      %4166 = sbr.rel (0) target = $region85
    $region84: #{tpu_custom_call.1} parent=1 // pred_region
      %4167 = dma.done [#allocation4], 2048
    $region85: #{tpu_custom_call.1} parent=1 // pred_fallthru
      _
    %4168 = vsyncpa [#allocation3], 1
    %4169 = vsyncpa [#allocation6], 1
    %4170 = vsyncpa [#allocation4], 1

</llo_original>
